<compile_context>
chip_gen: v7x
topology: tpu7x:2x2x1
jax: 0.10.0
libtpu: 0.0.40
codegen_flags: <defaults>
</compile_context>

<pallas_src>
import functools

import jax
import jax.numpy as jnp
from jax.experimental import pallas as pl
from jax.experimental.pallas import tpu as pltpu

LN_EPS = 1e-5        # PyTorch nn.LayerNorm default
LANES = 128          # lane-dense padded width for all packed slabs

# ----- model configuration (matches EncoderCoreDecoder __init__ semantics) -----
IN_DIMS = (4, 2, 3)            # (v_in, e_in, u_in)
ENC_OUT = (16, 16, 16)         # encoder_out_dims
CORE_OUT = (16, 16, 16)        # core_out_dims
DEC_OUT = (16, 16, 16)         # dec_out_dims
OUT_DIMS = (2, 1, 1)           # out_dims
HIDDEN = 32                    # hidden_size
CORE_STEPS = 2                 # core_steps
FEAT = 16                      # shared MLP output width
# e2v_agg='sum', n_hidden=1, independent_block_layers=1, activation=ReLU,
# layer_norm=True

_MLP_ORDER = ("enc_node", "enc_edge", "enc_global",
              "core_edge", "core_node", "core_global",
              "dec_node", "dec_edge", "dec_global")
_MLP_IDX = {name: i for i, name in enumerate(_MLP_ORDER)}
_N_MLP = len(_MLP_ORDER)
_HEAD_ORDER = ("v_out", "e_out", "u_out")


def _round8(n):
    return (n + 7) // 8 * 8


# --------------------------------------------------------------------------
# Fused Pallas kernel (encoder -> unrolled core -> decoder -> output heads)
# --------------------------------------------------------------------------
def _fused_kernel(n_v, n_e, n_u, off_e, off_u, core_steps,
                  data_ref, eidx_ref, eidx_t_ref,
                  w1_ref, w2_ref, vec_ref, head_ref, out_ref):
    f32 = jnp.float32

    # ---- per-MLP small constants, read ONCE (reused across the unrolled loop) ----
    def mlp_consts(i):
        row = vec_ref[i]                        # [4, 128]
        return (row[0:1, 0:HIDDEN],             # b1     [1, 32]
                row[1:2, 0:FEAT],               # b2     [1, 16]
                row[2:3, 0:FEAT],               # gamma  [1, 16]
                row[3:4, 0:FEAT])               # beta   [1, 16]

    consts = [mlp_consts(i) for i in range(_N_MLP)]

    def apply_mlp(inp, i):
        # Lin -> ReLU -> Lin -> ReLU -> LayerNorm; one K<=128 MXU dot per Lin.
        b1, b2, gamma, beta = consts[i]
        k = inp.shape[1]
        w1 = w1_ref[i, 0:k, :]                  # W1 load stays adjacent to its dot
        h = jnp.maximum(jnp.dot(inp, w1, preferred_element_type=f32) + b1, 0.0)
        y = jnp.maximum(jnp.dot(h, w2_ref[i], preferred_element_type=f32) + b2, 0.0)
        # fused LayerNorm statistics (single pass: sum and sum of squares)
        inv_d = 1.0 / y.shape[-1]
        s1 = jnp.sum(y, axis=-1, keepdims=True)
        s2 = jnp.sum(y * y, axis=-1, keepdims=True)
        mean = s1 * inv_d
        var = s2 * inv_d - mean * mean          # biased variance, matches nn.LayerNorm
        y = (y - mean) * jax.lax.rsqrt(var + LN_EPS)
        return y * gamma + beta

    # ---- gather / scatter one-hots built in-kernel from int32 edge_index ----
    eidx_t = eidx_t_ref[...]                                          # [n_e, 2]
    tgt_col = eidx_t[:, 0:1]                                          # [n_e, 1]
    src_col = eidx_t[:, 1:2]                                          # [n_e, 1]
    lane_v = jax.lax.broadcasted_iota(jnp.int32, (n_e, n_v), 1)
    g_tgt = (tgt_col == lane_v).astype(f32)                           # gather x[tgt]
    g_src = (src_col == lane_v).astype(f32)                           # gather x[src]
    tgt_row = eidx_ref[0:1, :]                                        # [1, n_e]
    sub_v = jax.lax.broadcasted_iota(jnp.int32, (n_v, n_e), 0)
    s_e2v = (tgt_row == sub_v).astype(f32)                            # scatter_add -> nodes

    # ----------------- encoder (independent GraphNet) -----------------
    x_in = data_ref[0:n_v, :]                   # [n_v, 128], zero-padded lanes
    e_in = data_ref[off_e:off_e + n_e, :]
    u_in = data_ref[off_u:off_u + n_u, :]
    x_enc = apply_mlp(x_in, _MLP_IDX["enc_node"])       # [n_v, 16]
    e_enc = apply_mlp(e_in, _MLP_IDX["enc_edge"])       # [n_e, 16]
    u_enc = apply_mlp(u_in, _MLP_IDX["enc_global"])     # [1,   16]

    lv = jnp.zeros((n_v, CORE_OUT[0]), f32)
    le = jnp.zeros((n_e, CORE_OUT[1]), f32)
    lu = jnp.zeros((n_u, CORE_OUT[2]), f32)

    # ----------------- core (non-independent GraphNet), unrolled -----------------
    for _ in range(core_steps):
        xc = jnp.concatenate([x_enc, lv], axis=1)     # [n_v, 32]  packed [enc | latent]
        ec = jnp.concatenate([e_enc, le], axis=1)     # [n_e, 32]
        uc = jnp.concatenate([u_enc, lu], axis=1)     # [1,   32]

        # edge model: cat([x[tgt], x[src], edge_attr, u[e_indices]]) -> one K=128 dot
        x_tgt = jnp.dot(g_tgt, xc, preferred_element_type=f32)       # [n_e, 32]
        x_src = jnp.dot(g_src, xc, preferred_element_type=f32)       # [n_e, 32]
        u_e = jnp.broadcast_to(uc, (n_e, 2 * FEAT))                   # single-graph u
        edge_in = jnp.concatenate([x_tgt, x_src, ec, u_e], axis=1)    # [n_e, 128]
        new_e = apply_mlp(edge_in, _MLP_IDX["core_edge"])             # [n_e, 16]

        # node model: cat([x, scatter_add(new_e, tgt), u[v_indices]]) -> one K=80 dot
        agg_e = jnp.dot(s_e2v, new_e, preferred_element_type=f32)     # [n_v, 16]
        u_v = jnp.broadcast_to(uc, (n_v, 2 * FEAT))
        node_in = jnp.concatenate([xc, agg_e, u_v], axis=1)           # [n_v, 80]
        new_v = apply_mlp(node_in, _MLP_IDX["core_node"])             # [n_v, 16]

        # global model: cat([u, scatter_mean(new_v), scatter_mean(new_e)]) -> one K=64 dot
        mean_v = jnp.mean(new_v, axis=0, keepdims=True)               # [1, 16]
        mean_e = jnp.mean(new_e, axis=0, keepdims=True)               # [1, 16]
        glob_in = jnp.concatenate([uc, mean_v, mean_e], axis=1)       # [1, 64]
        new_u = apply_mlp(glob_in, _MLP_IDX["core_global"])           # [1, 16]

        lv, le, lu = new_v, new_e, new_u

    # ----------------- decoder (independent GraphNet) -----------------
    dv = apply_mlp(lv, _MLP_IDX["dec_node"])
    de = apply_mlp(le, _MLP_IDX["dec_edge"])
    du = apply_mlp(lu, _MLP_IDX["dec_global"])

    # ----------------- output heads, one merged lane-dense output slab -----------------
    def head(act, hidx):
        hw = head_ref[hidx, 0:FEAT, :]            # [16, 128] (zero-padded out lanes)
        hb = head_ref[hidx, FEAT:FEAT + 1, :]     # [1, 128]
        return jnp.dot(act, hw, preferred_element_type=f32) + hb

    out_ref[...] = jnp.zeros(out_ref.shape, out_ref.dtype)   # deterministic pad rows
    out_ref[0:n_v, :] = head(dv, 0).astype(out_ref.dtype)
    out_ref[off_e:off_e + n_e, :] = head(de, 1).astype(out_ref.dtype)
    out_ref[off_u:off_u + n_u, :] = head(du, 2).astype(out_ref.dtype)


# --------------------------------------------------------------------------
# Parameter construction (deterministic, synthetic)
# --------------------------------------------------------------------------
def init_linear(key, d_in, d_out):
    k_w, k_b = jax.random.split(key)
    bound = 1.0 / jnp.sqrt(float(d_in))
    w = jax.random.uniform(k_w, (d_in, d_out), jnp.float32, -bound, bound)
    b = jax.random.uniform(k_b, (1, d_out), jnp.float32, -bound, bound)
    return w, b


def init_mlp(key, d_in, hidden, d_out):
    k1, k2 = jax.random.split(key)
    w1, b1 = init_linear(k1, d_in, hidden)
    w2, b2 = init_linear(k2, hidden, d_out)
    gamma = jnp.ones((1, d_out), jnp.float32)
    beta = jnp.zeros((1, d_out), jnp.float32)
    return (w1, b1, w2, b2, gamma, beta)


def build_params(key):
    keys = jax.random.split(key, 12)
    core_in = ENC_OUT  # encoder present -> core_in_dims = encoder_out_dims
    cv = core_in[0] + CORE_OUT[0]
    ce = core_in[1] + CORE_OUT[1]
    cu = core_in[2] + CORE_OUT[2]
    params = {
        # encoder (independent GraphNet)
        "enc_edge": init_mlp(keys[0], IN_DIMS[1], HIDDEN, ENC_OUT[1]),
        "enc_node": init_mlp(keys[1], IN_DIMS[0], HIDDEN, ENC_OUT[0]),
        "enc_global": init_mlp(keys[2], IN_DIMS[2], HIDDEN, ENC_OUT[2]),
        # core (non-independent GraphNet)
        "core_edge": init_mlp(keys[3], ce + 2 * cv + cu, HIDDEN, CORE_OUT[1]),
        "core_node": init_mlp(keys[4], cv + CORE_OUT[1] + cu, HIDDEN, CORE_OUT[0]),
        "core_global": init_mlp(
            keys[5], cu + CORE_OUT[0] + CORE_OUT[1], HIDDEN, CORE_OUT[2]),
        # decoder (independent GraphNet)
        "dec_edge": init_mlp(keys[6], CORE_OUT[1], HIDDEN, DEC_OUT[1]),
        "dec_node": init_mlp(keys[7], CORE_OUT[0], HIDDEN, DEC_OUT[0]),
        "dec_global": init_mlp(keys[8], CORE_OUT[2], HIDDEN, DEC_OUT[2]),
        # output heads
        "v_out": init_linear(keys[9], DEC_OUT[0], OUT_DIMS[0]),
        "e_out": init_linear(keys[10], DEC_OUT[1], OUT_DIMS[1]),
        "u_out": init_linear(keys[11], DEC_OUT[2], OUT_DIMS[2]),
    }
    return params


# --------------------------------------------------------------------------
# Wrapper: pack inputs/params into a handful of slabs, one fused pallas_call
# --------------------------------------------------------------------------
def _pad_lanes(a):
    return jnp.pad(a, ((0, 0), (0, LANES - a.shape[1])))


def _pack_params(params):
    w1_slab = jnp.stack([
        jnp.pad(params[n][0], ((0, LANES - params[n][0].shape[0]), (0, 0)))
        for n in _MLP_ORDER])                                        # [9, 128, 32]
    w2_slab = jnp.stack([params[n][2] for n in _MLP_ORDER])          # [9, 32, 16]
    vec_slab = jnp.stack([
        jnp.concatenate([_pad_lanes(params[n][1]),    # b1
                         _pad_lanes(params[n][3]),    # b2
                         _pad_lanes(params[n][4]),    # gamma
                         _pad_lanes(params[n][5])],   # beta
                        axis=0)
        for n in _MLP_ORDER])                                        # [9, 4, 128]
    head_slab = jnp.stack([
        jnp.concatenate([_pad_lanes(params[h][0]),    # W  [16, 128]
                         _pad_lanes(params[h][1])],   # b  [1, 128]
                        axis=0)
        for h in _HEAD_ORDER])                                       # [3, 17, 128]
    return w1_slab, w2_slab, vec_slab, head_slab


@functools.partial(jax.jit, static_argnames=("core_steps",))
def encoder_core_decoder_forward(params, x, edge_index, edge_attr, u,
                                 core_steps=CORE_STEPS):
    n_v = x.shape[0]
    n_e = edge_attr.shape[0]
    n_u = u.shape[0]
    # TODO(synk): only the module's default single-graph path (v_indices /
    # e_indices all zero, n_u == 1) is implemented; batched multi-graph global
    # aggregation would need per-graph one-hots or a per-graph grid axis.
    assert n_u == 1, "fused kernel supports the single-graph (n_u == 1) path"

    off_e = _round8(n_v)
    off_u = off_e + _round8(n_e)
    rows = off_u + _round8(n_u)

    # one packed data slab (x / edge_attr / u), zero-padded to 128 lanes
    data = jnp.zeros((rows, LANES), jnp.float32)
    data = data.at[0:n_v, 0:IN_DIMS[0]].set(x.astype(jnp.float32))
    data = data.at[off_e:off_e + n_e, 0:IN_DIMS[1]].set(edge_attr.astype(jnp.float32))
    data = data.at[off_u:off_u + n_u, 0:IN_DIMS[2]].set(u.astype(jnp.float32))

    eidx = edge_index.astype(jnp.int32)       # [2, n_e]  (row 0 = tgt, row 1 = src)
    eidx_t = eidx.T                            # [n_e, 2]

    w1_slab, w2_slab, vec_slab, head_slab = _pack_params(params)
    args = (data, eidx, eidx_t, w1_slab, w2_slab, vec_slab, head_slab)

    # advisory cost estimate for the XLA scheduler
    rows_proc = (n_v + n_e + n_u) * (2 + core_steps)
    flops = 2 * rows_proc * (LANES * HIDDEN + HIDDEN * FEAT)
    flops += core_steps * 2 * (2 * n_e * n_v * 2 * FEAT + n_v * n_e * FEAT)
    bytes_accessed = sum(int(a.size) * a.dtype.itemsize for a in args)
    bytes_accessed += rows * LANES * 4
    cost = pl.CostEstimate(flops=int(flops), transcendentals=int(rows_proc),
                           bytes_accessed=int(bytes_accessed))

    vmem_spec = pl.BlockSpec(memory_space=pltpu.MemorySpace.VMEM)
    out_slab = pl.pallas_call(
        functools.partial(_fused_kernel, n_v, n_e, n_u, off_e, off_u, core_steps),
        out_shape=jax.ShapeDtypeStruct((rows, LANES), jnp.float32),
        in_specs=[vmem_spec] * len(args),
        out_specs=vmem_spec,
        compiler_params=pltpu.CompilerParams(vmem_limit_bytes=32 * 1024 * 1024),
        cost_estimate=cost,
    )(*args)

    # slice the real rows / head widths out of the single lane-dense slab
    return (out_slab[0:n_v, 0:OUT_DIMS[0]],
            out_slab[off_e:off_e + n_e, 0:OUT_DIMS[1]],
            out_slab[off_u:off_u + n_u, 0:OUT_DIMS[2]])


# --------------------------------------------------------------------------
if __name__ == "__main__":
    key = jax.random.PRNGKey(0)
    k_par, k_x, k_e, k_u, k_idx = jax.random.split(key, 5)

    n_v, n_e, n_u = 8, 16, 1
    params = build_params(k_par)

    x = jax.random.normal(k_x, (n_v, IN_DIMS[0]), jnp.float32)
    edge_attr = jax.random.normal(k_e, (n_e, IN_DIMS[1]), jnp.float32)
    u = jax.random.normal(k_u, (n_u, IN_DIMS[2]), jnp.float32)
    edge_index = jax.random.randint(k_idx, (2, n_e), 0, n_v, dtype=jnp.int32)

    v_out, e_out, u_out = encoder_core_decoder_forward(
        params, x, edge_index, edge_attr, u, core_steps=CORE_STEPS
    )
    jax.block_until_ready((v_out, e_out, u_out))

    assert v_out.shape == (n_v, OUT_DIMS[0])
    assert e_out.shape == (n_e, OUT_DIMS[1])
    assert u_out.shape == (n_u, OUT_DIMS[2])
    print("KERNEL_OK")
</pallas_src>

<mosaic_0001>
module attributes {stable_mosaic.version = 11 : i64} {
  func.func @_fused_kernel(%arg0: memref<32x128xf32, #tpu.memory_space<vmem>>, %arg1: memref<2x16xi32, #tpu.memory_space<vmem>>, %arg2: memref<16x2xi32, #tpu.memory_space<vmem>>, %arg3: memref<9x128x32xf32, #tpu.memory_space<vmem>>, %arg4: memref<9x32x16xf32, #tpu.memory_space<vmem>>, %arg5: memref<9x4x128xf32, #tpu.memory_space<vmem>>, %arg6: memref<3x17x128xf32, #tpu.memory_space<vmem>>, %arg7: memref<32x128xf32, #tpu.memory_space<vmem>>) attributes {dimension_semantics = [], scalar_prefetch = 0 : i64, scratch_operands = 0 : i64, tpu.core_type = #tpu.core_type<tc>} {
    %c0 = arith.constant 0 : index
    %c0_0 = arith.constant 0 : index
    %c0_1 = arith.constant 0 : index
    %0 = vector.load %arg5[%c0, %c0_0, %c0_1] : memref<9x4x128xf32, #tpu.memory_space<vmem>>, vector<1x4x128xf32>
    %1 = vector.shape_cast %0 : vector<1x4x128xf32> to vector<4x128xf32>
    %2 = vector.extract_strided_slice %1 {offsets = [0, 0], sizes = [1, 32], strides = [1, 1]} : vector<4x128xf32> to vector<1x32xf32>
    %3 = vector.extract_strided_slice %1 {offsets = [1, 0], sizes = [1, 16], strides = [1, 1]} : vector<4x128xf32> to vector<1x16xf32>
    %4 = vector.extract_strided_slice %1 {offsets = [2, 0], sizes = [1, 16], strides = [1, 1]} : vector<4x128xf32> to vector<1x16xf32>
    %5 = vector.extract_strided_slice %1 {offsets = [3, 0], sizes = [1, 16], strides = [1, 1]} : vector<4x128xf32> to vector<1x16xf32>
    %c1 = arith.constant 1 : index
    %c0_2 = arith.constant 0 : index
    %c0_3 = arith.constant 0 : index
    %6 = vector.load %arg5[%c1, %c0_2, %c0_3] : memref<9x4x128xf32, #tpu.memory_space<vmem>>, vector<1x4x128xf32>
    %7 = vector.shape_cast %6 : vector<1x4x128xf32> to vector<4x128xf32>
    %8 = vector.extract_strided_slice %7 {offsets = [0, 0], sizes = [1, 32], strides = [1, 1]} : vector<4x128xf32> to vector<1x32xf32>
    %9 = vector.extract_strided_slice %7 {offsets = [1, 0], sizes = [1, 16], strides = [1, 1]} : vector<4x128xf32> to vector<1x16xf32>
    %10 = vector.extract_strided_slice %7 {offsets = [2, 0], sizes = [1, 16], strides = [1, 1]} : vector<4x128xf32> to vector<1x16xf32>
    %11 = vector.extract_strided_slice %7 {offsets = [3, 0], sizes = [1, 16], strides = [1, 1]} : vector<4x128xf32> to vector<1x16xf32>
    %c2 = arith.constant 2 : index
    %c0_4 = arith.constant 0 : index
    %c0_5 = arith.constant 0 : index
    %12 = vector.load %arg5[%c2, %c0_4, %c0_5] : memref<9x4x128xf32, #tpu.memory_space<vmem>>, vector<1x4x128xf32>
    %13 = vector.shape_cast %12 : vector<1x4x128xf32> to vector<4x128xf32>
    %14 = vector.extract_strided_slice %13 {offsets = [0, 0], sizes = [1, 32], strides = [1, 1]} : vector<4x128xf32> to vector<1x32xf32>
    %15 = vector.extract_strided_slice %13 {offsets = [1, 0], sizes = [1, 16], strides = [1, 1]} : vector<4x128xf32> to vector<1x16xf32>
    %16 = vector.extract_strided_slice %13 {offsets = [2, 0], sizes = [1, 16], strides = [1, 1]} : vector<4x128xf32> to vector<1x16xf32>
    %17 = vector.extract_strided_slice %13 {offsets = [3, 0], sizes = [1, 16], strides = [1, 1]} : vector<4x128xf32> to vector<1x16xf32>
    %c3 = arith.constant 3 : index
    %c0_6 = arith.constant 0 : index
    %c0_7 = arith.constant 0 : index
    %18 = vector.load %arg5[%c3, %c0_6, %c0_7] : memref<9x4x128xf32, #tpu.memory_space<vmem>>, vector<1x4x128xf32>
    %19 = vector.shape_cast %18 : vector<1x4x128xf32> to vector<4x128xf32>
    %20 = vector.extract_strided_slice %19 {offsets = [0, 0], sizes = [1, 32], strides = [1, 1]} : vector<4x128xf32> to vector<1x32xf32>
    %21 = vector.extract_strided_slice %19 {offsets = [1, 0], sizes = [1, 16], strides = [1, 1]} : vector<4x128xf32> to vector<1x16xf32>
    %22 = vector.extract_strided_slice %19 {offsets = [2, 0], sizes = [1, 16], strides = [1, 1]} : vector<4x128xf32> to vector<1x16xf32>
    %23 = vector.extract_strided_slice %19 {offsets = [3, 0], sizes = [1, 16], strides = [1, 1]} : vector<4x128xf32> to vector<1x16xf32>
    %c4 = arith.constant 4 : index
    %c0_8 = arith.constant 0 : index
    %c0_9 = arith.constant 0 : index
    %24 = vector.load %arg5[%c4, %c0_8, %c0_9] : memref<9x4x128xf32, #tpu.memory_space<vmem>>, vector<1x4x128xf32>
    %25 = vector.shape_cast %24 : vector<1x4x128xf32> to vector<4x128xf32>
    %26 = vector.extract_strided_slice %25 {offsets = [0, 0], sizes = [1, 32], strides = [1, 1]} : vector<4x128xf32> to vector<1x32xf32>
    %27 = vector.extract_strided_slice %25 {offsets = [1, 0], sizes = [1, 16], strides = [1, 1]} : vector<4x128xf32> to vector<1x16xf32>
    %28 = vector.extract_strided_slice %25 {offsets = [2, 0], sizes = [1, 16], strides = [1, 1]} : vector<4x128xf32> to vector<1x16xf32>
    %29 = vector.extract_strided_slice %25 {offsets = [3, 0], sizes = [1, 16], strides = [1, 1]} : vector<4x128xf32> to vector<1x16xf32>
    %c5 = arith.constant 5 : index
    %c0_10 = arith.constant 0 : index
    %c0_11 = arith.constant 0 : index
    %30 = vector.load %arg5[%c5, %c0_10, %c0_11] : memref<9x4x128xf32, #tpu.memory_space<vmem>>, vector<1x4x128xf32>
    %31 = vector.shape_cast %30 : vector<1x4x128xf32> to vector<4x128xf32>
    %32 = vector.extract_strided_slice %31 {offsets = [0, 0], sizes = [1, 32], strides = [1, 1]} : vector<4x128xf32> to vector<1x32xf32>
    %33 = vector.extract_strided_slice %31 {offsets = [1, 0], sizes = [1, 16], strides = [1, 1]} : vector<4x128xf32> to vector<1x16xf32>
    %34 = vector.extract_strided_slice %31 {offsets = [2, 0], sizes = [1, 16], strides = [1, 1]} : vector<4x128xf32> to vector<1x16xf32>
    %35 = vector.extract_strided_slice %31 {offsets = [3, 0], sizes = [1, 16], strides = [1, 1]} : vector<4x128xf32> to vector<1x16xf32>
    %c6 = arith.constant 6 : index
    %c0_12 = arith.constant 0 : index
    %c0_13 = arith.constant 0 : index
    %36 = vector.load %arg5[%c6, %c0_12, %c0_13] : memref<9x4x128xf32, #tpu.memory_space<vmem>>, vector<1x4x128xf32>
    %37 = vector.shape_cast %36 : vector<1x4x128xf32> to vector<4x128xf32>
    %38 = vector.extract_strided_slice %37 {offsets = [0, 0], sizes = [1, 32], strides = [1, 1]} : vector<4x128xf32> to vector<1x32xf32>
    %39 = vector.extract_strided_slice %37 {offsets = [1, 0], sizes = [1, 16], strides = [1, 1]} : vector<4x128xf32> to vector<1x16xf32>
    %40 = vector.extract_strided_slice %37 {offsets = [2, 0], sizes = [1, 16], strides = [1, 1]} : vector<4x128xf32> to vector<1x16xf32>
    %41 = vector.extract_strided_slice %37 {offsets = [3, 0], sizes = [1, 16], strides = [1, 1]} : vector<4x128xf32> to vector<1x16xf32>
    %c7 = arith.constant 7 : index
    %c0_14 = arith.constant 0 : index
    %c0_15 = arith.constant 0 : index
    %42 = vector.load %arg5[%c7, %c0_14, %c0_15] : memref<9x4x128xf32, #tpu.memory_space<vmem>>, vector<1x4x128xf32>
    %43 = vector.shape_cast %42 : vector<1x4x128xf32> to vector<4x128xf32>
    %44 = vector.extract_strided_slice %43 {offsets = [0, 0], sizes = [1, 32], strides = [1, 1]} : vector<4x128xf32> to vector<1x32xf32>
    %45 = vector.extract_strided_slice %43 {offsets = [1, 0], sizes = [1, 16], strides = [1, 1]} : vector<4x128xf32> to vector<1x16xf32>
    %46 = vector.extract_strided_slice %43 {offsets = [2, 0], sizes = [1, 16], strides = [1, 1]} : vector<4x128xf32> to vector<1x16xf32>
    %47 = vector.extract_strided_slice %43 {offsets = [3, 0], sizes = [1, 16], strides = [1, 1]} : vector<4x128xf32> to vector<1x16xf32>
    %c8 = arith.constant 8 : index
    %c0_16 = arith.constant 0 : index
    %c0_17 = arith.constant 0 : index
    %48 = vector.load %arg5[%c8, %c0_16, %c0_17] : memref<9x4x128xf32, #tpu.memory_space<vmem>>, vector<1x4x128xf32>
    %49 = vector.shape_cast %48 : vector<1x4x128xf32> to vector<4x128xf32>
    %50 = vector.extract_strided_slice %49 {offsets = [0, 0], sizes = [1, 32], strides = [1, 1]} : vector<4x128xf32> to vector<1x32xf32>
    %51 = vector.extract_strided_slice %49 {offsets = [1, 0], sizes = [1, 16], strides = [1, 1]} : vector<4x128xf32> to vector<1x16xf32>
    %52 = vector.extract_strided_slice %49 {offsets = [2, 0], sizes = [1, 16], strides = [1, 1]} : vector<4x128xf32> to vector<1x16xf32>
    %53 = vector.extract_strided_slice %49 {offsets = [3, 0], sizes = [1, 16], strides = [1, 1]} : vector<4x128xf32> to vector<1x16xf32>
    %c0_18 = arith.constant 0 : index
    %c0_19 = arith.constant 0 : index
    %54 = vector.load %arg2[%c0_18, %c0_19] : memref<16x2xi32, #tpu.memory_space<vmem>>, vector<16x2xi32>
    %55 = vector.extract_strided_slice %54 {offsets = [0, 0], sizes = [16, 1], strides = [1, 1]} : vector<16x2xi32> to vector<16x1xi32>
    %56 = vector.extract_strided_slice %54 {offsets = [0, 1], sizes = [16, 1], strides = [1, 1]} : vector<16x2xi32> to vector<16x1xi32>
    %57 = tpu.iota {dimensions = array<i32: 1>} : vector<16x8xi32>
    %58 = vector.broadcast %55 : vector<16x1xi32> to vector<16x8xi32>
    %59 = arith.cmpi eq, %58, %57 : vector<16x8xi32>
    %60 = arith.extui %59 : vector<16x8xi1> to vector<16x8xi32>
    %61 = arith.sitofp %60 : vector<16x8xi32> to vector<16x8xf32>
    %62 = vector.broadcast %56 : vector<16x1xi32> to vector<16x8xi32>
    %63 = arith.cmpi eq, %62, %57 : vector<16x8xi32>
    %64 = arith.extui %63 : vector<16x8xi1> to vector<16x8xi32>
    %65 = arith.sitofp %64 : vector<16x8xi32> to vector<16x8xf32>
    %c0_20 = arith.constant 0 : index
    %c0_21 = arith.constant 0 : index
    %66 = vector.load %arg1[%c0_20, %c0_21] : memref<2x16xi32, #tpu.memory_space<vmem>>, vector<1x16xi32>
    %67 = tpu.iota {dimensions = array<i32: 0>} : vector<8x16xi32>
    %68 = vector.broadcast %66 : vector<1x16xi32> to vector<8x16xi32>
    %69 = arith.cmpi eq, %68, %67 : vector<8x16xi32>
    %70 = arith.extui %69 : vector<8x16xi1> to vector<8x16xi32>
    %71 = arith.sitofp %70 : vector<8x16xi32> to vector<8x16xf32>
    %c0_22 = arith.constant 0 : index
    %c0_23 = arith.constant 0 : index
    %72 = vector.load %arg0[%c0_22, %c0_23] : memref<32x128xf32, #tpu.memory_space<vmem>>, vector<8x128xf32>
    %c8_24 = arith.constant 8 : index
    %c0_25 = arith.constant 0 : index
    %73 = vector.load %arg0[%c8_24, %c0_25] : memref<32x128xf32, #tpu.memory_space<vmem>>, vector<16x128xf32>
    %c24 = arith.constant 24 : index
    %c0_26 = arith.constant 0 : index
    %74 = vector.load %arg0[%c24, %c0_26] : memref<32x128xf32, #tpu.memory_space<vmem>>, vector<1x128xf32>
    %c0_27 = arith.constant 0 : index
    %c0_28 = arith.constant 0 : index
    %c0_29 = arith.constant 0 : index
    %75 = vector.load %arg3[%c0_27, %c0_28, %c0_29] : memref<9x128x32xf32, #tpu.memory_space<vmem>>, vector<1x128x32xf32>
    %76 = vector.shape_cast %75 : vector<1x128x32xf32> to vector<128x32xf32>
    %cst = arith.constant dense<0.000000e+00> : vector<8x32xf32>
    %77 = tpu.matmul %72, %76, %cst {dimension_numbers = #tpu.dot_dimension_numbers<[1], [0], [0], [1], [0, 0, 1, 1], [], []>} : vector<8x128xf32>, vector<128x32xf32>, vector<8x32xf32> -> vector<8x32xf32>
    %78 = vector.broadcast %2 : vector<1x32xf32> to vector<8x32xf32>
    %79 = arith.addf %77, %78 : vector<8x32xf32>
    %cst_30 = arith.constant 0.000000e+00 : f32
    %80 = vector.broadcast %cst_30 : f32 to vector<8x32xf32>
    %81 = arith.maximumf %79, %80 : vector<8x32xf32>
    %c0_31 = arith.constant 0 : index
    %c0_32 = arith.constant 0 : index
    %c0_33 = arith.constant 0 : index
    %82 = vector.load %arg4[%c0_31, %c0_32, %c0_33] : memref<9x32x16xf32, #tpu.memory_space<vmem>>, vector<1x32x16xf32>
    %83 = vector.shape_cast %82 : vector<1x32x16xf32> to vector<32x16xf32>
    %cst_34 = arith.constant dense<0.000000e+00> : vector<8x16xf32>
    %84 = tpu.matmul %81, %83, %cst_34 {dimension_numbers = #tpu.dot_dimension_numbers<[1], [0], [0], [1], [0, 0, 1, 1], [], []>} : vector<8x32xf32>, vector<32x16xf32>, vector<8x16xf32> -> vector<8x16xf32>
    %85 = vector.broadcast %3 : vector<1x16xf32> to vector<8x16xf32>
    %86 = arith.addf %84, %85 : vector<8x16xf32>
    %cst_35 = arith.constant 0.000000e+00 : f32
    %87 = vector.broadcast %cst_35 : f32 to vector<8x16xf32>
    %88 = arith.maximumf %86, %87 : vector<8x16xf32>
    %cst_36 = arith.constant dense<0.000000e+00> : vector<8xf32>
    %89 = vector.multi_reduction <add>, %88, %cst_36 [1] : vector<8x16xf32> to vector<8xf32>
    %90 = vector.shape_cast %89 : vector<8xf32> to vector<8x1xf32>
    %91 = arith.mulf %88, %88 : vector<8x16xf32>
    %cst_37 = arith.constant dense<0.000000e+00> : vector<8xf32>
    %92 = vector.multi_reduction <add>, %91, %cst_37 [1] : vector<8x16xf32> to vector<8xf32>
    %93 = vector.shape_cast %92 : vector<8xf32> to vector<8x1xf32>
    %cst_38 = arith.constant 6.250000e-02 : f32
    %94 = vector.broadcast %cst_38 : f32 to vector<8x1xf32>
    %95 = arith.mulf %90, %94 : vector<8x1xf32>
    %cst_39 = arith.constant 6.250000e-02 : f32
    %96 = vector.broadcast %cst_39 : f32 to vector<8x1xf32>
    %97 = arith.mulf %93, %96 : vector<8x1xf32>
    %98 = arith.mulf %95, %95 : vector<8x1xf32>
    %99 = arith.subf %97, %98 : vector<8x1xf32>
    %100 = vector.broadcast %95 : vector<8x1xf32> to vector<8x16xf32>
    %101 = arith.subf %88, %100 : vector<8x16xf32>
    %cst_40 = arith.constant 9.99999974E-6 : f32
    %102 = vector.broadcast %cst_40 : f32 to vector<8x1xf32>
    %103 = arith.addf %99, %102 : vector<8x1xf32>
    %104 = math.rsqrt %103 : vector<8x1xf32>
    %105 = vector.broadcast %104 : vector<8x1xf32> to vector<8x16xf32>
    %106 = arith.mulf %101, %105 : vector<8x16xf32>
    %107 = vector.broadcast %4 : vector<1x16xf32> to vector<8x16xf32>
    %108 = arith.mulf %106, %107 : vector<8x16xf32>
    %109 = vector.broadcast %5 : vector<1x16xf32> to vector<8x16xf32>
    %110 = arith.addf %108, %109 : vector<8x16xf32>
    %c1_41 = arith.constant 1 : index
    %c0_42 = arith.constant 0 : index
    %c0_43 = arith.constant 0 : index
    %111 = vector.load %arg3[%c1_41, %c0_42, %c0_43] : memref<9x128x32xf32, #tpu.memory_space<vmem>>, vector<1x128x32xf32>
    %112 = vector.shape_cast %111 : vector<1x128x32xf32> to vector<128x32xf32>
    %cst_44 = arith.constant dense<0.000000e+00> : vector<16x32xf32>
    %113 = tpu.matmul %73, %112, %cst_44 {dimension_numbers = #tpu.dot_dimension_numbers<[1], [0], [0], [1], [0, 0, 1, 1], [], []>} : vector<16x128xf32>, vector<128x32xf32>, vector<16x32xf32> -> vector<16x32xf32>
    %114 = vector.broadcast %8 : vector<1x32xf32> to vector<16x32xf32>
    %115 = arith.addf %113, %114 : vector<16x32xf32>
    %cst_45 = arith.constant 0.000000e+00 : f32
    %116 = vector.broadcast %cst_45 : f32 to vector<16x32xf32>
    %117 = arith.maximumf %115, %116 : vector<16x32xf32>
    %c1_46 = arith.constant 1 : index
    %c0_47 = arith.constant 0 : index
    %c0_48 = arith.constant 0 : index
    %118 = vector.load %arg4[%c1_46, %c0_47, %c0_48] : memref<9x32x16xf32, #tpu.memory_space<vmem>>, vector<1x32x16xf32>
    %119 = vector.shape_cast %118 : vector<1x32x16xf32> to vector<32x16xf32>
    %cst_49 = arith.constant dense<0.000000e+00> : vector<16x16xf32>
    %120 = tpu.matmul %117, %119, %cst_49 {dimension_numbers = #tpu.dot_dimension_numbers<[1], [0], [0], [1], [0, 0, 1, 1], [], []>} : vector<16x32xf32>, vector<32x16xf32>, vector<16x16xf32> -> vector<16x16xf32>
    %121 = vector.broadcast %9 : vector<1x16xf32> to vector<16x16xf32>
    %122 = arith.addf %120, %121 : vector<16x16xf32>
    %cst_50 = arith.constant 0.000000e+00 : f32
    %123 = vector.broadcast %cst_50 : f32 to vector<16x16xf32>
    %124 = arith.maximumf %122, %123 : vector<16x16xf32>
    %cst_51 = arith.constant dense<0.000000e+00> : vector<16xf32>
    %125 = vector.multi_reduction <add>, %124, %cst_51 [1] : vector<16x16xf32> to vector<16xf32>
    %126 = vector.shape_cast %125 : vector<16xf32> to vector<16x1xf32>
    %127 = arith.mulf %124, %124 : vector<16x16xf32>
    %cst_52 = arith.constant dense<0.000000e+00> : vector<16xf32>
    %128 = vector.multi_reduction <add>, %127, %cst_52 [1] : vector<16x16xf32> to vector<16xf32>
    %129 = vector.shape_cast %128 : vector<16xf32> to vector<16x1xf32>
    %cst_53 = arith.constant 6.250000e-02 : f32
    %130 = vector.broadcast %cst_53 : f32 to vector<16x1xf32>
    %131 = arith.mulf %126, %130 : vector<16x1xf32>
    %cst_54 = arith.constant 6.250000e-02 : f32
    %132 = vector.broadcast %cst_54 : f32 to vector<16x1xf32>
    %133 = arith.mulf %129, %132 : vector<16x1xf32>
    %134 = arith.mulf %131, %131 : vector<16x1xf32>
    %135 = arith.subf %133, %134 : vector<16x1xf32>
    %136 = vector.broadcast %131 : vector<16x1xf32> to vector<16x16xf32>
    %137 = arith.subf %124, %136 : vector<16x16xf32>
    %cst_55 = arith.constant 9.99999974E-6 : f32
    %138 = vector.broadcast %cst_55 : f32 to vector<16x1xf32>
    %139 = arith.addf %135, %138 : vector<16x1xf32>
    %140 = math.rsqrt %139 : vector<16x1xf32>
    %141 = vector.broadcast %140 : vector<16x1xf32> to vector<16x16xf32>
    %142 = arith.mulf %137, %141 : vector<16x16xf32>
    %143 = vector.broadcast %10 : vector<1x16xf32> to vector<16x16xf32>
    %144 = arith.mulf %142, %143 : vector<16x16xf32>
    %145 = vector.broadcast %11 : vector<1x16xf32> to vector<16x16xf32>
    %146 = arith.addf %144, %145 : vector<16x16xf32>
    %c2_56 = arith.constant 2 : index
    %c0_57 = arith.constant 0 : index
    %c0_58 = arith.constant 0 : index
    %147 = vector.load %arg3[%c2_56, %c0_57, %c0_58] : memref<9x128x32xf32, #tpu.memory_space<vmem>>, vector<1x128x32xf32>
    %148 = vector.shape_cast %147 : vector<1x128x32xf32> to vector<128x32xf32>
    %cst_59 = arith.constant dense<0.000000e+00> : vector<1x32xf32>
    %149 = tpu.matmul %74, %148, %cst_59 {dimension_numbers = #tpu.dot_dimension_numbers<[1], [0], [0], [1], [0, 0, 1, 1], [], []>} : vector<1x128xf32>, vector<128x32xf32>, vector<1x32xf32> -> vector<1x32xf32>
    %150 = arith.addf %149, %14 : vector<1x32xf32>
    %cst_60 = arith.constant 0.000000e+00 : f32
    %151 = vector.broadcast %cst_60 : f32 to vector<1x32xf32>
    %152 = arith.maximumf %150, %151 : vector<1x32xf32>
    %c2_61 = arith.constant 2 : index
    %c0_62 = arith.constant 0 : index
    %c0_63 = arith.constant 0 : index
    %153 = vector.load %arg4[%c2_61, %c0_62, %c0_63] : memref<9x32x16xf32, #tpu.memory_space<vmem>>, vector<1x32x16xf32>
    %154 = vector.shape_cast %153 : vector<1x32x16xf32> to vector<32x16xf32>
    %cst_64 = arith.constant dense<0.000000e+00> : vector<1x16xf32>
    %155 = tpu.matmul %152, %154, %cst_64 {dimension_numbers = #tpu.dot_dimension_numbers<[1], [0], [0], [1], [0, 0, 1, 1], [], []>} : vector<1x32xf32>, vector<32x16xf32>, vector<1x16xf32> -> vector<1x16xf32>
    %156 = arith.addf %155, %15 : vector<1x16xf32>
    %cst_65 = arith.constant 0.000000e+00 : f32
    %157 = vector.broadcast %cst_65 : f32 to vector<1x16xf32>
    %158 = arith.maximumf %156, %157 : vector<1x16xf32>
    %cst_66 = arith.constant dense<0.000000e+00> : vector<1xf32>
    %159 = vector.multi_reduction <add>, %158, %cst_66 [1] : vector<1x16xf32> to vector<1xf32>
    %160 = vector.shape_cast %159 : vector<1xf32> to vector<1x1xf32>
    %161 = arith.mulf %158, %158 : vector<1x16xf32>
    %cst_67 = arith.constant dense<0.000000e+00> : vector<1xf32>
    %162 = vector.multi_reduction <add>, %161, %cst_67 [1] : vector<1x16xf32> to vector<1xf32>
    %163 = vector.shape_cast %162 : vector<1xf32> to vector<1x1xf32>
    %cst_68 = arith.constant 6.250000e-02 : f32
    %164 = vector.broadcast %cst_68 : f32 to vector<1x1xf32>
    %165 = arith.mulf %160, %164 : vector<1x1xf32>
    %cst_69 = arith.constant 6.250000e-02 : f32
    %166 = vector.broadcast %cst_69 : f32 to vector<1x1xf32>
    %167 = arith.mulf %163, %166 : vector<1x1xf32>
    %168 = arith.mulf %165, %165 : vector<1x1xf32>
    %169 = arith.subf %167, %168 : vector<1x1xf32>
    %170 = vector.broadcast %165 : vector<1x1xf32> to vector<1x16xf32>
    %171 = arith.subf %158, %170 : vector<1x16xf32>
    %cst_70 = arith.constant 9.99999974E-6 : f32
    %172 = vector.broadcast %cst_70 : f32 to vector<1x1xf32>
    %173 = arith.addf %169, %172 : vector<1x1xf32>
    %174 = math.rsqrt %173 : vector<1x1xf32>
    %175 = vector.broadcast %174 : vector<1x1xf32> to vector<1x16xf32>
    %176 = arith.mulf %171, %175 : vector<1x16xf32>
    %177 = arith.mulf %176, %16 : vector<1x16xf32>
    %178 = arith.addf %177, %17 : vector<1x16xf32>
    %cst_71 = arith.constant 0.000000e+00 : f32
    %179 = vector.broadcast %cst_71 : f32 to vector<8x16xf32>
    %cst_72 = arith.constant 0.000000e+00 : f32
    %180 = vector.broadcast %cst_72 : f32 to vector<16x16xf32>
    %cst_73 = arith.constant 0.000000e+00 : f32
    %181 = vector.broadcast %cst_73 : f32 to vector<1x16xf32>
    %182 = tpu.concatenate %110, %179 in 1 : vector<8x16xf32>, vector<8x16xf32> -> vector<8x32xf32>
    %183 = tpu.concatenate %146, %180 in 1 : vector<16x16xf32>, vector<16x16xf32> -> vector<16x32xf32>
    %184 = tpu.concatenate %178, %181 in 1 : vector<1x16xf32>, vector<1x16xf32> -> vector<1x32xf32>
    %cst_74 = arith.constant dense<0.000000e+00> : vector<16x32xf32>
    %185 = tpu.matmul %61, %182, %cst_74 {dimension_numbers = #tpu.dot_dimension_numbers<[1], [0], [0], [1], [0, 0, 1, 1], [], []>} : vector<16x8xf32>, vector<8x32xf32>, vector<16x32xf32> -> vector<16x32xf32>
    %cst_75 = arith.constant dense<0.000000e+00> : vector<16x32xf32>
    %186 = tpu.matmul %65, %182, %cst_75 {dimension_numbers = #tpu.dot_dimension_numbers<[1], [0], [0], [1], [0, 0, 1, 1], [], []>} : vector<16x8xf32>, vector<8x32xf32>, vector<16x32xf32> -> vector<16x32xf32>
    %187 = vector.shape_cast %184 : vector<1x32xf32> to vector<1x32xf32>
    %188 = vector.broadcast %187 : vector<1x32xf32> to vector<16x32xf32>
    %189 = tpu.concatenate %185, %186, %183, %188 in 1 : vector<16x32xf32>, vector<16x32xf32>, vector<16x32xf32>, vector<16x32xf32> -> vector<16x128xf32>
    %c3_76 = arith.constant 3 : index
    %c0_77 = arith.constant 0 : index
    %c0_78 = arith.constant 0 : index
    %190 = vector.load %arg3[%c3_76, %c0_77, %c0_78] : memref<9x128x32xf32, #tpu.memory_space<vmem>>, vector<1x128x32xf32>
    %191 = vector.shape_cast %190 : vector<1x128x32xf32> to vector<128x32xf32>
    %cst_79 = arith.constant dense<0.000000e+00> : vector<16x32xf32>
    %192 = tpu.matmul %189, %191, %cst_79 {dimension_numbers = #tpu.dot_dimension_numbers<[1], [0], [0], [1], [0, 0, 1, 1], [], []>} : vector<16x128xf32>, vector<128x32xf32>, vector<16x32xf32> -> vector<16x32xf32>
    %193 = vector.broadcast %20 : vector<1x32xf32> to vector<16x32xf32>
    %194 = arith.addf %192, %193 : vector<16x32xf32>
    %cst_80 = arith.constant 0.000000e+00 : f32
    %195 = vector.broadcast %cst_80 : f32 to vector<16x32xf32>
    %196 = arith.maximumf %194, %195 : vector<16x32xf32>
    %c3_81 = arith.constant 3 : index
    %c0_82 = arith.constant 0 : index
    %c0_83 = arith.constant 0 : index
    %197 = vector.load %arg4[%c3_81, %c0_82, %c0_83] : memref<9x32x16xf32, #tpu.memory_space<vmem>>, vector<1x32x16xf32>
    %198 = vector.shape_cast %197 : vector<1x32x16xf32> to vector<32x16xf32>
    %cst_84 = arith.constant dense<0.000000e+00> : vector<16x16xf32>
    %199 = tpu.matmul %196, %198, %cst_84 {dimension_numbers = #tpu.dot_dimension_numbers<[1], [0], [0], [1], [0, 0, 1, 1], [], []>} : vector<16x32xf32>, vector<32x16xf32>, vector<16x16xf32> -> vector<16x16xf32>
    %200 = vector.broadcast %21 : vector<1x16xf32> to vector<16x16xf32>
    %201 = arith.addf %199, %200 : vector<16x16xf32>
    %cst_85 = arith.constant 0.000000e+00 : f32
    %202 = vector.broadcast %cst_85 : f32 to vector<16x16xf32>
    %203 = arith.maximumf %201, %202 : vector<16x16xf32>
    %cst_86 = arith.constant dense<0.000000e+00> : vector<16xf32>
    %204 = vector.multi_reduction <add>, %203, %cst_86 [1] : vector<16x16xf32> to vector<16xf32>
    %205 = vector.shape_cast %204 : vector<16xf32> to vector<16x1xf32>
    %206 = arith.mulf %203, %203 : vector<16x16xf32>
    %cst_87 = arith.constant dense<0.000000e+00> : vector<16xf32>
    %207 = vector.multi_reduction <add>, %206, %cst_87 [1] : vector<16x16xf32> to vector<16xf32>
    %208 = vector.shape_cast %207 : vector<16xf32> to vector<16x1xf32>
    %cst_88 = arith.constant 6.250000e-02 : f32
    %209 = vector.broadcast %cst_88 : f32 to vector<16x1xf32>
    %210 = arith.mulf %205, %209 : vector<16x1xf32>
    %cst_89 = arith.constant 6.250000e-02 : f32
    %211 = vector.broadcast %cst_89 : f32 to vector<16x1xf32>
    %212 = arith.mulf %208, %211 : vector<16x1xf32>
    %213 = arith.mulf %210, %210 : vector<16x1xf32>
    %214 = arith.subf %212, %213 : vector<16x1xf32>
    %215 = vector.broadcast %210 : vector<16x1xf32> to vector<16x16xf32>
    %216 = arith.subf %203, %215 : vector<16x16xf32>
    %cst_90 = arith.constant 9.99999974E-6 : f32
    %217 = vector.broadcast %cst_90 : f32 to vector<16x1xf32>
    %218 = arith.addf %214, %217 : vector<16x1xf32>
    %219 = math.rsqrt %218 : vector<16x1xf32>
    %220 = vector.broadcast %219 : vector<16x1xf32> to vector<16x16xf32>
    %221 = arith.mulf %216, %220 : vector<16x16xf32>
    %222 = vector.broadcast %22 : vector<1x16xf32> to vector<16x16xf32>
    %223 = arith.mulf %221, %222 : vector<16x16xf32>
    %224 = vector.broadcast %23 : vector<1x16xf32> to vector<16x16xf32>
    %225 = arith.addf %223, %224 : vector<16x16xf32>
    %cst_91 = arith.constant dense<0.000000e+00> : vector<8x16xf32>
    %226 = tpu.matmul %71, %225, %cst_91 {dimension_numbers = #tpu.dot_dimension_numbers<[1], [0], [0], [1], [0, 0, 1, 1], [], []>} : vector<8x16xf32>, vector<16x16xf32>, vector<8x16xf32> -> vector<8x16xf32>
    %227 = vector.shape_cast %184 : vector<1x32xf32> to vector<1x32xf32>
    %228 = vector.broadcast %227 : vector<1x32xf32> to vector<8x32xf32>
    %229 = tpu.concatenate %182, %226, %228 in 1 : vector<8x32xf32>, vector<8x16xf32>, vector<8x32xf32> -> vector<8x80xf32>
    %c4_92 = arith.constant 4 : index
    %c0_93 = arith.constant 0 : index
    %c0_94 = arith.constant 0 : index
    %230 = vector.load %arg3[%c4_92, %c0_93, %c0_94] : memref<9x128x32xf32, #tpu.memory_space<vmem>>, vector<1x80x32xf32>
    %231 = vector.shape_cast %230 : vector<1x80x32xf32> to vector<80x32xf32>
    %cst_95 = arith.constant dense<0.000000e+00> : vector<8x32xf32>
    %232 = tpu.matmul %229, %231, %cst_95 {dimension_numbers = #tpu.dot_dimension_numbers<[1], [0], [0], [1], [0, 0, 1, 1], [], []>} : vector<8x80xf32>, vector<80x32xf32>, vector<8x32xf32> -> vector<8x32xf32>
    %233 = vector.broadcast %26 : vector<1x32xf32> to vector<8x32xf32>
    %234 = arith.addf %232, %233 : vector<8x32xf32>
    %cst_96 = arith.constant 0.000000e+00 : f32
    %235 = vector.broadcast %cst_96 : f32 to vector<8x32xf32>
    %236 = arith.maximumf %234, %235 : vector<8x32xf32>
    %c4_97 = arith.constant 4 : index
    %c0_98 = arith.constant 0 : index
    %c0_99 = arith.constant 0 : index
    %237 = vector.load %arg4[%c4_97, %c0_98, %c0_99] : memref<9x32x16xf32, #tpu.memory_space<vmem>>, vector<1x32x16xf32>
    %238 = vector.shape_cast %237 : vector<1x32x16xf32> to vector<32x16xf32>
    %cst_100 = arith.constant dense<0.000000e+00> : vector<8x16xf32>
    %239 = tpu.matmul %236, %238, %cst_100 {dimension_numbers = #tpu.dot_dimension_numbers<[1], [0], [0], [1], [0, 0, 1, 1], [], []>} : vector<8x32xf32>, vector<32x16xf32>, vector<8x16xf32> -> vector<8x16xf32>
    %240 = vector.broadcast %27 : vector<1x16xf32> to vector<8x16xf32>
    %241 = arith.addf %239, %240 : vector<8x16xf32>
    %cst_101 = arith.constant 0.000000e+00 : f32
    %242 = vector.broadcast %cst_101 : f32 to vector<8x16xf32>
    %243 = arith.maximumf %241, %242 : vector<8x16xf32>
    %cst_102 = arith.constant dense<0.000000e+00> : vector<8xf32>
    %244 = vector.multi_reduction <add>, %243, %cst_102 [1] : vector<8x16xf32> to vector<8xf32>
    %245 = vector.shape_cast %244 : vector<8xf32> to vector<8x1xf32>
    %246 = arith.mulf %243, %243 : vector<8x16xf32>
    %cst_103 = arith.constant dense<0.000000e+00> : vector<8xf32>
    %247 = vector.multi_reduction <add>, %246, %cst_103 [1] : vector<8x16xf32> to vector<8xf32>
    %248 = vector.shape_cast %247 : vector<8xf32> to vector<8x1xf32>
    %cst_104 = arith.constant 6.250000e-02 : f32
    %249 = vector.broadcast %cst_104 : f32 to vector<8x1xf32>
    %250 = arith.mulf %245, %249 : vector<8x1xf32>
    %cst_105 = arith.constant 6.250000e-02 : f32
    %251 = vector.broadcast %cst_105 : f32 to vector<8x1xf32>
    %252 = arith.mulf %248, %251 : vector<8x1xf32>
    %253 = arith.mulf %250, %250 : vector<8x1xf32>
    %254 = arith.subf %252, %253 : vector<8x1xf32>
    %255 = vector.broadcast %250 : vector<8x1xf32> to vector<8x16xf32>
    %256 = arith.subf %243, %255 : vector<8x16xf32>
    %cst_106 = arith.constant 9.99999974E-6 : f32
    %257 = vector.broadcast %cst_106 : f32 to vector<8x1xf32>
    %258 = arith.addf %254, %257 : vector<8x1xf32>
    %259 = math.rsqrt %258 : vector<8x1xf32>
    %260 = vector.broadcast %259 : vector<8x1xf32> to vector<8x16xf32>
    %261 = arith.mulf %256, %260 : vector<8x16xf32>
    %262 = vector.broadcast %28 : vector<1x16xf32> to vector<8x16xf32>
    %263 = arith.mulf %261, %262 : vector<8x16xf32>
    %264 = vector.broadcast %29 : vector<1x16xf32> to vector<8x16xf32>
    %265 = arith.addf %263, %264 : vector<8x16xf32>
    %cst_107 = arith.constant dense<0.000000e+00> : vector<16xf32>
    %266 = vector.multi_reduction <add>, %265, %cst_107 [0] : vector<8x16xf32> to vector<16xf32>
    %267 = vector.shape_cast %266 : vector<16xf32> to vector<1x16xf32>
    %cst_108 = arith.constant 8.000000e+00 : f32
    %268 = vector.broadcast %cst_108 : f32 to vector<1x16xf32>
    %269 = arith.divf %267, %268 : vector<1x16xf32>
    %cst_109 = arith.constant dense<0.000000e+00> : vector<16xf32>
    %270 = vector.multi_reduction <add>, %225, %cst_109 [0] : vector<16x16xf32> to vector<16xf32>
    %271 = vector.shape_cast %270 : vector<16xf32> to vector<1x16xf32>
    %cst_110 = arith.constant 1.600000e+01 : f32
    %272 = vector.broadcast %cst_110 : f32 to vector<1x16xf32>
    %273 = arith.divf %271, %272 : vector<1x16xf32>
    %274 = tpu.concatenate %184, %269, %273 in 1 : vector<1x32xf32>, vector<1x16xf32>, vector<1x16xf32> -> vector<1x64xf32>
    %c5_111 = arith.constant 5 : index
    %c0_112 = arith.constant 0 : index
    %c0_113 = arith.constant 0 : index
    %275 = vector.load %arg3[%c5_111, %c0_112, %c0_113] : memref<9x128x32xf32, #tpu.memory_space<vmem>>, vector<1x64x32xf32>
    %276 = vector.shape_cast %275 : vector<1x64x32xf32> to vector<64x32xf32>
    %cst_114 = arith.constant dense<0.000000e+00> : vector<1x32xf32>
    %277 = tpu.matmul %274, %276, %cst_114 {dimension_numbers = #tpu.dot_dimension_numbers<[1], [0], [0], [1], [0, 0, 1, 1], [], []>} : vector<1x64xf32>, vector<64x32xf32>, vector<1x32xf32> -> vector<1x32xf32>
    %278 = arith.addf %277, %32 : vector<1x32xf32>
    %cst_115 = arith.constant 0.000000e+00 : f32
    %279 = vector.broadcast %cst_115 : f32 to vector<1x32xf32>
    %280 = arith.maximumf %278, %279 : vector<1x32xf32>
    %c5_116 = arith.constant 5 : index
    %c0_117 = arith.constant 0 : index
    %c0_118 = arith.constant 0 : index
    %281 = vector.load %arg4[%c5_116, %c0_117, %c0_118] : memref<9x32x16xf32, #tpu.memory_space<vmem>>, vector<1x32x16xf32>
    %282 = vector.shape_cast %281 : vector<1x32x16xf32> to vector<32x16xf32>
    %cst_119 = arith.constant dense<0.000000e+00> : vector<1x16xf32>
    %283 = tpu.matmul %280, %282, %cst_119 {dimension_numbers = #tpu.dot_dimension_numbers<[1], [0], [0], [1], [0, 0, 1, 1], [], []>} : vector<1x32xf32>, vector<32x16xf32>, vector<1x16xf32> -> vector<1x16xf32>
    %284 = arith.addf %283, %33 : vector<1x16xf32>
    %cst_120 = arith.constant 0.000000e+00 : f32
    %285 = vector.broadcast %cst_120 : f32 to vector<1x16xf32>
    %286 = arith.maximumf %284, %285 : vector<1x16xf32>
    %cst_121 = arith.constant dense<0.000000e+00> : vector<1xf32>
    %287 = vector.multi_reduction <add>, %286, %cst_121 [1] : vector<1x16xf32> to vector<1xf32>
    %288 = vector.shape_cast %287 : vector<1xf32> to vector<1x1xf32>
    %289 = arith.mulf %286, %286 : vector<1x16xf32>
    %cst_122 = arith.constant dense<0.000000e+00> : vector<1xf32>
    %290 = vector.multi_reduction <add>, %289, %cst_122 [1] : vector<1x16xf32> to vector<1xf32>
    %291 = vector.shape_cast %290 : vector<1xf32> to vector<1x1xf32>
    %cst_123 = arith.constant 6.250000e-02 : f32
    %292 = vector.broadcast %cst_123 : f32 to vector<1x1xf32>
    %293 = arith.mulf %288, %292 : vector<1x1xf32>
    %cst_124 = arith.constant 6.250000e-02 : f32
    %294 = vector.broadcast %cst_124 : f32 to vector<1x1xf32>
    %295 = arith.mulf %291, %294 : vector<1x1xf32>
    %296 = arith.mulf %293, %293 : vector<1x1xf32>
    %297 = arith.subf %295, %296 : vector<1x1xf32>
    %298 = vector.broadcast %293 : vector<1x1xf32> to vector<1x16xf32>
    %299 = arith.subf %286, %298 : vector<1x16xf32>
    %cst_125 = arith.constant 9.99999974E-6 : f32
    %300 = vector.broadcast %cst_125 : f32 to vector<1x1xf32>
    %301 = arith.addf %297, %300 : vector<1x1xf32>
    %302 = math.rsqrt %301 : vector<1x1xf32>
    %303 = vector.broadcast %302 : vector<1x1xf32> to vector<1x16xf32>
    %304 = arith.mulf %299, %303 : vector<1x16xf32>
    %305 = arith.mulf %304, %34 : vector<1x16xf32>
    %306 = arith.addf %305, %35 : vector<1x16xf32>
    %307 = tpu.concatenate %110, %265 in 1 : vector<8x16xf32>, vector<8x16xf32> -> vector<8x32xf32>
    %308 = tpu.concatenate %146, %225 in 1 : vector<16x16xf32>, vector<16x16xf32> -> vector<16x32xf32>
    %309 = tpu.concatenate %178, %306 in 1 : vector<1x16xf32>, vector<1x16xf32> -> vector<1x32xf32>
    %cst_126 = arith.constant dense<0.000000e+00> : vector<16x32xf32>
    %310 = tpu.matmul %61, %307, %cst_126 {dimension_numbers = #tpu.dot_dimension_numbers<[1], [0], [0], [1], [0, 0, 1, 1], [], []>} : vector<16x8xf32>, vector<8x32xf32>, vector<16x32xf32> -> vector<16x32xf32>
    %cst_127 = arith.constant dense<0.000000e+00> : vector<16x32xf32>
    %311 = tpu.matmul %65, %307, %cst_127 {dimension_numbers = #tpu.dot_dimension_numbers<[1], [0], [0], [1], [0, 0, 1, 1], [], []>} : vector<16x8xf32>, vector<8x32xf32>, vector<16x32xf32> -> vector<16x32xf32>
    %312 = vector.shape_cast %309 : vector<1x32xf32> to vector<1x32xf32>
    %313 = vector.broadcast %312 : vector<1x32xf32> to vector<16x32xf32>
    %314 = tpu.concatenate %310, %311, %308, %313 in 1 : vector<16x32xf32>, vector<16x32xf32>, vector<16x32xf32>, vector<16x32xf32> -> vector<16x128xf32>
    %c3_128 = arith.constant 3 : index
    %c0_129 = arith.constant 0 : index
    %c0_130 = arith.constant 0 : index
    %315 = vector.load %arg3[%c3_128, %c0_129, %c0_130] : memref<9x128x32xf32, #tpu.memory_space<vmem>>, vector<1x128x32xf32>
    %316 = vector.shape_cast %315 : vector<1x128x32xf32> to vector<128x32xf32>
    %cst_131 = arith.constant dense<0.000000e+00> : vector<16x32xf32>
    %317 = tpu.matmul %314, %316, %cst_131 {dimension_numbers = #tpu.dot_dimension_numbers<[1], [0], [0], [1], [0, 0, 1, 1], [], []>} : vector<16x128xf32>, vector<128x32xf32>, vector<16x32xf32> -> vector<16x32xf32>
    %318 = vector.broadcast %20 : vector<1x32xf32> to vector<16x32xf32>
    %319 = arith.addf %317, %318 : vector<16x32xf32>
    %cst_132 = arith.constant 0.000000e+00 : f32
    %320 = vector.broadcast %cst_132 : f32 to vector<16x32xf32>
    %321 = arith.maximumf %319, %320 : vector<16x32xf32>
    %c3_133 = arith.constant 3 : index
    %c0_134 = arith.constant 0 : index
    %c0_135 = arith.constant 0 : index
    %322 = vector.load %arg4[%c3_133, %c0_134, %c0_135] : memref<9x32x16xf32, #tpu.memory_space<vmem>>, vector<1x32x16xf32>
    %323 = vector.shape_cast %322 : vector<1x32x16xf32> to vector<32x16xf32>
    %cst_136 = arith.constant dense<0.000000e+00> : vector<16x16xf32>
    %324 = tpu.matmul %321, %323, %cst_136 {dimension_numbers = #tpu.dot_dimension_numbers<[1], [0], [0], [1], [0, 0, 1, 1], [], []>} : vector<16x32xf32>, vector<32x16xf32>, vector<16x16xf32> -> vector<16x16xf32>
    %325 = vector.broadcast %21 : vector<1x16xf32> to vector<16x16xf32>
    %326 = arith.addf %324, %325 : vector<16x16xf32>
    %cst_137 = arith.constant 0.000000e+00 : f32
    %327 = vector.broadcast %cst_137 : f32 to vector<16x16xf32>
    %328 = arith.maximumf %326, %327 : vector<16x16xf32>
    %cst_138 = arith.constant dense<0.000000e+00> : vector<16xf32>
    %329 = vector.multi_reduction <add>, %328, %cst_138 [1] : vector<16x16xf32> to vector<16xf32>
    %330 = vector.shape_cast %329 : vector<16xf32> to vector<16x1xf32>
    %331 = arith.mulf %328, %328 : vector<16x16xf32>
    %cst_139 = arith.constant dense<0.000000e+00> : vector<16xf32>
    %332 = vector.multi_reduction <add>, %331, %cst_139 [1] : vector<16x16xf32> to vector<16xf32>
    %333 = vector.shape_cast %332 : vector<16xf32> to vector<16x1xf32>
    %cst_140 = arith.constant 6.250000e-02 : f32
    %334 = vector.broadcast %cst_140 : f32 to vector<16x1xf32>
    %335 = arith.mulf %330, %334 : vector<16x1xf32>
    %cst_141 = arith.constant 6.250000e-02 : f32
    %336 = vector.broadcast %cst_141 : f32 to vector<16x1xf32>
    %337 = arith.mulf %333, %336 : vector<16x1xf32>
    %338 = arith.mulf %335, %335 : vector<16x1xf32>
    %339 = arith.subf %337, %338 : vector<16x1xf32>
    %340 = vector.broadcast %335 : vector<16x1xf32> to vector<16x16xf32>
    %341 = arith.subf %328, %340 : vector<16x16xf32>
    %cst_142 = arith.constant 9.99999974E-6 : f32
    %342 = vector.broadcast %cst_142 : f32 to vector<16x1xf32>
    %343 = arith.addf %339, %342 : vector<16x1xf32>
    %344 = math.rsqrt %343 : vector<16x1xf32>
    %345 = vector.broadcast %344 : vector<16x1xf32> to vector<16x16xf32>
    %346 = arith.mulf %341, %345 : vector<16x16xf32>
    %347 = vector.broadcast %22 : vector<1x16xf32> to vector<16x16xf32>
    %348 = arith.mulf %346, %347 : vector<16x16xf32>
    %349 = vector.broadcast %23 : vector<1x16xf32> to vector<16x16xf32>
    %350 = arith.addf %348, %349 : vector<16x16xf32>
    %cst_143 = arith.constant dense<0.000000e+00> : vector<8x16xf32>
    %351 = tpu.matmul %71, %350, %cst_143 {dimension_numbers = #tpu.dot_dimension_numbers<[1], [0], [0], [1], [0, 0, 1, 1], [], []>} : vector<8x16xf32>, vector<16x16xf32>, vector<8x16xf32> -> vector<8x16xf32>
    %352 = vector.shape_cast %309 : vector<1x32xf32> to vector<1x32xf32>
    %353 = vector.broadcast %352 : vector<1x32xf32> to vector<8x32xf32>
    %354 = tpu.concatenate %307, %351, %353 in 1 : vector<8x32xf32>, vector<8x16xf32>, vector<8x32xf32> -> vector<8x80xf32>
    %c4_144 = arith.constant 4 : index
    %c0_145 = arith.constant 0 : index
    %c0_146 = arith.constant 0 : index
    %355 = vector.load %arg3[%c4_144, %c0_145, %c0_146] : memref<9x128x32xf32, #tpu.memory_space<vmem>>, vector<1x80x32xf32>
    %356 = vector.shape_cast %355 : vector<1x80x32xf32> to vector<80x32xf32>
    %cst_147 = arith.constant dense<0.000000e+00> : vector<8x32xf32>
    %357 = tpu.matmul %354, %356, %cst_147 {dimension_numbers = #tpu.dot_dimension_numbers<[1], [0], [0], [1], [0, 0, 1, 1], [], []>} : vector<8x80xf32>, vector<80x32xf32>, vector<8x32xf32> -> vector<8x32xf32>
    %358 = vector.broadcast %26 : vector<1x32xf32> to vector<8x32xf32>
    %359 = arith.addf %357, %358 : vector<8x32xf32>
    %cst_148 = arith.constant 0.000000e+00 : f32
    %360 = vector.broadcast %cst_148 : f32 to vector<8x32xf32>
    %361 = arith.maximumf %359, %360 : vector<8x32xf32>
    %c4_149 = arith.constant 4 : index
    %c0_150 = arith.constant 0 : index
    %c0_151 = arith.constant 0 : index
    %362 = vector.load %arg4[%c4_149, %c0_150, %c0_151] : memref<9x32x16xf32, #tpu.memory_space<vmem>>, vector<1x32x16xf32>
    %363 = vector.shape_cast %362 : vector<1x32x16xf32> to vector<32x16xf32>
    %cst_152 = arith.constant dense<0.000000e+00> : vector<8x16xf32>
    %364 = tpu.matmul %361, %363, %cst_152 {dimension_numbers = #tpu.dot_dimension_numbers<[1], [0], [0], [1], [0, 0, 1, 1], [], []>} : vector<8x32xf32>, vector<32x16xf32>, vector<8x16xf32> -> vector<8x16xf32>
    %365 = vector.broadcast %27 : vector<1x16xf32> to vector<8x16xf32>
    %366 = arith.addf %364, %365 : vector<8x16xf32>
    %cst_153 = arith.constant 0.000000e+00 : f32
    %367 = vector.broadcast %cst_153 : f32 to vector<8x16xf32>
    %368 = arith.maximumf %366, %367 : vector<8x16xf32>
    %cst_154 = arith.constant dense<0.000000e+00> : vector<8xf32>
    %369 = vector.multi_reduction <add>, %368, %cst_154 [1] : vector<8x16xf32> to vector<8xf32>
    %370 = vector.shape_cast %369 : vector<8xf32> to vector<8x1xf32>
    %371 = arith.mulf %368, %368 : vector<8x16xf32>
    %cst_155 = arith.constant dense<0.000000e+00> : vector<8xf32>
    %372 = vector.multi_reduction <add>, %371, %cst_155 [1] : vector<8x16xf32> to vector<8xf32>
    %373 = vector.shape_cast %372 : vector<8xf32> to vector<8x1xf32>
    %cst_156 = arith.constant 6.250000e-02 : f32
    %374 = vector.broadcast %cst_156 : f32 to vector<8x1xf32>
    %375 = arith.mulf %370, %374 : vector<8x1xf32>
    %cst_157 = arith.constant 6.250000e-02 : f32
    %376 = vector.broadcast %cst_157 : f32 to vector<8x1xf32>
    %377 = arith.mulf %373, %376 : vector<8x1xf32>
    %378 = arith.mulf %375, %375 : vector<8x1xf32>
    %379 = arith.subf %377, %378 : vector<8x1xf32>
    %380 = vector.broadcast %375 : vector<8x1xf32> to vector<8x16xf32>
    %381 = arith.subf %368, %380 : vector<8x16xf32>
    %cst_158 = arith.constant 9.99999974E-6 : f32
    %382 = vector.broadcast %cst_158 : f32 to vector<8x1xf32>
    %383 = arith.addf %379, %382 : vector<8x1xf32>
    %384 = math.rsqrt %383 : vector<8x1xf32>
    %385 = vector.broadcast %384 : vector<8x1xf32> to vector<8x16xf32>
    %386 = arith.mulf %381, %385 : vector<8x16xf32>
    %387 = vector.broadcast %28 : vector<1x16xf32> to vector<8x16xf32>
    %388 = arith.mulf %386, %387 : vector<8x16xf32>
    %389 = vector.broadcast %29 : vector<1x16xf32> to vector<8x16xf32>
    %390 = arith.addf %388, %389 : vector<8x16xf32>
    %cst_159 = arith.constant dense<0.000000e+00> : vector<16xf32>
    %391 = vector.multi_reduction <add>, %390, %cst_159 [0] : vector<8x16xf32> to vector<16xf32>
    %392 = vector.shape_cast %391 : vector<16xf32> to vector<1x16xf32>
    %cst_160 = arith.constant 8.000000e+00 : f32
    %393 = vector.broadcast %cst_160 : f32 to vector<1x16xf32>
    %394 = arith.divf %392, %393 : vector<1x16xf32>
    %cst_161 = arith.constant dense<0.000000e+00> : vector<16xf32>
    %395 = vector.multi_reduction <add>, %350, %cst_161 [0] : vector<16x16xf32> to vector<16xf32>
    %396 = vector.shape_cast %395 : vector<16xf32> to vector<1x16xf32>
    %cst_162 = arith.constant 1.600000e+01 : f32
    %397 = vector.broadcast %cst_162 : f32 to vector<1x16xf32>
    %398 = arith.divf %396, %397 : vector<1x16xf32>
    %399 = tpu.concatenate %309, %394, %398 in 1 : vector<1x32xf32>, vector<1x16xf32>, vector<1x16xf32> -> vector<1x64xf32>
    %c5_163 = arith.constant 5 : index
    %c0_164 = arith.constant 0 : index
    %c0_165 = arith.constant 0 : index
    %400 = vector.load %arg3[%c5_163, %c0_164, %c0_165] : memref<9x128x32xf32, #tpu.memory_space<vmem>>, vector<1x64x32xf32>
    %401 = vector.shape_cast %400 : vector<1x64x32xf32> to vector<64x32xf32>
    %cst_166 = arith.constant dense<0.000000e+00> : vector<1x32xf32>
    %402 = tpu.matmul %399, %401, %cst_166 {dimension_numbers = #tpu.dot_dimension_numbers<[1], [0], [0], [1], [0, 0, 1, 1], [], []>} : vector<1x64xf32>, vector<64x32xf32>, vector<1x32xf32> -> vector<1x32xf32>
    %403 = arith.addf %402, %32 : vector<1x32xf32>
    %cst_167 = arith.constant 0.000000e+00 : f32
    %404 = vector.broadcast %cst_167 : f32 to vector<1x32xf32>
    %405 = arith.maximumf %403, %404 : vector<1x32xf32>
    %c5_168 = arith.constant 5 : index
    %c0_169 = arith.constant 0 : index
    %c0_170 = arith.constant 0 : index
    %406 = vector.load %arg4[%c5_168, %c0_169, %c0_170] : memref<9x32x16xf32, #tpu.memory_space<vmem>>, vector<1x32x16xf32>
    %407 = vector.shape_cast %406 : vector<1x32x16xf32> to vector<32x16xf32>
    %cst_171 = arith.constant dense<0.000000e+00> : vector<1x16xf32>
    %408 = tpu.matmul %405, %407, %cst_171 {dimension_numbers = #tpu.dot_dimension_numbers<[1], [0], [0], [1], [0, 0, 1, 1], [], []>} : vector<1x32xf32>, vector<32x16xf32>, vector<1x16xf32> -> vector<1x16xf32>
    %409 = arith.addf %408, %33 : vector<1x16xf32>
    %cst_172 = arith.constant 0.000000e+00 : f32
    %410 = vector.broadcast %cst_172 : f32 to vector<1x16xf32>
    %411 = arith.maximumf %409, %410 : vector<1x16xf32>
    %cst_173 = arith.constant dense<0.000000e+00> : vector<1xf32>
    %412 = vector.multi_reduction <add>, %411, %cst_173 [1] : vector<1x16xf32> to vector<1xf32>
    %413 = vector.shape_cast %412 : vector<1xf32> to vector<1x1xf32>
    %414 = arith.mulf %411, %411 : vector<1x16xf32>
    %cst_174 = arith.constant dense<0.000000e+00> : vector<1xf32>
    %415 = vector.multi_reduction <add>, %414, %cst_174 [1] : vector<1x16xf32> to vector<1xf32>
    %416 = vector.shape_cast %415 : vector<1xf32> to vector<1x1xf32>
    %cst_175 = arith.constant 6.250000e-02 : f32
    %417 = vector.broadcast %cst_175 : f32 to vector<1x1xf32>
    %418 = arith.mulf %413, %417 : vector<1x1xf32>
    %cst_176 = arith.constant 6.250000e-02 : f32
    %419 = vector.broadcast %cst_176 : f32 to vector<1x1xf32>
    %420 = arith.mulf %416, %419 : vector<1x1xf32>
    %421 = arith.mulf %418, %418 : vector<1x1xf32>
    %422 = arith.subf %420, %421 : vector<1x1xf32>
    %423 = vector.broadcast %418 : vector<1x1xf32> to vector<1x16xf32>
    %424 = arith.subf %411, %423 : vector<1x16xf32>
    %cst_177 = arith.constant 9.99999974E-6 : f32
    %425 = vector.broadcast %cst_177 : f32 to vector<1x1xf32>
    %426 = arith.addf %422, %425 : vector<1x1xf32>
    %427 = math.rsqrt %426 : vector<1x1xf32>
    %428 = vector.broadcast %427 : vector<1x1xf32> to vector<1x16xf32>
    %429 = arith.mulf %424, %428 : vector<1x16xf32>
    %430 = arith.mulf %429, %34 : vector<1x16xf32>
    %431 = arith.addf %430, %35 : vector<1x16xf32>
    %c6_178 = arith.constant 6 : index
    %c0_179 = arith.constant 0 : index
    %c0_180 = arith.constant 0 : index
    %432 = vector.load %arg3[%c6_178, %c0_179, %c0_180] : memref<9x128x32xf32, #tpu.memory_space<vmem>>, vector<1x16x32xf32>
    %433 = vector.shape_cast %432 : vector<1x16x32xf32> to vector<16x32xf32>
    %cst_181 = arith.constant dense<0.000000e+00> : vector<8x32xf32>
    %434 = tpu.matmul %390, %433, %cst_181 {dimension_numbers = #tpu.dot_dimension_numbers<[1], [0], [0], [1], [0, 0, 1, 1], [], []>} : vector<8x16xf32>, vector<16x32xf32>, vector<8x32xf32> -> vector<8x32xf32>
    %435 = vector.broadcast %38 : vector<1x32xf32> to vector<8x32xf32>
    %436 = arith.addf %434, %435 : vector<8x32xf32>
    %cst_182 = arith.constant 0.000000e+00 : f32
    %437 = vector.broadcast %cst_182 : f32 to vector<8x32xf32>
    %438 = arith.maximumf %436, %437 : vector<8x32xf32>
    %c6_183 = arith.constant 6 : index
    %c0_184 = arith.constant 0 : index
    %c0_185 = arith.constant 0 : index
    %439 = vector.load %arg4[%c6_183, %c0_184, %c0_185] : memref<9x32x16xf32, #tpu.memory_space<vmem>>, vector<1x32x16xf32>
    %440 = vector.shape_cast %439 : vector<1x32x16xf32> to vector<32x16xf32>
    %cst_186 = arith.constant dense<0.000000e+00> : vector<8x16xf32>
    %441 = tpu.matmul %438, %440, %cst_186 {dimension_numbers = #tpu.dot_dimension_numbers<[1], [0], [0], [1], [0, 0, 1, 1], [], []>} : vector<8x32xf32>, vector<32x16xf32>, vector<8x16xf32> -> vector<8x16xf32>
    %442 = vector.broadcast %39 : vector<1x16xf32> to vector<8x16xf32>
    %443 = arith.addf %441, %442 : vector<8x16xf32>
    %cst_187 = arith.constant 0.000000e+00 : f32
    %444 = vector.broadcast %cst_187 : f32 to vector<8x16xf32>
    %445 = arith.maximumf %443, %444 : vector<8x16xf32>
    %cst_188 = arith.constant dense<0.000000e+00> : vector<8xf32>
    %446 = vector.multi_reduction <add>, %445, %cst_188 [1] : vector<8x16xf32> to vector<8xf32>
    %447 = vector.shape_cast %446 : vector<8xf32> to vector<8x1xf32>
    %448 = arith.mulf %445, %445 : vector<8x16xf32>
    %cst_189 = arith.constant dense<0.000000e+00> : vector<8xf32>
    %449 = vector.multi_reduction <add>, %448, %cst_189 [1] : vector<8x16xf32> to vector<8xf32>
    %450 = vector.shape_cast %449 : vector<8xf32> to vector<8x1xf32>
    %cst_190 = arith.constant 6.250000e-02 : f32
    %451 = vector.broadcast %cst_190 : f32 to vector<8x1xf32>
    %452 = arith.mulf %447, %451 : vector<8x1xf32>
    %cst_191 = arith.constant 6.250000e-02 : f32
    %453 = vector.broadcast %cst_191 : f32 to vector<8x1xf32>
    %454 = arith.mulf %450, %453 : vector<8x1xf32>
    %455 = arith.mulf %452, %452 : vector<8x1xf32>
    %456 = arith.subf %454, %455 : vector<8x1xf32>
    %457 = vector.broadcast %452 : vector<8x1xf32> to vector<8x16xf32>
    %458 = arith.subf %445, %457 : vector<8x16xf32>
    %cst_192 = arith.constant 9.99999974E-6 : f32
    %459 = vector.broadcast %cst_192 : f32 to vector<8x1xf32>
    %460 = arith.addf %456, %459 : vector<8x1xf32>
    %461 = math.rsqrt %460 : vector<8x1xf32>
    %462 = vector.broadcast %461 : vector<8x1xf32> to vector<8x16xf32>
    %463 = arith.mulf %458, %462 : vector<8x16xf32>
    %464 = vector.broadcast %40 : vector<1x16xf32> to vector<8x16xf32>
    %465 = arith.mulf %463, %464 : vector<8x16xf32>
    %466 = vector.broadcast %41 : vector<1x16xf32> to vector<8x16xf32>
    %467 = arith.addf %465, %466 : vector<8x16xf32>
    %c7_193 = arith.constant 7 : index
    %c0_194 = arith.constant 0 : index
    %c0_195 = arith.constant 0 : index
    %468 = vector.load %arg3[%c7_193, %c0_194, %c0_195] : memref<9x128x32xf32, #tpu.memory_space<vmem>>, vector<1x16x32xf32>
    %469 = vector.shape_cast %468 : vector<1x16x32xf32> to vector<16x32xf32>
    %cst_196 = arith.constant dense<0.000000e+00> : vector<16x32xf32>
    %470 = tpu.matmul %350, %469, %cst_196 {dimension_numbers = #tpu.dot_dimension_numbers<[1], [0], [0], [1], [0, 0, 1, 1], [], []>} : vector<16x16xf32>, vector<16x32xf32>, vector<16x32xf32> -> vector<16x32xf32>
    %471 = vector.broadcast %44 : vector<1x32xf32> to vector<16x32xf32>
    %472 = arith.addf %470, %471 : vector<16x32xf32>
    %cst_197 = arith.constant 0.000000e+00 : f32
    %473 = vector.broadcast %cst_197 : f32 to vector<16x32xf32>
    %474 = arith.maximumf %472, %473 : vector<16x32xf32>
    %c7_198 = arith.constant 7 : index
    %c0_199 = arith.constant 0 : index
    %c0_200 = arith.constant 0 : index
    %475 = vector.load %arg4[%c7_198, %c0_199, %c0_200] : memref<9x32x16xf32, #tpu.memory_space<vmem>>, vector<1x32x16xf32>
    %476 = vector.shape_cast %475 : vector<1x32x16xf32> to vector<32x16xf32>
    %cst_201 = arith.constant dense<0.000000e+00> : vector<16x16xf32>
    %477 = tpu.matmul %474, %476, %cst_201 {dimension_numbers = #tpu.dot_dimension_numbers<[1], [0], [0], [1], [0, 0, 1, 1], [], []>} : vector<16x32xf32>, vector<32x16xf32>, vector<16x16xf32> -> vector<16x16xf32>
    %478 = vector.broadcast %45 : vector<1x16xf32> to vector<16x16xf32>
    %479 = arith.addf %477, %478 : vector<16x16xf32>
    %cst_202 = arith.constant 0.000000e+00 : f32
    %480 = vector.broadcast %cst_202 : f32 to vector<16x16xf32>
    %481 = arith.maximumf %479, %480 : vector<16x16xf32>
    %cst_203 = arith.constant dense<0.000000e+00> : vector<16xf32>
    %482 = vector.multi_reduction <add>, %481, %cst_203 [1] : vector<16x16xf32> to vector<16xf32>
    %483 = vector.shape_cast %482 : vector<16xf32> to vector<16x1xf32>
    %484 = arith.mulf %481, %481 : vector<16x16xf32>
    %cst_204 = arith.constant dense<0.000000e+00> : vector<16xf32>
    %485 = vector.multi_reduction <add>, %484, %cst_204 [1] : vector<16x16xf32> to vector<16xf32>
    %486 = vector.shape_cast %485 : vector<16xf32> to vector<16x1xf32>
    %cst_205 = arith.constant 6.250000e-02 : f32
    %487 = vector.broadcast %cst_205 : f32 to vector<16x1xf32>
    %488 = arith.mulf %483, %487 : vector<16x1xf32>
    %cst_206 = arith.constant 6.250000e-02 : f32
    %489 = vector.broadcast %cst_206 : f32 to vector<16x1xf32>
    %490 = arith.mulf %486, %489 : vector<16x1xf32>
    %491 = arith.mulf %488, %488 : vector<16x1xf32>
    %492 = arith.subf %490, %491 : vector<16x1xf32>
    %493 = vector.broadcast %488 : vector<16x1xf32> to vector<16x16xf32>
    %494 = arith.subf %481, %493 : vector<16x16xf32>
    %cst_207 = arith.constant 9.99999974E-6 : f32
    %495 = vector.broadcast %cst_207 : f32 to vector<16x1xf32>
    %496 = arith.addf %492, %495 : vector<16x1xf32>
    %497 = math.rsqrt %496 : vector<16x1xf32>
    %498 = vector.broadcast %497 : vector<16x1xf32> to vector<16x16xf32>
    %499 = arith.mulf %494, %498 : vector<16x16xf32>
    %500 = vector.broadcast %46 : vector<1x16xf32> to vector<16x16xf32>
    %501 = arith.mulf %499, %500 : vector<16x16xf32>
    %502 = vector.broadcast %47 : vector<1x16xf32> to vector<16x16xf32>
    %503 = arith.addf %501, %502 : vector<16x16xf32>
    %c8_208 = arith.constant 8 : index
    %c0_209 = arith.constant 0 : index
    %c0_210 = arith.constant 0 : index
    %504 = vector.load %arg3[%c8_208, %c0_209, %c0_210] : memref<9x128x32xf32, #tpu.memory_space<vmem>>, vector<1x16x32xf32>
    %505 = vector.shape_cast %504 : vector<1x16x32xf32> to vector<16x32xf32>
    %cst_211 = arith.constant dense<0.000000e+00> : vector<1x32xf32>
    %506 = tpu.matmul %431, %505, %cst_211 {dimension_numbers = #tpu.dot_dimension_numbers<[1], [0], [0], [1], [0, 0, 1, 1], [], []>} : vector<1x16xf32>, vector<16x32xf32>, vector<1x32xf32> -> vector<1x32xf32>
    %507 = arith.addf %506, %50 : vector<1x32xf32>
    %cst_212 = arith.constant 0.000000e+00 : f32
    %508 = vector.broadcast %cst_212 : f32 to vector<1x32xf32>
    %509 = arith.maximumf %507, %508 : vector<1x32xf32>
    %c8_213 = arith.constant 8 : index
    %c0_214 = arith.constant 0 : index
    %c0_215 = arith.constant 0 : index
    %510 = vector.load %arg4[%c8_213, %c0_214, %c0_215] : memref<9x32x16xf32, #tpu.memory_space<vmem>>, vector<1x32x16xf32>
    %511 = vector.shape_cast %510 : vector<1x32x16xf32> to vector<32x16xf32>
    %cst_216 = arith.constant dense<0.000000e+00> : vector<1x16xf32>
    %512 = tpu.matmul %509, %511, %cst_216 {dimension_numbers = #tpu.dot_dimension_numbers<[1], [0], [0], [1], [0, 0, 1, 1], [], []>} : vector<1x32xf32>, vector<32x16xf32>, vector<1x16xf32> -> vector<1x16xf32>
    %513 = arith.addf %512, %51 : vector<1x16xf32>
    %cst_217 = arith.constant 0.000000e+00 : f32
    %514 = vector.broadcast %cst_217 : f32 to vector<1x16xf32>
    %515 = arith.maximumf %513, %514 : vector<1x16xf32>
    %cst_218 = arith.constant dense<0.000000e+00> : vector<1xf32>
    %516 = vector.multi_reduction <add>, %515, %cst_218 [1] : vector<1x16xf32> to vector<1xf32>
    %517 = vector.shape_cast %516 : vector<1xf32> to vector<1x1xf32>
    %518 = arith.mulf %515, %515 : vector<1x16xf32>
    %cst_219 = arith.constant dense<0.000000e+00> : vector<1xf32>
    %519 = vector.multi_reduction <add>, %518, %cst_219 [1] : vector<1x16xf32> to vector<1xf32>
    %520 = vector.shape_cast %519 : vector<1xf32> to vector<1x1xf32>
    %cst_220 = arith.constant 6.250000e-02 : f32
    %521 = vector.broadcast %cst_220 : f32 to vector<1x1xf32>
    %522 = arith.mulf %517, %521 : vector<1x1xf32>
    %cst_221 = arith.constant 6.250000e-02 : f32
    %523 = vector.broadcast %cst_221 : f32 to vector<1x1xf32>
    %524 = arith.mulf %520, %523 : vector<1x1xf32>
    %525 = arith.mulf %522, %522 : vector<1x1xf32>
    %526 = arith.subf %524, %525 : vector<1x1xf32>
    %527 = vector.broadcast %522 : vector<1x1xf32> to vector<1x16xf32>
    %528 = arith.subf %515, %527 : vector<1x16xf32>
    %cst_222 = arith.constant 9.99999974E-6 : f32
    %529 = vector.broadcast %cst_222 : f32 to vector<1x1xf32>
    %530 = arith.addf %526, %529 : vector<1x1xf32>
    %531 = math.rsqrt %530 : vector<1x1xf32>
    %532 = vector.broadcast %531 : vector<1x1xf32> to vector<1x16xf32>
    %533 = arith.mulf %528, %532 : vector<1x16xf32>
    %534 = arith.mulf %533, %52 : vector<1x16xf32>
    %535 = arith.addf %534, %53 : vector<1x16xf32>
    %cst_223 = arith.constant 0.000000e+00 : f32
    %536 = vector.broadcast %cst_223 : f32 to vector<32x128xf32>
    %c0_224 = arith.constant 0 : index
    %c0_225 = arith.constant 0 : index
    %537 = vector.load %arg7[%c0_224, %c0_225] : memref<32x128xf32, #tpu.memory_space<vmem>>, vector<32x128xf32>
    tpu.vector_store %arg7[%c0_224, %c0_225], %536 {strides = array<i32>} : memref<32x128xf32, #tpu.memory_space<vmem>>, vector<32x128xf32>,
    %c0_226 = arith.constant 0 : index
    %c0_227 = arith.constant 0 : index
    %c0_228 = arith.constant 0 : index
    %538 = vector.load %arg6[%c0_226, %c0_227, %c0_228] : memref<3x17x128xf32, #tpu.memory_space<vmem>>, vector<1x16x128xf32>
    %539 = vector.shape_cast %538 : vector<1x16x128xf32> to vector<16x128xf32>
    %c0_229 = arith.constant 0 : index
    %c16 = arith.constant 16 : index
    %c0_230 = arith.constant 0 : index
    %540 = vector.load %arg6[%c0_229, %c16, %c0_230] : memref<3x17x128xf32, #tpu.memory_space<vmem>>, vector<1x1x128xf32>
    %541 = vector.shape_cast %540 : vector<1x1x128xf32> to vector<1x128xf32>
    %cst_231 = arith.constant dense<0.000000e+00> : vector<8x128xf32>
    %542 = tpu.matmul %467, %539, %cst_231 {dimension_numbers = #tpu.dot_dimension_numbers<[1], [0], [0], [1], [0, 0, 1, 1], [], []>} : vector<8x16xf32>, vector<16x128xf32>, vector<8x128xf32> -> vector<8x128xf32>
    %543 = vector.broadcast %541 : vector<1x128xf32> to vector<8x128xf32>
    %544 = arith.addf %542, %543 : vector<8x128xf32>
    %c0_232 = arith.constant 0 : index
    %c0_233 = arith.constant 0 : index
    %545 = vector.load %arg7[%c0_232, %c0_233] : memref<32x128xf32, #tpu.memory_space<vmem>>, vector<8x128xf32>
    tpu.vector_store %arg7[%c0_232, %c0_233], %544 {strides = array<i32>} : memref<32x128xf32, #tpu.memory_space<vmem>>, vector<8x128xf32>,
    %c1_234 = arith.constant 1 : index
    %c0_235 = arith.constant 0 : index
    %c0_236 = arith.constant 0 : index
    %546 = vector.load %arg6[%c1_234, %c0_235, %c0_236] : memref<3x17x128xf32, #tpu.memory_space<vmem>>, vector<1x16x128xf32>
    %547 = vector.shape_cast %546 : vector<1x16x128xf32> to vector<16x128xf32>
    %c1_237 = arith.constant 1 : index
    %c16_238 = arith.constant 16 : index
    %c0_239 = arith.constant 0 : index
    %548 = vector.load %arg6[%c1_237, %c16_238, %c0_239] : memref<3x17x128xf32, #tpu.memory_space<vmem>>, vector<1x1x128xf32>
    %549 = vector.shape_cast %548 : vector<1x1x128xf32> to vector<1x128xf32>
    %cst_240 = arith.constant dense<0.000000e+00> : vector<16x128xf32>
    %550 = tpu.matmul %503, %547, %cst_240 {dimension_numbers = #tpu.dot_dimension_numbers<[1], [0], [0], [1], [0, 0, 1, 1], [], []>} : vector<16x16xf32>, vector<16x128xf32>, vector<16x128xf32> -> vector<16x128xf32>
    %551 = vector.broadcast %549 : vector<1x128xf32> to vector<16x128xf32>
    %552 = arith.addf %550, %551 : vector<16x128xf32>
    %c8_241 = arith.constant 8 : index
    %c0_242 = arith.constant 0 : index
    %553 = vector.load %arg7[%c8_241, %c0_242] : memref<32x128xf32, #tpu.memory_space<vmem>>, vector<16x128xf32>
    tpu.vector_store %arg7[%c8_241, %c0_242], %552 {strides = array<i32>} : memref<32x128xf32, #tpu.memory_space<vmem>>, vector<16x128xf32>,
    %c2_243 = arith.constant 2 : index
    %c0_244 = arith.constant 0 : index
    %c0_245 = arith.constant 0 : index
    %554 = vector.load %arg6[%c2_243, %c0_244, %c0_245] : memref<3x17x128xf32, #tpu.memory_space<vmem>>, vector<1x16x128xf32>
    %555 = vector.shape_cast %554 : vector<1x16x128xf32> to vector<16x128xf32>
    %c2_246 = arith.constant 2 : index
    %c16_247 = arith.constant 16 : index
    %c0_248 = arith.constant 0 : index
    %556 = vector.load %arg6[%c2_246, %c16_247, %c0_248] : memref<3x17x128xf32, #tpu.memory_space<vmem>>, vector<1x1x128xf32>
    %557 = vector.shape_cast %556 : vector<1x1x128xf32> to vector<1x128xf32>
    %cst_249 = arith.constant dense<0.000000e+00> : vector<1x128xf32>
    %558 = tpu.matmul %535, %555, %cst_249 {dimension_numbers = #tpu.dot_dimension_numbers<[1], [0], [0], [1], [0, 0, 1, 1], [], []>} : vector<1x16xf32>, vector<16x128xf32>, vector<1x128xf32> -> vector<1x128xf32>
    %559 = arith.addf %558, %557 : vector<1x128xf32>
    %c24_250 = arith.constant 24 : index
    %c0_251 = arith.constant 0 : index
    %560 = vector.load %arg7[%c24_250, %c0_251] : memref<32x128xf32, #tpu.memory_space<vmem>>, vector<1x128xf32>
    tpu.vector_store %arg7[%c24_250, %c0_251], %559 {strides = array<i32>} : memref<32x128xf32, #tpu.memory_space<vmem>>, vector<1x128xf32>,
    return
  }
}

</mosaic_0001>

<llo_original>
// kernel: encoder_core_decoder_forward.1
$region0: #{encoder_core_decoder_forward.1}
  #allocation0 [shape = 'u32[]', space=smem, size = 0x4, offset = 0x4, fixed_abs, tag = 'smem constant byte address 0x4 - core index']
  #allocation1 [shape = 'u32[144,128]{1,0:T(1,128)}', space=vmem, size = 0x12000, scoped, tag = 'internal scratch']
  %s0 = inlined_call_operand.vmem [shape: f32[32,128], index: 0, kind: input, shape index: {}]
  %s1 = inlined_call_operand.vmem [shape: s32[2,16], index: 1, kind: input, shape index: {}]
  %s2 = inlined_call_operand.vmem [shape: s32[16,2], index: 2, kind: input, shape index: {}]
  %s3 = inlined_call_operand.vmem [shape: f32[9,128,32], index: 3, kind: input, shape index: {}]
  %s4 = inlined_call_operand.vmem [shape: f32[9,32,16], index: 4, kind: input, shape index: {}]
  %s5 = inlined_call_operand.vmem [shape: f32[9,4,128], index: 5, kind: input, shape index: {}]
  %s6 = inlined_call_operand.vmem [shape: f32[3,17,128], index: 6, kind: input, shape index: {}]
  %s7 = inlined_call_operand.vmem [shape: f32[32,128], index: 7, kind: output, shape index: {}]
  %s8 = sld [smem:[#allocation0]]
  $region38: #{encoder_core_decoder_forward.1} parent=0
    _
  %s10 = ssub.s32 1, %s8
  %s11 = scalar_select 0, %s10, %s8
  // Predicated region
  $region2: #{encoder_core_decoder_forward.1} parent=0 // pred_check
    _
  $region3: #{encoder_core_decoder_forward.1} parent=0 // pred_check_branch
    %13 = sbr.rel (0) target = $region5
  $region4: #{encoder_core_decoder_forward.1} parent=0 // pred_region
    _
  $region5: #{encoder_core_decoder_forward.1} parent=0 // pred_fallthru
    _
  // Predicated region
  $region6: #{encoder_core_decoder_forward.1} parent=0 // pred_check
    _
  $region7: #{encoder_core_decoder_forward.1} parent=0 // pred_check_branch
    %15 = sbr.rel (0) target = $region9
  $region8: #{encoder_core_decoder_forward.1} parent=0 // pred_region
    _
  $region9: #{encoder_core_decoder_forward.1} parent=0 // pred_fallthru
    _
  // Predicated region
  $region10: #{encoder_core_decoder_forward.1} parent=0 // pred_check
    _
  $region11: #{encoder_core_decoder_forward.1} parent=0 // pred_check_branch
    %17 = sbr.rel (0) target = $region13
  $region12: #{encoder_core_decoder_forward.1} parent=0 // pred_region
    _
  $region13: #{encoder_core_decoder_forward.1} parent=0 // pred_fallthru
    _
  // Predicated region
  $region14: #{encoder_core_decoder_forward.1} parent=0 // pred_check
    _
  $region15: #{encoder_core_decoder_forward.1} parent=0 // pred_check_branch
    %19 = sbr.rel (0) target = $region17
  $region16: #{encoder_core_decoder_forward.1} parent=0 // pred_region
    _
  $region17: #{encoder_core_decoder_forward.1} parent=0 // pred_fallthru
    _
  // Predicated region
  $region18: #{encoder_core_decoder_forward.1} parent=0 // pred_check
    _
  $region19: #{encoder_core_decoder_forward.1} parent=0 // pred_check_branch
    %21 = sbr.rel (0) target = $region21
  $region20: #{encoder_core_decoder_forward.1} parent=0 // pred_region
    _
  $region21: #{encoder_core_decoder_forward.1} parent=0 // pred_fallthru
    _
  // Predicated region
  $region22: #{encoder_core_decoder_forward.1} parent=0 // pred_check
    _
  $region23: #{encoder_core_decoder_forward.1} parent=0 // pred_check_branch
    %23 = sbr.rel (0) target = $region25
  $region24: #{encoder_core_decoder_forward.1} parent=0 // pred_region
    _
  $region25: #{encoder_core_decoder_forward.1} parent=0 // pred_fallthru
    _
  // Predicated region
  $region26: #{encoder_core_decoder_forward.1} parent=0 // pred_check
    _
  $region27: #{encoder_core_decoder_forward.1} parent=0 // pred_check_branch
    %25 = sbr.rel (0) target = $region29
  $region28: #{encoder_core_decoder_forward.1} parent=0 // pred_region
    _
  $region29: #{encoder_core_decoder_forward.1} parent=0 // pred_fallthru
    _
  %v26 = vld [vmem:[%s5] sm:$0xf]
  %s27 = scalar_lea.vmem %s5, 4
  %v28 = vld [vmem:[%s27] sm:$0xf]
  %s29 = scalar_lea.vmem %s5, 8
  %v30 = vld [vmem:[%s29] sm:$0xf]
  %s31 = scalar_lea.vmem %s5, 12
  %v32 = vld [vmem:[%s31] sm:$0xf]
  %s33 = scalar_lea.vmem %s5, 16
  %v34 = vld [vmem:[%s33] sm:$0xf]
  %s35 = scalar_lea.vmem %s5, 20
  %v36 = vld [vmem:[%s35] sm:$0xf]
  %s37 = scalar_lea.vmem %s5, 24
  %v38 = vld [vmem:[%s37] sm:$0xf]
  %s39 = scalar_lea.vmem %s5, 28
  %v40 = vld [vmem:[%s39] sm:$0xf]
  %s41 = scalar_lea.vmem %s5, 32
  %v42 = vld [vmem:[%s41] sm:$0xf]
  %v43 = vld [vmem:[%s2] sm:$0xff]
  %v44 = vld [vmem:[%s2 + $0x8] sm:$0xff]
  %v45 = vlaneseq
  %v46 = vand.u32 %v45, 127
  %47 = vset.pattern.permute.xlu0 0
  %48 = vperm.xlu0 %47, %v43
  %v49 = vpop.permute.xlu0 %48
  %50 = vset.pattern.permute.xlu0 0
  %51 = vperm.xlu0 %50, %v44
  %v52 = vpop.permute.xlu0 %51
  %vm53 = vcmp.eq.s32.totalorder %v49, %v46
  %vm54 = vcmp.eq.s32.totalorder %v52, %v46
  %v55 = vsel %vm53, 1, 0
  %v56 = vsel %vm54, 1, 0
  %v57 = vcvt.s32.f32 %v55
  %v58 = vcvt.s32.f32 %v56
  %59 = vset.pattern.permute.xlu0 1
  %60 = vperm.xlu0 %59, %v43
  %v61 = vpop.permute.xlu0 %60
  %62 = vset.pattern.permute.xlu0 1
  %63 = vperm.xlu0 %62, %v44
  %v64 = vpop.permute.xlu0 %63
  %vm65 = vcmp.eq.s32.totalorder %v61, %v46
  %vm66 = vcmp.eq.s32.totalorder %v64, %v46
  %v67 = vsel %vm65, 1, 0
  %v68 = vsel %vm66, 1, 0
  %v69 = vcvt.s32.f32 %v67
  %v70 = vcvt.s32.f32 %v68
  %v71 = vld [vmem:[%s1] sm:$0x1]
  %v72 = vlaneseq
  %v73 = vshrl.u32 %v72, 7
  %v74 = vlaneseq
  %v75 = vshrl.u32 %v74, 7
  %v76 = vsub.s32 0, %v75
  %v77 = vrot.slane %v71, %v76
  %vm78 = vcmp.eq.s32.totalorder %v77, %v73
  %v79 = vsel %vm78, 1, 0
  %v80 = vcvt.s32.f32 %v79
  %v81 = vld [vmem:[%s0] sm:$0xff]
  %v82 = vld [vmem:[%s0 + $0x8] sm:$0xff]
  %v83 = vld [vmem:[%s0 + $0x10] sm:$0xff]
  %v84 = vld [vmem:[%s0 + $0x18] sm:$0x1]
  %v85 = vld [vmem:[%s3] sm:$0xff]
  %v86 = vld [vmem:[%s3 + $0x8] sm:$0xff]
  %v87 = vld [vmem:[%s3 + $0x10] sm:$0xff]
  %v88 = vld [vmem:[%s3 + $0x18] sm:$0xff]
  %v89 = vld [vmem:[%s3 + $0x20] sm:$0xff]
  %v90 = vld [vmem:[%s3 + $0x28] sm:$0xff]
  %v91 = vld [vmem:[%s3 + $0x30] sm:$0xff]
  %v92 = vld [vmem:[%s3 + $0x38] sm:$0xff]
  %v93 = vld [vmem:[%s3 + $0x40] sm:$0xff]
  %v94 = vld [vmem:[%s3 + $0x48] sm:$0xff]
  %v95 = vld [vmem:[%s3 + $0x50] sm:$0xff]
  %v96 = vld [vmem:[%s3 + $0x58] sm:$0xff]
  %v97 = vld [vmem:[%s3 + $0x60] sm:$0xff]
  %v98 = vld [vmem:[%s3 + $0x68] sm:$0xff]
  %v99 = vld [vmem:[%s3 + $0x70] sm:$0xff]
  %v100 = vld [vmem:[%s3 + $0x78] sm:$0xff]
  %v101 = vlaneseq
  %v102 = vshrl.u32 %v101, 7
  %v103 = vsub.s32 0, %v102
  %v104 = vrot.slane %v26, %v103
  %105 = vmatprep.subr.mxu0 0.0
  %106 = vmatpush1.msra.mxu0 %v85
  %107 = vmatprep.subr.mxu0 0.0
  %108 = vmatpush1.msra.mxu0 %v86
  %109 = vmatprep.subr.mxu0 0.0
  %110 = vmatpush1.msra.mxu0 %v87
  %111 = vmatprep.subr.mxu0 0.0
  %112 = vmatpush1.msra.mxu0 %v88
  %113 = vmatprep.subr.mxu0 0.0
  %114 = vmatpush1.msra.mxu0 %v89
  %115 = vmatprep.subr.mxu0 0.0
  %116 = vmatpush1.msra.mxu0 %v90
  %117 = vmatprep.subr.mxu0 0.0
  %118 = vmatpush1.msra.mxu0 %v91
  %119 = vmatprep.subr.mxu0 0.0
  %120 = vmatpush1.msra.mxu0 %v92
  %121 = vmatprep.subr.mxu0 0.0
  %122 = vmatpush1.msra.mxu0 %v93
  %123 = vmatprep.subr.mxu0 0.0
  %124 = vmatpush1.msra.mxu0 %v94
  %125 = vmatprep.subr.mxu0 0.0
  %126 = vmatpush1.msra.mxu0 %v95
  %127 = vmatprep.subr.mxu0 0.0
  %128 = vmatpush1.msra.mxu0 %v96
  %129 = vmatprep.subr.mxu0 0.0
  %130 = vmatpush1.msra.mxu0 %v97
  %131 = vmatprep.subr.mxu0 0.0
  %132 = vmatpush1.msra.mxu0 %v98
  %133 = vmatprep.subr.mxu0 0.0
  %134 = vmatpush1.msra.mxu0 %v99
  %135 = vmatprep.subr.mxu0 0.0
  %136 = vmatpush1.msra.mxu0 %v100
  %137 = vmatprep.subr.mxu0 0.0
  %138 = vmatpush1.msra.mxu0 0.0
  %139 = vmatprep.subr.mxu0 0.0
  %140 = vmatpush1.msra.mxu0 0.0
  %141 = vmatprep.subr.mxu0 0.0
  %142 = vmatpush1.msra.mxu0 0.0
  %143 = vmatprep.subr.mxu0 0.0
  %144 = vmatpush1.msra.mxu0 0.0
  %145 = vmatprep.subr.mxu0 0.0
  %146 = vmatpush1.msra.mxu0 0.0
  %147 = vmatprep.subr.mxu0 0.0
  %148 = vmatpush1.msra.mxu0 0.0
  %149 = vmatprep.subr.mxu0 0.0
  %150 = vmatpush1.msra.mxu0 0.0
  %151 = vmatprep.subr.mxu0 0.0
  %152 = vmatpush1.msra.mxu0 0.0
  %153 = vmatprep.subr.mxu0 0.0
  %154 = vmatpush1.msra.mxu0 0.0
  %155 = vmatprep.subr.mxu0 0.0
  %156 = vmatpush1.msra.mxu0 0.0
  %157 = vmatprep.subr.mxu0 0.0
  %158 = vmatpush1.msra.mxu0 0.0
  %159 = vmatprep.subr.mxu0 0.0
  %160 = vmatpush1.msra.mxu0 0.0
  %161 = vmatprep.subr.mxu0 0.0
  %162 = vmatpush1.msra.mxu0 0.0
  %163 = vmatprep.subr.mxu0 0.0
  %164 = vmatpush1.msra.mxu0 0.0
  %165 = vmatprep.subr.mxu0 0.0
  %166 = vmatpush1.msra.mxu0 0.0
  %167 = vmatprep.subr.mxu0 0.0
  %168 = vmatpush1.msra.mxu0 0.0
  %169 = vmatprep.mubr.f32.mxu0 0.0
  %170 = vmatmul.mubr.f32.gmra.mrb[0].mxu0 %v81
  %v171 = vpop.f32.mrb[0].mxu0
  %v172 = vadd.f32 %v104, %v171
  %v173 = vpop.f32.mrb[0].mxu0
  %174 = vdwg.mxu0
  %v175 = vmax.f32 %v172, 0.0
  %v176 = vld [vmem:[%s4] sm:$0xff]
  %v177 = vld [vmem:[%s4 + $0x8] sm:$0xff]
  %v178 = vld [vmem:[%s4 + $0x10] sm:$0xff]
  %v179 = vld [vmem:[%s4 + $0x18] sm:$0xff]
  %v180 = vlaneseq
  %v181 = vshrl.u32 %v180, 7
  %v182 = vsub.s32 1, %v181
  %v183 = vrot.slane %v26, %v182
  %vm184 = vcmask 261120
  %v186 = vsel %vm184, %v175, 0
  %188 = vmatprep.subr.mxu0 0.0
  %189 = vmatpush1.msra.mxu0 %v176
  %190 = vmatprep.subr.mxu0 0.0
  %191 = vmatpush1.msra.mxu0 %v177
  %192 = vmatprep.subr.mxu0 0.0
  %193 = vmatpush1.msra.mxu0 %v178
  %194 = vmatprep.subr.mxu0 0.0
  %195 = vmatpush1.msra.mxu0 %v179
  %196 = vmatprep.subr.mxu0 0.0
  %197 = vmatpush1.msra.mxu0 0.0
  %198 = vmatprep.subr.mxu0 0.0
  %199 = vmatpush1.msra.mxu0 0.0
  %200 = vmatprep.subr.mxu0 0.0
  %201 = vmatpush1.msra.mxu0 0.0
  %202 = vmatprep.subr.mxu0 0.0
  %203 = vmatpush1.msra.mxu0 0.0
  %204 = vmatprep.subr.mxu0 0.0
  %205 = vmatpush1.msra.mxu0 0.0
  %206 = vmatprep.subr.mxu0 0.0
  %207 = vmatpush1.msra.mxu0 0.0
  %208 = vmatprep.subr.mxu0 0.0
  %209 = vmatpush1.msra.mxu0 0.0
  %210 = vmatprep.subr.mxu0 0.0
  %211 = vmatpush1.msra.mxu0 0.0
  %212 = vmatprep.subr.mxu0 0.0
  %213 = vmatpush1.msra.mxu0 0.0
  %214 = vmatprep.subr.mxu0 0.0
  %215 = vmatpush1.msra.mxu0 0.0
  %216 = vmatprep.subr.mxu0 0.0
  %217 = vmatpush1.msra.mxu0 0.0
  %218 = vmatprep.subr.mxu0 0.0
  %219 = vmatpush1.msra.mxu0 0.0
  %220 = vmatprep.subr.mxu0 0.0
  %221 = vmatpush1.msra.mxu0 0.0
  %222 = vmatprep.subr.mxu0 0.0
  %223 = vmatpush1.msra.mxu0 0.0
  %224 = vmatprep.subr.mxu0 0.0
  %225 = vmatpush1.msra.mxu0 0.0
  %226 = vmatprep.subr.mxu0 0.0
  %227 = vmatpush1.msra.mxu0 0.0
  %228 = vmatprep.subr.mxu0 0.0
  %229 = vmatpush1.msra.mxu0 0.0
  %230 = vmatprep.subr.mxu0 0.0
  %231 = vmatpush1.msra.mxu0 0.0
  %232 = vmatprep.subr.mxu0 0.0
  %233 = vmatpush1.msra.mxu0 0.0
  %234 = vmatprep.subr.mxu0 0.0
  %235 = vmatpush1.msra.mxu0 0.0
  %236 = vmatprep.subr.mxu0 0.0
  %237 = vmatpush1.msra.mxu0 0.0
  %238 = vmatprep.subr.mxu0 0.0
  %239 = vmatpush1.msra.mxu0 0.0
  %240 = vmatprep.subr.mxu0 0.0
  %241 = vmatpush1.msra.mxu0 0.0
  %242 = vmatprep.subr.mxu0 0.0
  %243 = vmatpush1.msra.mxu0 0.0
  %244 = vmatprep.subr.mxu0 0.0
  %245 = vmatpush1.msra.mxu0 0.0
  %246 = vmatprep.subr.mxu0 0.0
  %247 = vmatpush1.msra.mxu0 0.0
  %248 = vmatprep.subr.mxu0 0.0
  %249 = vmatpush1.msra.mxu0 0.0
  %250 = vmatprep.subr.mxu0 0.0
  %251 = vmatpush1.msra.mxu0 0.0
  %252 = vmatprep.mubr.f32.mxu0 0.0
  %253 = vmatmul.mubr.f32.gmra.mrb[0].mxu0 %v186
  %v254 = vpop.f32.mrb[0].mxu0
  %v255 = vadd.f32 %v183, %v254
  %v256 = vpop.f32.mrb[0].mxu0
  %257 = vdwg.mxu0
  %v258 = vmax.f32 %v255, 0.0
  %vm259 = vcmask 130048
  %v260 = vsel %vm259, %v258, 0.0
  %261 = vadd.xlane.f32.xlu0 %v260
  %v262 = vpop.xlane.xlu0 %261
  %v263 = vmul.f32 %v258, %v258
  %v264 = vsel %vm259, %v263, 0.0
  %265 = vadd.xlane.f32.xlu0 %v264
  %v266 = vpop.xlane.xlu0 %265
  %v267 = vmul.f32 %v262, 0.0625
  %v268 = vmul.f32 %v266, 0.0625
  %v269 = vmul.f32 %v267, %v267
  %v270 = vsub.f32 %v268, %v269
  %v271 = vsub.f32 %v258, %v267
  %v272 = vadd.f32 %v270, 1e-05
  %v273 = vrsqrt.pop %v272
  %v274 = vmul.f32 %v271, %v273
  %v275 = vlaneseq
  %v276 = vshrl.u32 %v275, 7
  %v277 = vsub.s32 2, %v276
  %v278 = vrot.slane %v26, %v277
  %v279 = vmul.f32 %v274, %v278
  %v280 = vlaneseq
  %v281 = vshrl.u32 %v280, 7
  %v282 = vsub.s32 3, %v281
  %v283 = vrot.slane %v26, %v282
  %v284 = vadd.f32 %v279, %v283
  %s285 = scalar_lea.vmem %s3, 128
  %v286 = vld [vmem:[%s285] sm:$0xff]
  %v287 = vld [vmem:[%s285 + $0x8] sm:$0xff]
  %v288 = vld [vmem:[%s285 + $0x10] sm:$0xff]
  %v289 = vld [vmem:[%s285 + $0x18] sm:$0xff]
  %v290 = vld [vmem:[%s285 + $0x20] sm:$0xff]
  %v291 = vld [vmem:[%s285 + $0x28] sm:$0xff]
  %v292 = vld [vmem:[%s285 + $0x30] sm:$0xff]
  %v293 = vld [vmem:[%s285 + $0x38] sm:$0xff]
  %v294 = vld [vmem:[%s285 + $0x40] sm:$0xff]
  %v295 = vld [vmem:[%s285 + $0x48] sm:$0xff]
  %v296 = vld [vmem:[%s285 + $0x50] sm:$0xff]
  %v297 = vld [vmem:[%s285 + $0x58] sm:$0xff]
  %v298 = vld [vmem:[%s285 + $0x60] sm:$0xff]
  %v299 = vld [vmem:[%s285 + $0x68] sm:$0xff]
  %v300 = vld [vmem:[%s285 + $0x70] sm:$0xff]
  %v301 = vld [vmem:[%s285 + $0x78] sm:$0xff]
  %v302 = vlaneseq
  %v303 = vshrl.u32 %v302, 7
  %v304 = vsub.s32 0, %v303
  %v305 = vrot.slane %v28, %v304
  %306 = vmatprep.subr.mxu0 0.0
  %307 = vmatpush1.msra.mxu0 %v286
  %308 = vmatprep.subr.mxu0 0.0
  %309 = vmatpush1.msra.mxu0 %v287
  %310 = vmatprep.subr.mxu0 0.0
  %311 = vmatpush1.msra.mxu0 %v288
  %312 = vmatprep.subr.mxu0 0.0
  %313 = vmatpush1.msra.mxu0 %v289
  %314 = vmatprep.subr.mxu0 0.0
  %315 = vmatpush1.msra.mxu0 %v290
  %316 = vmatprep.subr.mxu0 0.0
  %317 = vmatpush1.msra.mxu0 %v291
  %318 = vmatprep.subr.mxu0 0.0
  %319 = vmatpush1.msra.mxu0 %v292
  %320 = vmatprep.subr.mxu0 0.0
  %321 = vmatpush1.msra.mxu0 %v293
  %322 = vmatprep.subr.mxu0 0.0
  %323 = vmatpush1.msra.mxu0 %v294
  %324 = vmatprep.subr.mxu0 0.0
  %325 = vmatpush1.msra.mxu0 %v295
  %326 = vmatprep.subr.mxu0 0.0
  %327 = vmatpush1.msra.mxu0 %v296
  %328 = vmatprep.subr.mxu0 0.0
  %329 = vmatpush1.msra.mxu0 %v297
  %330 = vmatprep.subr.mxu0 0.0
  %331 = vmatpush1.msra.mxu0 %v298
  %332 = vmatprep.subr.mxu0 0.0
  %333 = vmatpush1.msra.mxu0 %v299
  %334 = vmatprep.subr.mxu0 0.0
  %335 = vmatpush1.msra.mxu0 %v300
  %336 = vmatprep.subr.mxu0 0.0
  %337 = vmatpush1.msra.mxu0 %v301
  %338 = vmatprep.subr.mxu0 0.0
  %339 = vmatpush1.msra.mxu0 0.0
  %340 = vmatprep.subr.mxu0 0.0
  %341 = vmatpush1.msra.mxu0 0.0
  %342 = vmatprep.subr.mxu0 0.0
  %343 = vmatpush1.msra.mxu0 0.0
  %344 = vmatprep.subr.mxu0 0.0
  %345 = vmatpush1.msra.mxu0 0.0
  %346 = vmatprep.subr.mxu0 0.0
  %347 = vmatpush1.msra.mxu0 0.0
  %348 = vmatprep.subr.mxu0 0.0
  %349 = vmatpush1.msra.mxu0 0.0
  %350 = vmatprep.subr.mxu0 0.0
  %351 = vmatpush1.msra.mxu0 0.0
  %352 = vmatprep.subr.mxu0 0.0
  %353 = vmatpush1.msra.mxu0 0.0
  %354 = vmatprep.subr.mxu0 0.0
  %355 = vmatpush1.msra.mxu0 0.0
  %356 = vmatprep.subr.mxu0 0.0
  %357 = vmatpush1.msra.mxu0 0.0
  %358 = vmatprep.subr.mxu0 0.0
  %359 = vmatpush1.msra.mxu0 0.0
  %360 = vmatprep.subr.mxu0 0.0
  %361 = vmatpush1.msra.mxu0 0.0
  %362 = vmatprep.subr.mxu0 0.0
  %363 = vmatpush1.msra.mxu0 0.0
  %364 = vmatprep.subr.mxu0 0.0
  %365 = vmatpush1.msra.mxu0 0.0
  %366 = vmatprep.subr.mxu0 0.0
  %367 = vmatpush1.msra.mxu0 0.0
  %368 = vmatprep.subr.mxu0 0.0
  %369 = vmatpush1.msra.mxu0 0.0
  %370 = vmatprep.mubr.f32.mxu0 0.0
  %371 = vmatmul.mubr.f32.gmra.mrb[0].mxu0 %v82
  %v372 = vpop.f32.mrb[0].mxu0
  %v373 = vadd.f32 %v305, %v372
  %v374 = vpop.f32.mrb[0].mxu0
  %375 = vmatprep.mubr.f32.mxu0 0.0
  %376 = vmatmul.mubr.f32.gmra.mrb[0].mxu0 %v83
  %v377 = vpop.f32.mrb[0].mxu0
  %v378 = vadd.f32 %v305, %v377
  %v379 = vpop.f32.mrb[0].mxu0
  %380 = vdwg.mxu0
  %v381 = vmax.f32 %v373, 0.0
  %v382 = vmax.f32 %v378, 0.0
  %s383 = scalar_lea.vmem %s4, 32
  %v384 = vld [vmem:[%s383] sm:$0xff]
  %v385 = vld [vmem:[%s383 + $0x8] sm:$0xff]
  %v386 = vld [vmem:[%s383 + $0x10] sm:$0xff]
  %v387 = vld [vmem:[%s383 + $0x18] sm:$0xff]
  %v388 = vlaneseq
  %v389 = vshrl.u32 %v388, 7
  %v390 = vsub.s32 1, %v389
  %v391 = vrot.slane %v28, %v390
  %v393 = vsel %vm184, %v381, 0
  %v396 = vsel %vm184, %v382, 0
  %398 = vmatprep.subr.mxu0 0.0
  %399 = vmatpush1.msra.mxu0 %v384
  %400 = vmatprep.subr.mxu0 0.0
  %401 = vmatpush1.msra.mxu0 %v385
  %402 = vmatprep.subr.mxu0 0.0
  %403 = vmatpush1.msra.mxu0 %v386
  %404 = vmatprep.subr.mxu0 0.0
  %405 = vmatpush1.msra.mxu0 %v387
  %406 = vmatprep.subr.mxu0 0.0
  %407 = vmatpush1.msra.mxu0 0.0
  %408 = vmatprep.subr.mxu0 0.0
  %409 = vmatpush1.msra.mxu0 0.0
  %410 = vmatprep.subr.mxu0 0.0
  %411 = vmatpush1.msra.mxu0 0.0
  %412 = vmatprep.subr.mxu0 0.0
  %413 = vmatpush1.msra.mxu0 0.0
  %414 = vmatprep.subr.mxu0 0.0
  %415 = vmatpush1.msra.mxu0 0.0
  %416 = vmatprep.subr.mxu0 0.0
  %417 = vmatpush1.msra.mxu0 0.0
  %418 = vmatprep.subr.mxu0 0.0
  %419 = vmatpush1.msra.mxu0 0.0
  %420 = vmatprep.subr.mxu0 0.0
  %421 = vmatpush1.msra.mxu0 0.0
  %422 = vmatprep.subr.mxu0 0.0
  %423 = vmatpush1.msra.mxu0 0.0
  %424 = vmatprep.subr.mxu0 0.0
  %425 = vmatpush1.msra.mxu0 0.0
  %426 = vmatprep.subr.mxu0 0.0
  %427 = vmatpush1.msra.mxu0 0.0
  %428 = vmatprep.subr.mxu0 0.0
  %429 = vmatpush1.msra.mxu0 0.0
  %430 = vmatprep.subr.mxu0 0.0
  %431 = vmatpush1.msra.mxu0 0.0
  %432 = vmatprep.subr.mxu0 0.0
  %433 = vmatpush1.msra.mxu0 0.0
  %434 = vmatprep.subr.mxu0 0.0
  %435 = vmatpush1.msra.mxu0 0.0
  %436 = vmatprep.subr.mxu0 0.0
  %437 = vmatpush1.msra.mxu0 0.0
  %438 = vmatprep.subr.mxu0 0.0
  %439 = vmatpush1.msra.mxu0 0.0
  %440 = vmatprep.subr.mxu0 0.0
  %441 = vmatpush1.msra.mxu0 0.0
  %442 = vmatprep.subr.mxu0 0.0
  %443 = vmatpush1.msra.mxu0 0.0
  %444 = vmatprep.subr.mxu0 0.0
  %445 = vmatpush1.msra.mxu0 0.0
  %446 = vmatprep.subr.mxu0 0.0
  %447 = vmatpush1.msra.mxu0 0.0
  %448 = vmatprep.subr.mxu0 0.0
  %449 = vmatpush1.msra.mxu0 0.0
  %450 = vmatprep.subr.mxu0 0.0
  %451 = vmatpush1.msra.mxu0 0.0
  %452 = vmatprep.subr.mxu0 0.0
  %453 = vmatpush1.msra.mxu0 0.0
  %454 = vmatprep.subr.mxu0 0.0
  %455 = vmatpush1.msra.mxu0 0.0
  %456 = vmatprep.subr.mxu0 0.0
  %457 = vmatpush1.msra.mxu0 0.0
  %458 = vmatprep.subr.mxu0 0.0
  %459 = vmatpush1.msra.mxu0 0.0
  %460 = vmatprep.subr.mxu0 0.0
  %461 = vmatpush1.msra.mxu0 0.0
  %462 = vmatprep.mubr.f32.mxu0 0.0
  %463 = vmatmul.mubr.f32.gmra.mrb[0].mxu0 %v393
  %v464 = vpop.f32.mrb[0].mxu0
  %v465 = vadd.f32 %v391, %v464
  %v466 = vpop.f32.mrb[0].mxu0
  %467 = vmatprep.mubr.f32.mxu0 0.0
  %468 = vmatmul.mubr.f32.gmra.mrb[0].mxu0 %v396
  %v469 = vpop.f32.mrb[0].mxu0
  %v470 = vadd.f32 %v391, %v469
  %v471 = vpop.f32.mrb[0].mxu0
  %472 = vdwg.mxu0
  %v473 = vmax.f32 %v465, 0.0
  %v474 = vmax.f32 %v470, 0.0
  %v475 = vsel %vm259, %v473, 0.0
  %476 = vadd.xlane.f32.xlu0 %v475
  %v477 = vpop.xlane.xlu0 %476
  %v478 = vsel %vm259, %v474, 0.0
  %479 = vadd.xlane.f32.xlu0 %v478
  %v480 = vpop.xlane.xlu0 %479
  %v481 = vmul.f32 %v473, %v473
  %v482 = vmul.f32 %v474, %v474
  %v483 = vsel %vm259, %v481, 0.0
  %484 = vadd.xlane.f32.xlu0 %v483
  %v485 = vpop.xlane.xlu0 %484
  %v486 = vsel %vm259, %v482, 0.0
  %487 = vadd.xlane.f32.xlu0 %v486
  %v488 = vpop.xlane.xlu0 %487
  %v489 = vmul.f32 %v477, 0.0625
  %v490 = vmul.f32 %v480, 0.0625
  %v491 = vmul.f32 %v485, 0.0625
  %v492 = vmul.f32 %v488, 0.0625
  %v493 = vmul.f32 %v489, %v489
  %v494 = vmul.f32 %v490, %v490
  %v495 = vsub.f32 %v491, %v493
  %v496 = vsub.f32 %v492, %v494
  %v497 = vsub.f32 %v473, %v489
  %v498 = vsub.f32 %v474, %v490
  %v499 = vadd.f32 %v495, 1e-05
  %v500 = vadd.f32 %v496, 1e-05
  %v501 = vrsqrt.pop %v499
  %v502 = vrsqrt.pop %v500
  %v503 = vmul.f32 %v497, %v501
  %v504 = vmul.f32 %v498, %v502
  %v505 = vlaneseq
  %v506 = vshrl.u32 %v505, 7
  %v507 = vsub.s32 2, %v506
  %v508 = vrot.slane %v28, %v507
  %v509 = vmul.f32 %v503, %v508
  %v510 = vmul.f32 %v504, %v508
  %v511 = vlaneseq
  %v512 = vshrl.u32 %v511, 7
  %v513 = vsub.s32 3, %v512
  %v514 = vrot.slane %v28, %v513
  %v515 = vadd.f32 %v509, %v514
  %v516 = vadd.f32 %v510, %v514
  %s517 = scalar_lea.vmem %s3, 256
  %v518 = vld [vmem:[%s517] sm:$0xff]
  %v519 = vld [vmem:[%s517 + $0x8] sm:$0xff]
  %v520 = vld [vmem:[%s517 + $0x10] sm:$0xff]
  %v521 = vld [vmem:[%s517 + $0x18] sm:$0xff]
  %v522 = vld [vmem:[%s517 + $0x20] sm:$0xff]
  %v523 = vld [vmem:[%s517 + $0x28] sm:$0xff]
  %v524 = vld [vmem:[%s517 + $0x30] sm:$0xff]
  %v525 = vld [vmem:[%s517 + $0x38] sm:$0xff]
  %v526 = vld [vmem:[%s517 + $0x40] sm:$0xff]
  %v527 = vld [vmem:[%s517 + $0x48] sm:$0xff]
  %v528 = vld [vmem:[%s517 + $0x50] sm:$0xff]
  %v529 = vld [vmem:[%s517 + $0x58] sm:$0xff]
  %v530 = vld [vmem:[%s517 + $0x60] sm:$0xff]
  %v531 = vld [vmem:[%s517 + $0x68] sm:$0xff]
  %v532 = vld [vmem:[%s517 + $0x70] sm:$0xff]
  %v533 = vld [vmem:[%s517 + $0x78] sm:$0xff]
  %534 = vmatprep.subr.mxu0 0.0
  %535 = vmatpush1.msra.mxu0 %v518
  %536 = vmatprep.subr.mxu0 0.0
  %537 = vmatpush1.msra.mxu0 %v519
  %538 = vmatprep.subr.mxu0 0.0
  %539 = vmatpush1.msra.mxu0 %v520
  %540 = vmatprep.subr.mxu0 0.0
  %541 = vmatpush1.msra.mxu0 %v521
  %542 = vmatprep.subr.mxu0 0.0
  %543 = vmatpush1.msra.mxu0 %v522
  %544 = vmatprep.subr.mxu0 0.0
  %545 = vmatpush1.msra.mxu0 %v523
  %546 = vmatprep.subr.mxu0 0.0
  %547 = vmatpush1.msra.mxu0 %v524
  %548 = vmatprep.subr.mxu0 0.0
  %549 = vmatpush1.msra.mxu0 %v525
  %550 = vmatprep.subr.mxu0 0.0
  %551 = vmatpush1.msra.mxu0 %v526
  %552 = vmatprep.subr.mxu0 0.0
  %553 = vmatpush1.msra.mxu0 %v527
  %554 = vmatprep.subr.mxu0 0.0
  %555 = vmatpush1.msra.mxu0 %v528
  %556 = vmatprep.subr.mxu0 0.0
  %557 = vmatpush1.msra.mxu0 %v529
  %558 = vmatprep.subr.mxu0 0.0
  %559 = vmatpush1.msra.mxu0 %v530
  %560 = vmatprep.subr.mxu0 0.0
  %561 = vmatpush1.msra.mxu0 %v531
  %562 = vmatprep.subr.mxu0 0.0
  %563 = vmatpush1.msra.mxu0 %v532
  %564 = vmatprep.subr.mxu0 0.0
  %565 = vmatpush1.msra.mxu0 %v533
  %566 = vmatprep.subr.mxu0 0.0
  %567 = vmatpush1.msra.mxu0 0.0
  %568 = vmatprep.subr.mxu0 0.0
  %569 = vmatpush1.msra.mxu0 0.0
  %570 = vmatprep.subr.mxu0 0.0
  %571 = vmatpush1.msra.mxu0 0.0
  %572 = vmatprep.subr.mxu0 0.0
  %573 = vmatpush1.msra.mxu0 0.0
  %574 = vmatprep.subr.mxu0 0.0
  %575 = vmatpush1.msra.mxu0 0.0
  %576 = vmatprep.subr.mxu0 0.0
  %577 = vmatpush1.msra.mxu0 0.0
  %578 = vmatprep.subr.mxu0 0.0
  %579 = vmatpush1.msra.mxu0 0.0
  %580 = vmatprep.subr.mxu0 0.0
  %581 = vmatpush1.msra.mxu0 0.0
  %582 = vmatprep.subr.mxu0 0.0
  %583 = vmatpush1.msra.mxu0 0.0
  %584 = vmatprep.subr.mxu0 0.0
  %585 = vmatpush1.msra.mxu0 0.0
  %586 = vmatprep.subr.mxu0 0.0
  %587 = vmatpush1.msra.mxu0 0.0
  %588 = vmatprep.subr.mxu0 0.0
  %589 = vmatpush1.msra.mxu0 0.0
  %590 = vmatprep.subr.mxu0 0.0
  %591 = vmatpush1.msra.mxu0 0.0
  %592 = vmatprep.subr.mxu0 0.0
  %593 = vmatpush1.msra.mxu0 0.0
  %594 = vmatprep.subr.mxu0 0.0
  %595 = vmatpush1.msra.mxu0 0.0
  %596 = vmatprep.subr.mxu0 0.0
  %597 = vmatpush1.msra.mxu0 0.0
  %598 = vmatprep.mubr.f32.mxu0 0.0
  %599 = vmatmul.mubr.f32.gmra.mrb[0].mxu0 %v84
  %v600 = vpop.f32.mrb[0].mxu0
  %v601 = vadd.f32 %v30, %v600
  %v602 = vpop.f32.mrb[0].mxu0
  %603 = vdwg.mxu0
  %v604 = vmax.f32 %v601, 0.0
  %s605 = scalar_lea.vmem %s4, 64
  %v606 = vld [vmem:[%s605] sm:$0xff]
  %v607 = vld [vmem:[%s605 + $0x8] sm:$0xff]
  %v608 = vld [vmem:[%s605 + $0x10] sm:$0xff]
  %v609 = vld [vmem:[%s605 + $0x18] sm:$0xff]
  %v611 = vrot.slane %v30, 1
  %v614 = vsel %vm184, %v604, 0
  %616 = vmatprep.subr.mxu0 0.0
  %617 = vmatpush1.msra.mxu0 %v606
  %618 = vmatprep.subr.mxu0 0.0
  %619 = vmatpush1.msra.mxu0 %v607
  %620 = vmatprep.subr.mxu0 0.0
  %621 = vmatpush1.msra.mxu0 %v608
  %622 = vmatprep.subr.mxu0 0.0
  %623 = vmatpush1.msra.mxu0 %v609
  %624 = vmatprep.subr.mxu0 0.0
  %625 = vmatpush1.msra.mxu0 0.0
  %626 = vmatprep.subr.mxu0 0.0
  %627 = vmatpush1.msra.mxu0 0.0
  %628 = vmatprep.subr.mxu0 0.0
  %629 = vmatpush1.msra.mxu0 0.0
  %630 = vmatprep.subr.mxu0 0.0
  %631 = vmatpush1.msra.mxu0 0.0
  %632 = vmatprep.subr.mxu0 0.0
  %633 = vmatpush1.msra.mxu0 0.0
  %634 = vmatprep.subr.mxu0 0.0
  %635 = vmatpush1.msra.mxu0 0.0
  %636 = vmatprep.subr.mxu0 0.0
  %637 = vmatpush1.msra.mxu0 0.0
  %638 = vmatprep.subr.mxu0 0.0
  %639 = vmatpush1.msra.mxu0 0.0
  %640 = vmatprep.subr.mxu0 0.0
  %641 = vmatpush1.msra.mxu0 0.0
  %642 = vmatprep.subr.mxu0 0.0
  %643 = vmatpush1.msra.mxu0 0.0
  %644 = vmatprep.subr.mxu0 0.0
  %645 = vmatpush1.msra.mxu0 0.0
  %646 = vmatprep.subr.mxu0 0.0
  %647 = vmatpush1.msra.mxu0 0.0
  %648 = vmatprep.subr.mxu0 0.0
  %649 = vmatpush1.msra.mxu0 0.0
  %650 = vmatprep.subr.mxu0 0.0
  %651 = vmatpush1.msra.mxu0 0.0
  %652 = vmatprep.subr.mxu0 0.0
  %653 = vmatpush1.msra.mxu0 0.0
  %654 = vmatprep.subr.mxu0 0.0
  %655 = vmatpush1.msra.mxu0 0.0
  %656 = vmatprep.subr.mxu0 0.0
  %657 = vmatpush1.msra.mxu0 0.0
  %658 = vmatprep.subr.mxu0 0.0
  %659 = vmatpush1.msra.mxu0 0.0
  %660 = vmatprep.subr.mxu0 0.0
  %661 = vmatpush1.msra.mxu0 0.0
  %662 = vmatprep.subr.mxu0 0.0
  %663 = vmatpush1.msra.mxu0 0.0
  %664 = vmatprep.subr.mxu0 0.0
  %665 = vmatpush1.msra.mxu0 0.0
  %666 = vmatprep.subr.mxu0 0.0
  %667 = vmatpush1.msra.mxu0 0.0
  %668 = vmatprep.subr.mxu0 0.0
  %669 = vmatpush1.msra.mxu0 0.0
  %670 = vmatprep.subr.mxu0 0.0
  %671 = vmatpush1.msra.mxu0 0.0
  %672 = vmatprep.subr.mxu0 0.0
  %673 = vmatpush1.msra.mxu0 0.0
  %674 = vmatprep.subr.mxu0 0.0
  %675 = vmatpush1.msra.mxu0 0.0
  %676 = vmatprep.subr.mxu0 0.0
  %677 = vmatpush1.msra.mxu0 0.0
  %678 = vmatprep.subr.mxu0 0.0
  %679 = vmatpush1.msra.mxu0 0.0
  %680 = vmatprep.mubr.f32.mxu0 0.0
  %681 = vmatmul.mubr.f32.gmra.mrb[0].mxu0 %v614
  %v682 = vpop.f32.mrb[0].mxu0
  %v683 = vadd.f32 %v611, %v682
  %v684 = vpop.f32.mrb[0].mxu0
  %685 = vdwg.mxu0
  %v686 = vmax.f32 %v683, 0.0
  %vm687 = vcmask 122880
  %v688 = vsel %vm687, %v686, 0.0
  %689 = vadd.xlane.f32.xlu0 %v688
  %v690 = vpop.xlane.xlu0 %689
  %v691 = vmul.f32 %v686, %v686
  %v692 = vsel %vm687, %v691, 0.0
  %693 = vadd.xlane.f32.xlu0 %v692
  %v694 = vpop.xlane.xlu0 %693
  %v695 = vmul.f32 %v690, 0.0625
  %v696 = vmul.f32 %v694, 0.0625
  %v697 = vmul.f32 %v695, %v695
  %v698 = vsub.f32 %v696, %v697
  %v699 = vsub.f32 %v686, %v695
  %v700 = vadd.f32 %v698, 1e-05
  %v701 = vrsqrt.pop %v700
  %v702 = vmul.f32 %v699, %v701
  %v703 = vrot.slane %v30, 2
  %v705 = vmul.f32 %v702, %v703
  %v706 = vrot.slane %v30, 3
  %v708 = vadd.f32 %v705, %v706
  %v709 = vsel %vm259, %v284, 0.0
  %v710 = vsel %vm259, %v515, 0.0
  %v711 = vsel %vm259, %v516, 0.0
  %v712 = vsel %vm259, %v708, 0.0
  %vm713 = vcmask 64512
  %v715 = vsel %vm713, %v57, 0
  %v718 = vsel %vm713, %v58, 0
  %720 = vmatprep.subr.mxu0 0.0
  %721 = vmatpush1.msra.mxu0 %v709
  %722 = vmatprep.subr.mxu0 0.0
  %723 = vmatpush1.msra.mxu0 0.0
  %724 = vmatprep.subr.mxu0 0.0
  %725 = vmatpush1.msra.mxu0 0.0
  %726 = vmatprep.subr.mxu0 0.0
  %727 = vmatpush1.msra.mxu0 0.0
  %728 = vmatprep.subr.mxu0 0.0
  %729 = vmatpush1.msra.mxu0 0.0
  %730 = vmatprep.subr.mxu0 0.0
  %731 = vmatpush1.msra.mxu0 0.0
  %732 = vmatprep.subr.mxu0 0.0
  %733 = vmatpush1.msra.mxu0 0.0
  %734 = vmatprep.subr.mxu0 0.0
  %735 = vmatpush1.msra.mxu0 0.0
  %736 = vmatprep.subr.mxu0 0.0
  %737 = vmatpush1.msra.mxu0 0.0
  %738 = vmatprep.subr.mxu0 0.0
  %739 = vmatpush1.msra.mxu0 0.0
  %740 = vmatprep.subr.mxu0 0.0
  %741 = vmatpush1.msra.mxu0 0.0
  %742 = vmatprep.subr.mxu0 0.0
  %743 = vmatpush1.msra.mxu0 0.0
  %744 = vmatprep.subr.mxu0 0.0
  %745 = vmatpush1.msra.mxu0 0.0
  %746 = vmatprep.subr.mxu0 0.0
  %747 = vmatpush1.msra.mxu0 0.0
  %748 = vmatprep.subr.mxu0 0.0
  %749 = vmatpush1.msra.mxu0 0.0
  %750 = vmatprep.subr.mxu0 0.0
  %751 = vmatpush1.msra.mxu0 0.0
  %752 = vmatprep.subr.mxu0 0.0
  %753 = vmatpush1.msra.mxu0 0.0
  %754 = vmatprep.subr.mxu0 0.0
  %755 = vmatpush1.msra.mxu0 0.0
  %756 = vmatprep.subr.mxu0 0.0
  %757 = vmatpush1.msra.mxu0 0.0
  %758 = vmatprep.subr.mxu0 0.0
  %759 = vmatpush1.msra.mxu0 0.0
  %760 = vmatprep.subr.mxu0 0.0
  %761 = vmatpush1.msra.mxu0 0.0
  %762 = vmatprep.subr.mxu0 0.0
  %763 = vmatpush1.msra.mxu0 0.0
  %764 = vmatprep.subr.mxu0 0.0
  %765 = vmatpush1.msra.mxu0 0.0
  %766 = vmatprep.subr.mxu0 0.0
  %767 = vmatpush1.msra.mxu0 0.0
  %768 = vmatprep.subr.mxu0 0.0
  %769 = vmatpush1.msra.mxu0 0.0
  %770 = vmatprep.subr.mxu0 0.0
  %771 = vmatpush1.msra.mxu0 0.0
  %772 = vmatprep.subr.mxu0 0.0
  %773 = vmatpush1.msra.mxu0 0.0
  %774 = vmatprep.subr.mxu0 0.0
  %775 = vmatpush1.msra.mxu0 0.0
  %776 = vmatprep.subr.mxu0 0.0
  %777 = vmatpush1.msra.mxu0 0.0
  %778 = vmatprep.subr.mxu0 0.0
  %779 = vmatpush1.msra.mxu0 0.0
  %780 = vmatprep.subr.mxu0 0.0
  %781 = vmatpush1.msra.mxu0 0.0
  %782 = vmatprep.subr.mxu0 0.0
  %783 = vmatpush1.msra.mxu0 0.0
  %784 = vmatprep.mubr.f32.mxu0 0.0
  %785 = vmatmul.mubr.f32.gmra.mrb[0].mxu0 %v715
  %v786 = vpop.f32.mrb[0].mxu0
  %v787 = vadd.f32 0.0, %v786
  %v788 = vpop.f32.mrb[0].mxu0
  %789 = vmatprep.mubr.f32.mxu0 0.0
  %790 = vmatmul.mubr.f32.gmra.mrb[0].mxu0 %v718
  %v791 = vpop.f32.mrb[0].mxu0
  %v792 = vadd.f32 0.0, %v791
  %v793 = vpop.f32.mrb[0].mxu0
  %794 = vdwg.mxu0
  %v796 = vsel %vm713, %v69, 0
  %v799 = vsel %vm713, %v70, 0
  %801 = vmatprep.subr.mxu0 0.0
  %802 = vmatpush1.msra.mxu0 %v709
  %803 = vmatprep.subr.mxu0 0.0
  %804 = vmatpush1.msra.mxu0 0.0
  %805 = vmatprep.subr.mxu0 0.0
  %806 = vmatpush1.msra.mxu0 0.0
  %807 = vmatprep.subr.mxu0 0.0
  %808 = vmatpush1.msra.mxu0 0.0
  %809 = vmatprep.subr.mxu0 0.0
  %810 = vmatpush1.msra.mxu0 0.0
  %811 = vmatprep.subr.mxu0 0.0
  %812 = vmatpush1.msra.mxu0 0.0
  %813 = vmatprep.subr.mxu0 0.0
  %814 = vmatpush1.msra.mxu0 0.0
  %815 = vmatprep.subr.mxu0 0.0
  %816 = vmatpush1.msra.mxu0 0.0
  %817 = vmatprep.subr.mxu0 0.0
  %818 = vmatpush1.msra.mxu0 0.0
  %819 = vmatprep.subr.mxu0 0.0
  %820 = vmatpush1.msra.mxu0 0.0
  %821 = vmatprep.subr.mxu0 0.0
  %822 = vmatpush1.msra.mxu0 0.0
  %823 = vmatprep.subr.mxu0 0.0
  %824 = vmatpush1.msra.mxu0 0.0
  %825 = vmatprep.subr.mxu0 0.0
  %826 = vmatpush1.msra.mxu0 0.0
  %827 = vmatprep.subr.mxu0 0.0
  %828 = vmatpush1.msra.mxu0 0.0
  %829 = vmatprep.subr.mxu0 0.0
  %830 = vmatpush1.msra.mxu0 0.0
  %831 = vmatprep.subr.mxu0 0.0
  %832 = vmatpush1.msra.mxu0 0.0
  %833 = vmatprep.subr.mxu0 0.0
  %834 = vmatpush1.msra.mxu0 0.0
  %835 = vmatprep.subr.mxu0 0.0
  %836 = vmatpush1.msra.mxu0 0.0
  %837 = vmatprep.subr.mxu0 0.0
  %838 = vmatpush1.msra.mxu0 0.0
  %839 = vmatprep.subr.mxu0 0.0
  %840 = vmatpush1.msra.mxu0 0.0
  %841 = vmatprep.subr.mxu0 0.0
  %842 = vmatpush1.msra.mxu0 0.0
  %843 = vmatprep.subr.mxu0 0.0
  %844 = vmatpush1.msra.mxu0 0.0
  %845 = vmatprep.subr.mxu0 0.0
  %846 = vmatpush1.msra.mxu0 0.0
  %847 = vmatprep.subr.mxu0 0.0
  %848 = vmatpush1.msra.mxu0 0.0
  %849 = vmatprep.subr.mxu0 0.0
  %850 = vmatpush1.msra.mxu0 0.0
  %851 = vmatprep.subr.mxu0 0.0
  %852 = vmatpush1.msra.mxu0 0.0
  %853 = vmatprep.subr.mxu0 0.0
  %854 = vmatpush1.msra.mxu0 0.0
  %855 = vmatprep.subr.mxu0 0.0
  %856 = vmatpush1.msra.mxu0 0.0
  %857 = vmatprep.subr.mxu0 0.0
  %858 = vmatpush1.msra.mxu0 0.0
  %859 = vmatprep.subr.mxu0 0.0
  %860 = vmatpush1.msra.mxu0 0.0
  %861 = vmatprep.subr.mxu0 0.0
  %862 = vmatpush1.msra.mxu0 0.0
  %863 = vmatprep.subr.mxu0 0.0
  %864 = vmatpush1.msra.mxu0 0.0
  %865 = vmatprep.mubr.f32.mxu0 0.0
  %866 = vmatmul.mubr.f32.gmra.mrb[0].mxu0 %v796
  %v867 = vpop.f32.mrb[0].mxu0
  %v868 = vadd.f32 0.0, %v867
  %v869 = vpop.f32.mrb[0].mxu0
  %870 = vmatprep.mubr.f32.mxu0 0.0
  %871 = vmatmul.mubr.f32.gmra.mrb[0].mxu0 %v799
  %v872 = vpop.f32.mrb[0].mxu0
  %v873 = vadd.f32 0.0, %v872
  %v874 = vpop.f32.mrb[0].mxu0
  %875 = vdwg.mxu0
  %v876 = vlaneseq
  %v877 = vshrl.u32 %v876, 7
  %v878 = vsub.s32 0, %v877
  %v879 = vrot.slane %v712, %v878
  %882 = vrot.lane.b32.xlu0 %v868, 32
  %v883 = vpop.permute.xlu0 %882
  %884 = vrot.lane.b32.xlu0 %v873, 32
  %v885 = vpop.permute.xlu0 %884
  %890 = vrot.lane.b32.xlu0 %v710, 64
  %v891 = vpop.permute.xlu0 %890
  %892 = vrot.lane.b32.xlu0 %v711, 64
  %v893 = vpop.permute.xlu0 %892
  %897 = vrot.lane.b32.xlu0 %v879, 96
  %v898 = vpop.permute.xlu0 %897
  %v900 = vsel %vm184, %v787, %v883
  %v901 = vsel %vm184, %v792, %v885
  %vm902 = vcmask 523264
  %v903 = vsel %vm902, %v900, %v891
  %v904 = vsel %vm902, %v901, %v893
  %vm905 = vcmask 785408
  %v906 = vsel %vm905, %v903, %v898
  %v907 = vsel %vm905, %v904, %v898
  %s908 = scalar_lea.vmem %s3, 384
  %v909 = vld [vmem:[%s908] sm:$0xff]
  %v910 = vld [vmem:[%s908 + $0x8] sm:$0xff]
  %v911 = vld [vmem:[%s908 + $0x10] sm:$0xff]
  %v912 = vld [vmem:[%s908 + $0x18] sm:$0xff]
  %v913 = vld [vmem:[%s908 + $0x20] sm:$0xff]
  %v914 = vld [vmem:[%s908 + $0x28] sm:$0xff]
  %v915 = vld [vmem:[%s908 + $0x30] sm:$0xff]
  %v916 = vld [vmem:[%s908 + $0x38] sm:$0xff]
  %v917 = vld [vmem:[%s908 + $0x40] sm:$0xff]
  %v918 = vld [vmem:[%s908 + $0x48] sm:$0xff]
  %v919 = vld [vmem:[%s908 + $0x50] sm:$0xff]
  %v920 = vld [vmem:[%s908 + $0x58] sm:$0xff]
  %v921 = vld [vmem:[%s908 + $0x60] sm:$0xff]
  %v922 = vld [vmem:[%s908 + $0x68] sm:$0xff]
  %v923 = vld [vmem:[%s908 + $0x70] sm:$0xff]
  %v924 = vld [vmem:[%s908 + $0x78] sm:$0xff]
  %v925 = vlaneseq
  %v926 = vshrl.u32 %v925, 7
  %v927 = vsub.s32 0, %v926
  %v928 = vrot.slane %v32, %v927
  %929 = vmatprep.subr.mxu0 0.0
  %930 = vmatpush1.msra.mxu0 %v909
  %931 = vmatprep.subr.mxu0 0.0
  %932 = vmatpush1.msra.mxu0 %v910
  %933 = vmatprep.subr.mxu0 0.0
  %934 = vmatpush1.msra.mxu0 %v911
  %935 = vmatprep.subr.mxu0 0.0
  %936 = vmatpush1.msra.mxu0 %v912
  %937 = vmatprep.subr.mxu0 0.0
  %938 = vmatpush1.msra.mxu0 %v913
  %939 = vmatprep.subr.mxu0 0.0
  %940 = vmatpush1.msra.mxu0 %v914
  %941 = vmatprep.subr.mxu0 0.0
  %942 = vmatpush1.msra.mxu0 %v915
  %943 = vmatprep.subr.mxu0 0.0
  %944 = vmatpush1.msra.mxu0 %v916
  %945 = vmatprep.subr.mxu0 0.0
  %946 = vmatpush1.msra.mxu0 %v917
  %947 = vmatprep.subr.mxu0 0.0
  %948 = vmatpush1.msra.mxu0 %v918
  %949 = vmatprep.subr.mxu0 0.0
  %950 = vmatpush1.msra.mxu0 %v919
  %951 = vmatprep.subr.mxu0 0.0
  %952 = vmatpush1.msra.mxu0 %v920
  %953 = vmatprep.subr.mxu0 0.0
  %954 = vmatpush1.msra.mxu0 %v921
  %955 = vmatprep.subr.mxu0 0.0
  %956 = vmatpush1.msra.mxu0 %v922
  %957 = vmatprep.subr.mxu0 0.0
  %958 = vmatpush1.msra.mxu0 %v923
  %959 = vmatprep.subr.mxu0 0.0
  %960 = vmatpush1.msra.mxu0 %v924
  %961 = vmatprep.subr.mxu0 0.0
  %962 = vmatpush1.msra.mxu0 0.0
  %963 = vmatprep.subr.mxu0 0.0
  %964 = vmatpush1.msra.mxu0 0.0
  %965 = vmatprep.subr.mxu0 0.0
  %966 = vmatpush1.msra.mxu0 0.0
  %967 = vmatprep.subr.mxu0 0.0
  %968 = vmatpush1.msra.mxu0 0.0
  %969 = vmatprep.subr.mxu0 0.0
  %970 = vmatpush1.msra.mxu0 0.0
  %971 = vmatprep.subr.mxu0 0.0
  %972 = vmatpush1.msra.mxu0 0.0
  %973 = vmatprep.subr.mxu0 0.0
  %974 = vmatpush1.msra.mxu0 0.0
  %975 = vmatprep.subr.mxu0 0.0
  %976 = vmatpush1.msra.mxu0 0.0
  %977 = vmatprep.subr.mxu0 0.0
  %978 = vmatpush1.msra.mxu0 0.0
  %979 = vmatprep.subr.mxu0 0.0
  %980 = vmatpush1.msra.mxu0 0.0
  %981 = vmatprep.subr.mxu0 0.0
  %982 = vmatpush1.msra.mxu0 0.0
  %983 = vmatprep.subr.mxu0 0.0
  %984 = vmatpush1.msra.mxu0 0.0
  %985 = vmatprep.subr.mxu0 0.0
  %986 = vmatpush1.msra.mxu0 0.0
  %987 = vmatprep.subr.mxu0 0.0
  %988 = vmatpush1.msra.mxu0 0.0
  %989 = vmatprep.subr.mxu0 0.0
  %990 = vmatpush1.msra.mxu0 0.0
  %991 = vmatprep.subr.mxu0 0.0
  %992 = vmatpush1.msra.mxu0 0.0
  %993 = vmatprep.mubr.f32.mxu0 0.0
  %994 = vmatmul.mubr.f32.gmra.mrb[0].mxu0 %v906
  %v995 = vpop.f32.mrb[0].mxu0
  %v996 = vadd.f32 %v928, %v995
  %v997 = vpop.f32.mrb[0].mxu0
  %998 = vmatprep.mubr.f32.mxu0 0.0
  %999 = vmatmul.mubr.f32.gmra.mrb[0].mxu0 %v907
  %v1000 = vpop.f32.mrb[0].mxu0
  %v1001 = vadd.f32 %v928, %v1000
  %v1002 = vpop.f32.mrb[0].mxu0
  %1003 = vdwg.mxu0
  %v1004 = vmax.f32 %v996, 0.0
  %v1005 = vmax.f32 %v1001, 0.0
  %s1006 = scalar_lea.vmem %s4, 96
  %v1007 = vld [vmem:[%s1006] sm:$0xff]
  %v1008 = vld [vmem:[%s1006 + $0x8] sm:$0xff]
  %v1009 = vld [vmem:[%s1006 + $0x10] sm:$0xff]
  %v1010 = vld [vmem:[%s1006 + $0x18] sm:$0xff]
  %v1011 = vlaneseq
  %v1012 = vshrl.u32 %v1011, 7
  %v1013 = vsub.s32 1, %v1012
  %v1014 = vrot.slane %v32, %v1013
  %v1016 = vsel %vm184, %v1004, 0
  %v1019 = vsel %vm184, %v1005, 0
  %1021 = vmatprep.subr.mxu0 0.0
  %1022 = vmatpush1.msra.mxu0 %v1007
  %1023 = vmatprep.subr.mxu0 0.0
  %1024 = vmatpush1.msra.mxu0 %v1008
  %1025 = vmatprep.subr.mxu0 0.0
  %1026 = vmatpush1.msra.mxu0 %v1009
  %1027 = vmatprep.subr.mxu0 0.0
  %1028 = vmatpush1.msra.mxu0 %v1010
  %1029 = vmatprep.subr.mxu0 0.0
  %1030 = vmatpush1.msra.mxu0 0.0
  %1031 = vmatprep.subr.mxu0 0.0
  %1032 = vmatpush1.msra.mxu0 0.0
  %1033 = vmatprep.subr.mxu0 0.0
  %1034 = vmatpush1.msra.mxu0 0.0
  %1035 = vmatprep.subr.mxu0 0.0
  %1036 = vmatpush1.msra.mxu0 0.0
  %1037 = vmatprep.subr.mxu0 0.0
  %1038 = vmatpush1.msra.mxu0 0.0
  %1039 = vmatprep.subr.mxu0 0.0
  %1040 = vmatpush1.msra.mxu0 0.0
  %1041 = vmatprep.subr.mxu0 0.0
  %1042 = vmatpush1.msra.mxu0 0.0
  %1043 = vmatprep.subr.mxu0 0.0
  %1044 = vmatpush1.msra.mxu0 0.0
  %1045 = vmatprep.subr.mxu0 0.0
  %1046 = vmatpush1.msra.mxu0 0.0
  %1047 = vmatprep.subr.mxu0 0.0
  %1048 = vmatpush1.msra.mxu0 0.0
  %1049 = vmatprep.subr.mxu0 0.0
  %1050 = vmatpush1.msra.mxu0 0.0
  %1051 = vmatprep.subr.mxu0 0.0
  %1052 = vmatpush1.msra.mxu0 0.0
  %1053 = vmatprep.subr.mxu0 0.0
  %1054 = vmatpush1.msra.mxu0 0.0
  %1055 = vmatprep.subr.mxu0 0.0
  %1056 = vmatpush1.msra.mxu0 0.0
  %1057 = vmatprep.subr.mxu0 0.0
  %1058 = vmatpush1.msra.mxu0 0.0
  %1059 = vmatprep.subr.mxu0 0.0
  %1060 = vmatpush1.msra.mxu0 0.0
  %1061 = vmatprep.subr.mxu0 0.0
  %1062 = vmatpush1.msra.mxu0 0.0
  %1063 = vmatprep.subr.mxu0 0.0
  %1064 = vmatpush1.msra.mxu0 0.0
  %1065 = vmatprep.subr.mxu0 0.0
  %1066 = vmatpush1.msra.mxu0 0.0
  %1067 = vmatprep.subr.mxu0 0.0
  %1068 = vmatpush1.msra.mxu0 0.0
  %1069 = vmatprep.subr.mxu0 0.0
  %1070 = vmatpush1.msra.mxu0 0.0
  %1071 = vmatprep.subr.mxu0 0.0
  %1072 = vmatpush1.msra.mxu0 0.0
  %1073 = vmatprep.subr.mxu0 0.0
  %1074 = vmatpush1.msra.mxu0 0.0
  %1075 = vmatprep.subr.mxu0 0.0
  %1076 = vmatpush1.msra.mxu0 0.0
  %1077 = vmatprep.subr.mxu0 0.0
  %1078 = vmatpush1.msra.mxu0 0.0
  %1079 = vmatprep.subr.mxu0 0.0
  %1080 = vmatpush1.msra.mxu0 0.0
  %1081 = vmatprep.subr.mxu0 0.0
  %1082 = vmatpush1.msra.mxu0 0.0
  %1083 = vmatprep.subr.mxu0 0.0
  %1084 = vmatpush1.msra.mxu0 0.0
  %1085 = vmatprep.mubr.f32.mxu0 0.0
  %1086 = vmatmul.mubr.f32.gmra.mrb[0].mxu0 %v1016
  %v1087 = vpop.f32.mrb[0].mxu0
  %v1088 = vadd.f32 %v1014, %v1087
  %v1089 = vpop.f32.mrb[0].mxu0
  %1090 = vmatprep.mubr.f32.mxu0 0.0
  %1091 = vmatmul.mubr.f32.gmra.mrb[0].mxu0 %v1019
  %v1092 = vpop.f32.mrb[0].mxu0
  %v1093 = vadd.f32 %v1014, %v1092
  %v1094 = vpop.f32.mrb[0].mxu0
  %1095 = vdwg.mxu0
  %v1096 = vmax.f32 %v1088, 0.0
  %v1097 = vmax.f32 %v1093, 0.0
  %v1098 = vsel %vm259, %v1096, 0.0
  %1099 = vadd.xlane.f32.xlu0 %v1098
  %v1100 = vpop.xlane.xlu0 %1099
  %v1101 = vsel %vm259, %v1097, 0.0
  %1102 = vadd.xlane.f32.xlu0 %v1101
  %v1103 = vpop.xlane.xlu0 %1102
  %v1104 = vmul.f32 %v1096, %v1096
  %v1105 = vmul.f32 %v1097, %v1097
  %v1106 = vsel %vm259, %v1104, 0.0
  %1107 = vadd.xlane.f32.xlu0 %v1106
  %v1108 = vpop.xlane.xlu0 %1107
  %v1109 = vsel %vm259, %v1105, 0.0
  %1110 = vadd.xlane.f32.xlu0 %v1109
  %v1111 = vpop.xlane.xlu0 %1110
  %v1112 = vmul.f32 %v1100, 0.0625
  %v1113 = vmul.f32 %v1103, 0.0625
  %v1114 = vmul.f32 %v1108, 0.0625
  %v1115 = vmul.f32 %v1111, 0.0625
  %v1116 = vmul.f32 %v1112, %v1112
  %v1117 = vmul.f32 %v1113, %v1113
  %v1118 = vsub.f32 %v1114, %v1116
  %v1119 = vsub.f32 %v1115, %v1117
  %v1120 = vsub.f32 %v1096, %v1112
  %v1121 = vsub.f32 %v1097, %v1113
  %v1122 = vadd.f32 %v1118, 1e-05
  %v1123 = vadd.f32 %v1119, 1e-05
  %v1124 = vrsqrt.pop %v1122
  %v1125 = vrsqrt.pop %v1123
  %v1126 = vmul.f32 %v1120, %v1124
  %v1127 = vmul.f32 %v1121, %v1125
  %v1128 = vlaneseq
  %v1129 = vshrl.u32 %v1128, 7
  %v1130 = vsub.s32 2, %v1129
  %v1131 = vrot.slane %v32, %v1130
  %v1132 = vmul.f32 %v1126, %v1131
  %v1133 = vmul.f32 %v1127, %v1131
  %v1134 = vlaneseq
  %v1135 = vshrl.u32 %v1134, 7
  %v1136 = vsub.s32 3, %v1135
  %v1137 = vrot.slane %v32, %v1136
  %v1138 = vadd.f32 %v1132, %v1137
  %v1139 = vadd.f32 %v1133, %v1137
  %v1141 = vsel %vm259, %v80, 0
  %1143 = vmatprep.subr.mxu0 0.0
  %1144 = vmatpush1.msra.mxu0 %v1138
  %1145 = vmatprep.subr.mxu0 0.0
  %1146 = vmatpush1.msra.mxu0 %v1139
  %1147 = vmatprep.subr.mxu0 0.0
  %1148 = vmatpush1.msra.mxu0 0.0
  %1149 = vmatprep.subr.mxu0 0.0
  %1150 = vmatpush1.msra.mxu0 0.0
  %1151 = vmatprep.subr.mxu0 0.0
  %1152 = vmatpush1.msra.mxu0 0.0
  %1153 = vmatprep.subr.mxu0 0.0
  %1154 = vmatpush1.msra.mxu0 0.0
  %1155 = vmatprep.subr.mxu0 0.0
  %1156 = vmatpush1.msra.mxu0 0.0
  %1157 = vmatprep.subr.mxu0 0.0
  %1158 = vmatpush1.msra.mxu0 0.0
  %1159 = vmatprep.subr.mxu0 0.0
  %1160 = vmatpush1.msra.mxu0 0.0
  %1161 = vmatprep.subr.mxu0 0.0
  %1162 = vmatpush1.msra.mxu0 0.0
  %1163 = vmatprep.subr.mxu0 0.0
  %1164 = vmatpush1.msra.mxu0 0.0
  %1165 = vmatprep.subr.mxu0 0.0
  %1166 = vmatpush1.msra.mxu0 0.0
  %1167 = vmatprep.subr.mxu0 0.0
  %1168 = vmatpush1.msra.mxu0 0.0
  %1169 = vmatprep.subr.mxu0 0.0
  %1170 = vmatpush1.msra.mxu0 0.0
  %1171 = vmatprep.subr.mxu0 0.0
  %1172 = vmatpush1.msra.mxu0 0.0
  %1173 = vmatprep.subr.mxu0 0.0
  %1174 = vmatpush1.msra.mxu0 0.0
  %1175 = vmatprep.subr.mxu0 0.0
  %1176 = vmatpush1.msra.mxu0 0.0
  %1177 = vmatprep.subr.mxu0 0.0
  %1178 = vmatpush1.msra.mxu0 0.0
  %1179 = vmatprep.subr.mxu0 0.0
  %1180 = vmatpush1.msra.mxu0 0.0
  %1181 = vmatprep.subr.mxu0 0.0
  %1182 = vmatpush1.msra.mxu0 0.0
  %1183 = vmatprep.subr.mxu0 0.0
  %1184 = vmatpush1.msra.mxu0 0.0
  %1185 = vmatprep.subr.mxu0 0.0
  %1186 = vmatpush1.msra.mxu0 0.0
  %1187 = vmatprep.subr.mxu0 0.0
  %1188 = vmatpush1.msra.mxu0 0.0
  %1189 = vmatprep.subr.mxu0 0.0
  %1190 = vmatpush1.msra.mxu0 0.0
  %1191 = vmatprep.subr.mxu0 0.0
  %1192 = vmatpush1.msra.mxu0 0.0
  %1193 = vmatprep.subr.mxu0 0.0
  %1194 = vmatpush1.msra.mxu0 0.0
  %1195 = vmatprep.subr.mxu0 0.0
  %1196 = vmatpush1.msra.mxu0 0.0
  %1197 = vmatprep.subr.mxu0 0.0
  %1198 = vmatpush1.msra.mxu0 0.0
  %1199 = vmatprep.subr.mxu0 0.0
  %1200 = vmatpush1.msra.mxu0 0.0
  %1201 = vmatprep.subr.mxu0 0.0
  %1202 = vmatpush1.msra.mxu0 0.0
  %1203 = vmatprep.subr.mxu0 0.0
  %1204 = vmatpush1.msra.mxu0 0.0
  %1205 = vmatprep.subr.mxu0 0.0
  %1206 = vmatpush1.msra.mxu0 0.0
  %1207 = vmatprep.mubr.f32.mxu0 0.0
  %1208 = vmatmul.mubr.f32.gmra.mrb[0].mxu0 %v1141
  %v1209 = vpop.f32.mrb[0].mxu0
  %v1210 = vadd.f32 0.0, %v1209
  %v1211 = vpop.f32.mrb[0].mxu0
  %1212 = vdwg.mxu0
  %1214 = vrot.lane.b32.xlu0 %v1210, 32
  %v1215 = vpop.permute.xlu0 %1214
  %1217 = vrot.lane.b32.xlu0 %v879, 48
  %v1218 = vpop.permute.xlu0 %1217
  %v1220 = vsel %vm184, %v709, %v1215
  %vm1221 = vcmask 392192
  %v1222 = vsel %vm1221, %v1220, %v1218
  %s1223 = scalar_lea.vmem %s3, 512
  %v1224 = vld [vmem:[%s1223] sm:$0xff]
  %v1225 = vld [vmem:[%s1223 + $0x8] sm:$0xff]
  %v1226 = vld [vmem:[%s1223 + $0x10] sm:$0xff]
  %v1227 = vld [vmem:[%s1223 + $0x18] sm:$0xff]
  %v1228 = vld [vmem:[%s1223 + $0x20] sm:$0xff]
  %v1229 = vld [vmem:[%s1223 + $0x28] sm:$0xff]
  %v1230 = vld [vmem:[%s1223 + $0x30] sm:$0xff]
  %v1231 = vld [vmem:[%s1223 + $0x38] sm:$0xff]
  %v1232 = vld [vmem:[%s1223 + $0x40] sm:$0xff]
  %v1233 = vld [vmem:[%s1223 + $0x48] sm:$0xff]
  %v1234 = vlaneseq
  %v1235 = vshrl.u32 %v1234, 7
  %v1236 = vsub.s32 0, %v1235
  %v1237 = vrot.slane %v34, %v1236
  %vm1238 = vcmask 654336
  %v1240 = vsel %vm1238, %v1222, 0
  %1242 = vmatprep.subr.mxu0 0.0
  %1243 = vmatpush1.msra.mxu0 %v1224
  %1244 = vmatprep.subr.mxu0 0.0
  %1245 = vmatpush1.msra.mxu0 %v1225
  %1246 = vmatprep.subr.mxu0 0.0
  %1247 = vmatpush1.msra.mxu0 %v1226
  %1248 = vmatprep.subr.mxu0 0.0
  %1249 = vmatpush1.msra.mxu0 %v1227
  %1250 = vmatprep.subr.mxu0 0.0
  %1251 = vmatpush1.msra.mxu0 %v1228
  %1252 = vmatprep.subr.mxu0 0.0
  %1253 = vmatpush1.msra.mxu0 %v1229
  %1254 = vmatprep.subr.mxu0 0.0
  %1255 = vmatpush1.msra.mxu0 %v1230
  %1256 = vmatprep.subr.mxu0 0.0
  %1257 = vmatpush1.msra.mxu0 %v1231
  %1258 = vmatprep.subr.mxu0 0.0
  %1259 = vmatpush1.msra.mxu0 %v1232
  %1260 = vmatprep.subr.mxu0 0.0
  %1261 = vmatpush1.msra.mxu0 %v1233
  %1262 = vmatprep.subr.mxu0 0.0
  %1263 = vmatpush1.msra.mxu0 0.0
  %1264 = vmatprep.subr.mxu0 0.0
  %1265 = vmatpush1.msra.mxu0 0.0
  %1266 = vmatprep.subr.mxu0 0.0
  %1267 = vmatpush1.msra.mxu0 0.0
  %1268 = vmatprep.subr.mxu0 0.0
  %1269 = vmatpush1.msra.mxu0 0.0
  %1270 = vmatprep.subr.mxu0 0.0
  %1271 = vmatpush1.msra.mxu0 0.0
  %1272 = vmatprep.subr.mxu0 0.0
  %1273 = vmatpush1.msra.mxu0 0.0
  %1274 = vmatprep.subr.mxu0 0.0
  %1275 = vmatpush1.msra.mxu0 0.0
  %1276 = vmatprep.subr.mxu0 0.0
  %1277 = vmatpush1.msra.mxu0 0.0
  %1278 = vmatprep.subr.mxu0 0.0
  %1279 = vmatpush1.msra.mxu0 0.0
  %1280 = vmatprep.subr.mxu0 0.0
  %1281 = vmatpush1.msra.mxu0 0.0
  %1282 = vmatprep.subr.mxu0 0.0
  %1283 = vmatpush1.msra.mxu0 0.0
  %1284 = vmatprep.subr.mxu0 0.0
  %1285 = vmatpush1.msra.mxu0 0.0
  %1286 = vmatprep.subr.mxu0 0.0
  %1287 = vmatpush1.msra.mxu0 0.0
  %1288 = vmatprep.subr.mxu0 0.0
  %1289 = vmatpush1.msra.mxu0 0.0
  %1290 = vmatprep.subr.mxu0 0.0
  %1291 = vmatpush1.msra.mxu0 0.0
  %1292 = vmatprep.subr.mxu0 0.0
  %1293 = vmatpush1.msra.mxu0 0.0
  %1294 = vmatprep.subr.mxu0 0.0
  %1295 = vmatpush1.msra.mxu0 0.0
  %1296 = vmatprep.subr.mxu0 0.0
  %1297 = vmatpush1.msra.mxu0 0.0
  %1298 = vmatprep.subr.mxu0 0.0
  %1299 = vmatpush1.msra.mxu0 0.0
  %1300 = vmatprep.subr.mxu0 0.0
  %1301 = vmatpush1.msra.mxu0 0.0
  %1302 = vmatprep.subr.mxu0 0.0
  %1303 = vmatpush1.msra.mxu0 0.0
  %1304 = vmatprep.subr.mxu0 0.0
  %1305 = vmatpush1.msra.mxu0 0.0
  %1306 = vmatprep.mubr.f32.mxu0 0.0
  %1307 = vmatmul.mubr.f32.gmra.mrb[0].mxu0 %v1240
  %v1308 = vpop.f32.mrb[0].mxu0
  %v1309 = vadd.f32 %v1237, %v1308
  %v1310 = vpop.f32.mrb[0].mxu0
  %1311 = vdwg.mxu0
  %v1312 = vmax.f32 %v1309, 0.0
  %s1313 = scalar_lea.vmem %s4, 128
  %v1314 = vld [vmem:[%s1313] sm:$0xff]
  %v1315 = vld [vmem:[%s1313 + $0x8] sm:$0xff]
  %v1316 = vld [vmem:[%s1313 + $0x10] sm:$0xff]
  %v1317 = vld [vmem:[%s1313 + $0x18] sm:$0xff]
  %v1318 = vlaneseq
  %v1319 = vshrl.u32 %v1318, 7
  %v1320 = vsub.s32 1, %v1319
  %v1321 = vrot.slane %v34, %v1320
  %v1323 = vsel %vm184, %v1312, 0
  %1325 = vmatprep.subr.mxu0 0.0
  %1326 = vmatpush1.msra.mxu0 %v1314
  %1327 = vmatprep.subr.mxu0 0.0
  %1328 = vmatpush1.msra.mxu0 %v1315
  %1329 = vmatprep.subr.mxu0 0.0
  %1330 = vmatpush1.msra.mxu0 %v1316
  %1331 = vmatprep.subr.mxu0 0.0
  %1332 = vmatpush1.msra.mxu0 %v1317
  %1333 = vmatprep.subr.mxu0 0.0
  %1334 = vmatpush1.msra.mxu0 0.0
  %1335 = vmatprep.subr.mxu0 0.0
  %1336 = vmatpush1.msra.mxu0 0.0
  %1337 = vmatprep.subr.mxu0 0.0
  %1338 = vmatpush1.msra.mxu0 0.0
  %1339 = vmatprep.subr.mxu0 0.0
  %1340 = vmatpush1.msra.mxu0 0.0
  %1341 = vmatprep.subr.mxu0 0.0
  %1342 = vmatpush1.msra.mxu0 0.0
  %1343 = vmatprep.subr.mxu0 0.0
  %1344 = vmatpush1.msra.mxu0 0.0
  %1345 = vmatprep.subr.mxu0 0.0
  %1346 = vmatpush1.msra.mxu0 0.0
  %1347 = vmatprep.subr.mxu0 0.0
  %1348 = vmatpush1.msra.mxu0 0.0
  %1349 = vmatprep.subr.mxu0 0.0
  %1350 = vmatpush1.msra.mxu0 0.0
  %1351 = vmatprep.subr.mxu0 0.0
  %1352 = vmatpush1.msra.mxu0 0.0
  %1353 = vmatprep.subr.mxu0 0.0
  %1354 = vmatpush1.msra.mxu0 0.0
  %1355 = vmatprep.subr.mxu0 0.0
  %1356 = vmatpush1.msra.mxu0 0.0
  %1357 = vmatprep.subr.mxu0 0.0
  %1358 = vmatpush1.msra.mxu0 0.0
  %1359 = vmatprep.subr.mxu0 0.0
  %1360 = vmatpush1.msra.mxu0 0.0
  %1361 = vmatprep.subr.mxu0 0.0
  %1362 = vmatpush1.msra.mxu0 0.0
  %1363 = vmatprep.subr.mxu0 0.0
  %1364 = vmatpush1.msra.mxu0 0.0
  %1365 = vmatprep.subr.mxu0 0.0
  %1366 = vmatpush1.msra.mxu0 0.0
  %1367 = vmatprep.subr.mxu0 0.0
  %1368 = vmatpush1.msra.mxu0 0.0
  %1369 = vmatprep.subr.mxu0 0.0
  %1370 = vmatpush1.msra.mxu0 0.0
  %1371 = vmatprep.subr.mxu0 0.0
  %1372 = vmatpush1.msra.mxu0 0.0
  %1373 = vmatprep.subr.mxu0 0.0
  %1374 = vmatpush1.msra.mxu0 0.0
  %1375 = vmatprep.subr.mxu0 0.0
  %1376 = vmatpush1.msra.mxu0 0.0
  %1377 = vmatprep.subr.mxu0 0.0
  %1378 = vmatpush1.msra.mxu0 0.0
  %1379 = vmatprep.subr.mxu0 0.0
  %1380 = vmatpush1.msra.mxu0 0.0
  %1381 = vmatprep.subr.mxu0 0.0
  %1382 = vmatpush1.msra.mxu0 0.0
  %1383 = vmatprep.subr.mxu0 0.0
  %1384 = vmatpush1.msra.mxu0 0.0
  %1385 = vmatprep.subr.mxu0 0.0
  %1386 = vmatpush1.msra.mxu0 0.0
  %1387 = vmatprep.subr.mxu0 0.0
  %1388 = vmatpush1.msra.mxu0 0.0
  %1389 = vmatprep.mubr.f32.mxu0 0.0
  %1390 = vmatmul.mubr.f32.gmra.mrb[0].mxu0 %v1323
  %v1391 = vpop.f32.mrb[0].mxu0
  %v1392 = vadd.f32 %v1321, %v1391
  %v1393 = vpop.f32.mrb[0].mxu0
  %1394 = vdwg.mxu0
  %v1395 = vmax.f32 %v1392, 0.0
  %v1396 = vsel %vm259, %v1395, 0.0
  %1397 = vadd.xlane.f32.xlu0 %v1396
  %v1398 = vpop.xlane.xlu0 %1397
  %v1399 = vmul.f32 %v1395, %v1395
  %v1400 = vsel %vm259, %v1399, 0.0
  %1401 = vadd.xlane.f32.xlu0 %v1400
  %v1402 = vpop.xlane.xlu0 %1401
  %v1403 = vmul.f32 %v1398, 0.0625
  %v1404 = vmul.f32 %v1402, 0.0625
  %v1405 = vmul.f32 %v1403, %v1403
  %v1406 = vsub.f32 %v1404, %v1405
  %v1407 = vsub.f32 %v1395, %v1403
  %v1408 = vadd.f32 %v1406, 1e-05
  %v1409 = vrsqrt.pop %v1408
  %v1410 = vmul.f32 %v1407, %v1409
  %v1411 = vlaneseq
  %v1412 = vshrl.u32 %v1411, 7
  %v1413 = vsub.s32 2, %v1412
  %v1414 = vrot.slane %v34, %v1413
  %v1415 = vmul.f32 %v1410, %v1414
  %v1416 = vlaneseq
  %v1417 = vshrl.u32 %v1416, 7
  %v1418 = vsub.s32 3, %v1417
  %v1419 = vrot.slane %v34, %v1418
  %v1420 = vadd.f32 %v1415, %v1419
  %v1421 = vsel %vm259, %v1420, 0.0
  %v1422 = vrot.slane %v1421, 4
  %v1423 = vadd.f32 %v1421, %v1422
  %v1424 = vrot.slane %v1423, 2
  %v1425 = vadd.f32 %v1423, %v1424
  %v1426 = vrot.slane %v1425, 1
  %v1427 = vadd.f32 %v1425, %v1426
  %v1428 = vrcp.pop 8.0
  %v1429 = vmul.f32 %v1427, %v1428
  %v1430 = vsel %vm259, %v1138, 0.0
  %v1431 = vsel %vm259, %v1139, 0.0
  %v1432 = vadd.f32 %v1430, %v1431
  %v1433 = vrot.slane %v1432, 4
  %v1434 = vadd.f32 %v1432, %v1433
  %v1435 = vrot.slane %v1434, 2
  %v1436 = vadd.f32 %v1434, %v1435
  %v1437 = vrot.slane %v1436, 1
  %v1438 = vadd.f32 %v1436, %v1437
  %v1439 = vrcp.pop 16.0
  %v1440 = vmul.f32 %v1438, %v1439
  %1442 = vrot.lane.b32.xlu0 %v1429, 32
  %v1443 = vpop.permute.xlu0 %1442
  %1446 = vrot.lane.b32.xlu0 %v1440, 48
  %v1447 = vpop.permute.xlu0 %1446
  %v1449 = vsel %vm184, %v712, %v1443
  %v1450 = vsel %vm1221, %v1449, %v1447
  %s1451 = scalar_lea.vmem %s3, 640
  %v1452 = vld [vmem:[%s1451] sm:$0xff]
  %v1453 = vld [vmem:[%s1451 + $0x8] sm:$0xff]
  %v1454 = vld [vmem:[%s1451 + $0x10] sm:$0xff]
  %v1455 = vld [vmem:[%s1451 + $0x18] sm:$0xff]
  %v1456 = vld [vmem:[%s1451 + $0x20] sm:$0xff]
  %v1457 = vld [vmem:[%s1451 + $0x28] sm:$0xff]
  %v1458 = vld [vmem:[%s1451 + $0x30] sm:$0xff]
  %v1459 = vld [vmem:[%s1451 + $0x38] sm:$0xff]
  %v1461 = vsel %vm902, %v1450, 0
  %1463 = vmatprep.subr.mxu0 0.0
  %1464 = vmatpush1.msra.mxu0 %v1452
  %1465 = vmatprep.subr.mxu0 0.0
  %1466 = vmatpush1.msra.mxu0 %v1453
  %1467 = vmatprep.subr.mxu0 0.0
  %1468 = vmatpush1.msra.mxu0 %v1454
  %1469 = vmatprep.subr.mxu0 0.0
  %1470 = vmatpush1.msra.mxu0 %v1455
  %1471 = vmatprep.subr.mxu0 0.0
  %1472 = vmatpush1.msra.mxu0 %v1456
  %1473 = vmatprep.subr.mxu0 0.0
  %1474 = vmatpush1.msra.mxu0 %v1457
  %1475 = vmatprep.subr.mxu0 0.0
  %1476 = vmatpush1.msra.mxu0 %v1458
  %1477 = vmatprep.subr.mxu0 0.0
  %1478 = vmatpush1.msra.mxu0 %v1459
  %1479 = vmatprep.subr.mxu0 0.0
  %1480 = vmatpush1.msra.mxu0 0.0
  %1481 = vmatprep.subr.mxu0 0.0
  %1482 = vmatpush1.msra.mxu0 0.0
  %1483 = vmatprep.subr.mxu0 0.0
  %1484 = vmatpush1.msra.mxu0 0.0
  %1485 = vmatprep.subr.mxu0 0.0
  %1486 = vmatpush1.msra.mxu0 0.0
  %1487 = vmatprep.subr.mxu0 0.0
  %1488 = vmatpush1.msra.mxu0 0.0
  %1489 = vmatprep.subr.mxu0 0.0
  %1490 = vmatpush1.msra.mxu0 0.0
  %1491 = vmatprep.subr.mxu0 0.0
  %1492 = vmatpush1.msra.mxu0 0.0
  %1493 = vmatprep.subr.mxu0 0.0
  %1494 = vmatpush1.msra.mxu0 0.0
  %1495 = vmatprep.subr.mxu0 0.0
  %1496 = vmatpush1.msra.mxu0 0.0
  %1497 = vmatprep.subr.mxu0 0.0
  %1498 = vmatpush1.msra.mxu0 0.0
  %1499 = vmatprep.subr.mxu0 0.0
  %1500 = vmatpush1.msra.mxu0 0.0
  %1501 = vmatprep.subr.mxu0 0.0
  %1502 = vmatpush1.msra.mxu0 0.0
  %1503 = vmatprep.subr.mxu0 0.0
  %1504 = vmatpush1.msra.mxu0 0.0
  %1505 = vmatprep.subr.mxu0 0.0
  %1506 = vmatpush1.msra.mxu0 0.0
  %1507 = vmatprep.subr.mxu0 0.0
  %1508 = vmatpush1.msra.mxu0 0.0
  %1509 = vmatprep.subr.mxu0 0.0
  %1510 = vmatpush1.msra.mxu0 0.0
  %1511 = vmatprep.subr.mxu0 0.0
  %1512 = vmatpush1.msra.mxu0 0.0
  %1513 = vmatprep.subr.mxu0 0.0
  %1514 = vmatpush1.msra.mxu0 0.0
  %1515 = vmatprep.subr.mxu0 0.0
  %1516 = vmatpush1.msra.mxu0 0.0
  %1517 = vmatprep.subr.mxu0 0.0
  %1518 = vmatpush1.msra.mxu0 0.0
  %1519 = vmatprep.subr.mxu0 0.0
  %1520 = vmatpush1.msra.mxu0 0.0
  %1521 = vmatprep.subr.mxu0 0.0
  %1522 = vmatpush1.msra.mxu0 0.0
  %1523 = vmatprep.subr.mxu0 0.0
  %1524 = vmatpush1.msra.mxu0 0.0
  %1525 = vmatprep.subr.mxu0 0.0
  %1526 = vmatpush1.msra.mxu0 0.0
  %1527 = vmatprep.mubr.f32.mxu0 0.0
  %1528 = vmatmul.mubr.f32.gmra.mrb[0].mxu0 %v1461
  %v1529 = vpop.f32.mrb[0].mxu0
  %v1530 = vadd.f32 %v36, %v1529
  %v1531 = vpop.f32.mrb[0].mxu0
  %1532 = vdwg.mxu0
  %v1533 = vmax.f32 %v1530, 0.0
  %s1534 = scalar_lea.vmem %s4, 160
  %v1535 = vld [vmem:[%s1534] sm:$0xff]
  %v1536 = vld [vmem:[%s1534 + $0x8] sm:$0xff]
  %v1537 = vld [vmem:[%s1534 + $0x10] sm:$0xff]
  %v1538 = vld [vmem:[%s1534 + $0x18] sm:$0xff]
  %v1540 = vrot.slane %v36, 1
  %v1543 = vsel %vm184, %v1533, 0
  %1545 = vmatprep.subr.mxu0 0.0
  %1546 = vmatpush1.msra.mxu0 %v1535
  %1547 = vmatprep.subr.mxu0 0.0
  %1548 = vmatpush1.msra.mxu0 %v1536
  %1549 = vmatprep.subr.mxu0 0.0
  %1550 = vmatpush1.msra.mxu0 %v1537
  %1551 = vmatprep.subr.mxu0 0.0
  %1552 = vmatpush1.msra.mxu0 %v1538
  %1553 = vmatprep.subr.mxu0 0.0
  %1554 = vmatpush1.msra.mxu0 0.0
  %1555 = vmatprep.subr.mxu0 0.0
  %1556 = vmatpush1.msra.mxu0 0.0
  %1557 = vmatprep.subr.mxu0 0.0
  %1558 = vmatpush1.msra.mxu0 0.0
  %1559 = vmatprep.subr.mxu0 0.0
  %1560 = vmatpush1.msra.mxu0 0.0
  %1561 = vmatprep.subr.mxu0 0.0
  %1562 = vmatpush1.msra.mxu0 0.0
  %1563 = vmatprep.subr.mxu0 0.0
  %1564 = vmatpush1.msra.mxu0 0.0
  %1565 = vmatprep.subr.mxu0 0.0
  %1566 = vmatpush1.msra.mxu0 0.0
  %1567 = vmatprep.subr.mxu0 0.0
  %1568 = vmatpush1.msra.mxu0 0.0
  %1569 = vmatprep.subr.mxu0 0.0
  %1570 = vmatpush1.msra.mxu0 0.0
  %1571 = vmatprep.subr.mxu0 0.0
  %1572 = vmatpush1.msra.mxu0 0.0
  %1573 = vmatprep.subr.mxu0 0.0
  %1574 = vmatpush1.msra.mxu0 0.0
  %1575 = vmatprep.subr.mxu0 0.0
  %1576 = vmatpush1.msra.mxu0 0.0
  %1577 = vmatprep.subr.mxu0 0.0
  %1578 = vmatpush1.msra.mxu0 0.0
  %1579 = vmatprep.subr.mxu0 0.0
  %1580 = vmatpush1.msra.mxu0 0.0
  %1581 = vmatprep.subr.mxu0 0.0
  %1582 = vmatpush1.msra.mxu0 0.0
  %1583 = vmatprep.subr.mxu0 0.0
  %1584 = vmatpush1.msra.mxu0 0.0
  %1585 = vmatprep.subr.mxu0 0.0
  %1586 = vmatpush1.msra.mxu0 0.0
  %1587 = vmatprep.subr.mxu0 0.0
  %1588 = vmatpush1.msra.mxu0 0.0
  %1589 = vmatprep.subr.mxu0 0.0
  %1590 = vmatpush1.msra.mxu0 0.0
  %1591 = vmatprep.subr.mxu0 0.0
  %1592 = vmatpush1.msra.mxu0 0.0
  %1593 = vmatprep.subr.mxu0 0.0
  %1594 = vmatpush1.msra.mxu0 0.0
  %1595 = vmatprep.subr.mxu0 0.0
  %1596 = vmatpush1.msra.mxu0 0.0
  %1597 = vmatprep.subr.mxu0 0.0
  %1598 = vmatpush1.msra.mxu0 0.0
  %1599 = vmatprep.subr.mxu0 0.0
  %1600 = vmatpush1.msra.mxu0 0.0
  %1601 = vmatprep.subr.mxu0 0.0
  %1602 = vmatpush1.msra.mxu0 0.0
  %1603 = vmatprep.subr.mxu0 0.0
  %1604 = vmatpush1.msra.mxu0 0.0
  %1605 = vmatprep.subr.mxu0 0.0
  %1606 = vmatpush1.msra.mxu0 0.0
  %1607 = vmatprep.subr.mxu0 0.0
  %1608 = vmatpush1.msra.mxu0 0.0
  %1609 = vmatprep.mubr.f32.mxu0 0.0
  %1610 = vmatmul.mubr.f32.gmra.mrb[0].mxu0 %v1543
  %v1611 = vpop.f32.mrb[0].mxu0
  %v1612 = vadd.f32 %v1540, %v1611
  %v1613 = vpop.f32.mrb[0].mxu0
  %1614 = vdwg.mxu0
  %v1615 = vmax.f32 %v1612, 0.0
  %v1616 = vsel %vm687, %v1615, 0.0
  %1617 = vadd.xlane.f32.xlu0 %v1616
  %v1618 = vpop.xlane.xlu0 %1617
  %v1619 = vmul.f32 %v1615, %v1615
  %v1620 = vsel %vm687, %v1619, 0.0
  %1621 = vadd.xlane.f32.xlu0 %v1620
  %v1622 = vpop.xlane.xlu0 %1621
  %v1623 = vmul.f32 %v1618, 0.0625
  %v1624 = vmul.f32 %v1622, 0.0625
  %v1625 = vmul.f32 %v1623, %v1623
  %v1626 = vsub.f32 %v1624, %v1625
  %v1627 = vsub.f32 %v1615, %v1623
  %v1628 = vadd.f32 %v1626, 1e-05
  %v1629 = vrsqrt.pop %v1628
  %v1630 = vmul.f32 %v1627, %v1629
  %v1631 = vrot.slane %v36, 2
  %v1633 = vmul.f32 %v1630, %v1631
  %v1634 = vrot.slane %v36, 3
  %v1636 = vadd.f32 %v1633, %v1634
  %1638 = vrot.lane.b32.xlu0 %v1420, 16
  %v1639 = vpop.permute.xlu0 %1638
  %v1641 = vsel %vm259, %v284, %v1639
  %1644 = vrot.lane.b32.xlu0 %v1138, 16
  %v1645 = vpop.permute.xlu0 %1644
  %1646 = vrot.lane.b32.xlu0 %v1139, 16
  %v1647 = vpop.permute.xlu0 %1646
  %v1650 = vsel %vm259, %v515, %v1645
  %v1651 = vsel %vm259, %v516, %v1647
  %1653 = vrot.lane.b32.xlu0 %v1636, 16
  %v1654 = vpop.permute.xlu0 %1653
  %v1656 = vsel %vm259, %v708, %v1654
  %1657 = vmatprep.subr.mxu0 0.0
  %1658 = vmatpush1.msra.mxu0 %v1641
  %1659 = vmatprep.subr.mxu0 0.0
  %1660 = vmatpush1.msra.mxu0 0.0
  %1661 = vmatprep.subr.mxu0 0.0
  %1662 = vmatpush1.msra.mxu0 0.0
  %1663 = vmatprep.subr.mxu0 0.0
  %1664 = vmatpush1.msra.mxu0 0.0
  %1665 = vmatprep.subr.mxu0 0.0
  %1666 = vmatpush1.msra.mxu0 0.0
  %1667 = vmatprep.subr.mxu0 0.0
  %1668 = vmatpush1.msra.mxu0 0.0
  %1669 = vmatprep.subr.mxu0 0.0
  %1670 = vmatpush1.msra.mxu0 0.0
  %1671 = vmatprep.subr.mxu0 0.0
  %1672 = vmatpush1.msra.mxu0 0.0
  %1673 = vmatprep.subr.mxu0 0.0
  %1674 = vmatpush1.msra.mxu0 0.0
  %1675 = vmatprep.subr.mxu0 0.0
  %1676 = vmatpush1.msra.mxu0 0.0
  %1677 = vmatprep.subr.mxu0 0.0
  %1678 = vmatpush1.msra.mxu0 0.0
  %1679 = vmatprep.subr.mxu0 0.0
  %1680 = vmatpush1.msra.mxu0 0.0
  %1681 = vmatprep.subr.mxu0 0.0
  %1682 = vmatpush1.msra.mxu0 0.0
  %1683 = vmatprep.subr.mxu0 0.0
  %1684 = vmatpush1.msra.mxu0 0.0
  %1685 = vmatprep.subr.mxu0 0.0
  %1686 = vmatpush1.msra.mxu0 0.0
  %1687 = vmatprep.subr.mxu0 0.0
  %1688 = vmatpush1.msra.mxu0 0.0
  %1689 = vmatprep.subr.mxu0 0.0
  %1690 = vmatpush1.msra.mxu0 0.0
  %1691 = vmatprep.subr.mxu0 0.0
  %1692 = vmatpush1.msra.mxu0 0.0
  %1693 = vmatprep.subr.mxu0 0.0
  %1694 = vmatpush1.msra.mxu0 0.0
  %1695 = vmatprep.subr.mxu0 0.0
  %1696 = vmatpush1.msra.mxu0 0.0
  %1697 = vmatprep.subr.mxu0 0.0
  %1698 = vmatpush1.msra.mxu0 0.0
  %1699 = vmatprep.subr.mxu0 0.0
  %1700 = vmatpush1.msra.mxu0 0.0
  %1701 = vmatprep.subr.mxu0 0.0
  %1702 = vmatpush1.msra.mxu0 0.0
  %1703 = vmatprep.subr.mxu0 0.0
  %1704 = vmatpush1.msra.mxu0 0.0
  %1705 = vmatprep.subr.mxu0 0.0
  %1706 = vmatpush1.msra.mxu0 0.0
  %1707 = vmatprep.subr.mxu0 0.0
  %1708 = vmatpush1.msra.mxu0 0.0
  %1709 = vmatprep.subr.mxu0 0.0
  %1710 = vmatpush1.msra.mxu0 0.0
  %1711 = vmatprep.subr.mxu0 0.0
  %1712 = vmatpush1.msra.mxu0 0.0
  %1713 = vmatprep.subr.mxu0 0.0
  %1714 = vmatpush1.msra.mxu0 0.0
  %1715 = vmatprep.subr.mxu0 0.0
  %1716 = vmatpush1.msra.mxu0 0.0
  %1717 = vmatprep.subr.mxu0 0.0
  %1718 = vmatpush1.msra.mxu0 0.0
  %1719 = vmatprep.subr.mxu0 0.0
  %1720 = vmatpush1.msra.mxu0 0.0
  %1721 = vmatprep.mubr.f32.mxu0 0.0
  %1722 = vmatmul.mubr.f32.gmra.mrb[0].mxu0 %v715
  %v1723 = vpop.f32.mrb[0].mxu0
  %v1724 = vadd.f32 0.0, %v1723
  %v1725 = vpop.f32.mrb[0].mxu0
  %1726 = vmatprep.mubr.f32.mxu0 0.0
  %1727 = vmatmul.mubr.f32.gmra.mrb[0].mxu0 %v718
  %v1728 = vpop.f32.mrb[0].mxu0
  %v1729 = vadd.f32 0.0, %v1728
  %v1730 = vpop.f32.mrb[0].mxu0
  %1731 = vdwg.mxu0
  %1732 = vmatprep.subr.mxu0 0.0
  %1733 = vmatpush1.msra.mxu0 %v1641
  %1734 = vmatprep.subr.mxu0 0.0
  %1735 = vmatpush1.msra.mxu0 0.0
  %1736 = vmatprep.subr.mxu0 0.0
  %1737 = vmatpush1.msra.mxu0 0.0
  %1738 = vmatprep.subr.mxu0 0.0
  %1739 = vmatpush1.msra.mxu0 0.0
  %1740 = vmatprep.subr.mxu0 0.0
  %1741 = vmatpush1.msra.mxu0 0.0
  %1742 = vmatprep.subr.mxu0 0.0
  %1743 = vmatpush1.msra.mxu0 0.0
  %1744 = vmatprep.subr.mxu0 0.0
  %1745 = vmatpush1.msra.mxu0 0.0
  %1746 = vmatprep.subr.mxu0 0.0
  %1747 = vmatpush1.msra.mxu0 0.0
  %1748 = vmatprep.subr.mxu0 0.0
  %1749 = vmatpush1.msra.mxu0 0.0
  %1750 = vmatprep.subr.mxu0 0.0
  %1751 = vmatpush1.msra.mxu0 0.0
  %1752 = vmatprep.subr.mxu0 0.0
  %1753 = vmatpush1.msra.mxu0 0.0
  %1754 = vmatprep.subr.mxu0 0.0
  %1755 = vmatpush1.msra.mxu0 0.0
  %1756 = vmatprep.subr.mxu0 0.0
  %1757 = vmatpush1.msra.mxu0 0.0
  %1758 = vmatprep.subr.mxu0 0.0
  %1759 = vmatpush1.msra.mxu0 0.0
  %1760 = vmatprep.subr.mxu0 0.0
  %1761 = vmatpush1.msra.mxu0 0.0
  %1762 = vmatprep.subr.mxu0 0.0
  %1763 = vmatpush1.msra.mxu0 0.0
  %1764 = vmatprep.subr.mxu0 0.0
  %1765 = vmatpush1.msra.mxu0 0.0
  %1766 = vmatprep.subr.mxu0 0.0
  %1767 = vmatpush1.msra.mxu0 0.0
  %1768 = vmatprep.subr.mxu0 0.0
  %1769 = vmatpush1.msra.mxu0 0.0
  %1770 = vmatprep.subr.mxu0 0.0
  %1771 = vmatpush1.msra.mxu0 0.0
  %1772 = vmatprep.subr.mxu0 0.0
  %1773 = vmatpush1.msra.mxu0 0.0
  %1774 = vmatprep.subr.mxu0 0.0
  %1775 = vmatpush1.msra.mxu0 0.0
  %1776 = vmatprep.subr.mxu0 0.0
  %1777 = vmatpush1.msra.mxu0 0.0
  %1778 = vmatprep.subr.mxu0 0.0
  %1779 = vmatpush1.msra.mxu0 0.0
  %1780 = vmatprep.subr.mxu0 0.0
  %1781 = vmatpush1.msra.mxu0 0.0
  %1782 = vmatprep.subr.mxu0 0.0
  %1783 = vmatpush1.msra.mxu0 0.0
  %1784 = vmatprep.subr.mxu0 0.0
  %1785 = vmatpush1.msra.mxu0 0.0
  %1786 = vmatprep.subr.mxu0 0.0
  %1787 = vmatpush1.msra.mxu0 0.0
  %1788 = vmatprep.subr.mxu0 0.0
  %1789 = vmatpush1.msra.mxu0 0.0
  %1790 = vmatprep.subr.mxu0 0.0
  %1791 = vmatpush1.msra.mxu0 0.0
  %1792 = vmatprep.subr.mxu0 0.0
  %1793 = vmatpush1.msra.mxu0 0.0
  %1794 = vmatprep.subr.mxu0 0.0
  %1795 = vmatpush1.msra.mxu0 0.0
  %1796 = vmatprep.mubr.f32.mxu0 0.0
  %1797 = vmatmul.mubr.f32.gmra.mrb[0].mxu0 %v796
  %v1798 = vpop.f32.mrb[0].mxu0
  %v1799 = vadd.f32 0.0, %v1798
  %v1800 = vpop.f32.mrb[0].mxu0
  %1801 = vmatprep.mubr.f32.mxu0 0.0
  %1802 = vmatmul.mubr.f32.gmra.mrb[0].mxu0 %v799
  %v1803 = vpop.f32.mrb[0].mxu0
  %v1804 = vadd.f32 0.0, %v1803
  %v1805 = vpop.f32.mrb[0].mxu0
  %1806 = vdwg.mxu0
  %v1807 = vlaneseq
  %v1808 = vshrl.u32 %v1807, 7
  %v1809 = vsub.s32 0, %v1808
  %v1810 = vrot.slane %v1656, %v1809
  %1813 = vrot.lane.b32.xlu0 %v1799, 32
  %v1814 = vpop.permute.xlu0 %1813
  %1815 = vrot.lane.b32.xlu0 %v1804, 32
  %v1816 = vpop.permute.xlu0 %1815
  %1821 = vrot.lane.b32.xlu0 %v1650, 64
  %v1822 = vpop.permute.xlu0 %1821
  %1823 = vrot.lane.b32.xlu0 %v1651, 64
  %v1824 = vpop.permute.xlu0 %1823
  %1828 = vrot.lane.b32.xlu0 %v1810, 96
  %v1829 = vpop.permute.xlu0 %1828
  %v1831 = vsel %vm184, %v1724, %v1814
  %v1832 = vsel %vm184, %v1729, %v1816
  %v1833 = vsel %vm902, %v1831, %v1822
  %v1834 = vsel %vm902, %v1832, %v1824
  %v1835 = vsel %vm905, %v1833, %v1829
  %v1836 = vsel %vm905, %v1834, %v1829
  %1837 = vmatprep.subr.mxu0 0.0
  %1838 = vmatpush1.msra.mxu0 %v909
  %1839 = vmatprep.subr.mxu0 0.0
  %1840 = vmatpush1.msra.mxu0 %v910
  %1841 = vmatprep.subr.mxu0 0.0
  %1842 = vmatpush1.msra.mxu0 %v911
  %1843 = vmatprep.subr.mxu0 0.0
  %1844 = vmatpush1.msra.mxu0 %v912
  %1845 = vmatprep.subr.mxu0 0.0
  %1846 = vmatpush1.msra.mxu0 %v913
  %1847 = vmatprep.subr.mxu0 0.0
  %1848 = vmatpush1.msra.mxu0 %v914
  %1849 = vmatprep.subr.mxu0 0.0
  %1850 = vmatpush1.msra.mxu0 %v915
  %1851 = vmatprep.subr.mxu0 0.0
  %1852 = vmatpush1.msra.mxu0 %v916
  %1853 = vmatprep.subr.mxu0 0.0
  %1854 = vmatpush1.msra.mxu0 %v917
  %1855 = vmatprep.subr.mxu0 0.0
  %1856 = vmatpush1.msra.mxu0 %v918
  %1857 = vmatprep.subr.mxu0 0.0
  %1858 = vmatpush1.msra.mxu0 %v919
  %1859 = vmatprep.subr.mxu0 0.0
  %1860 = vmatpush1.msra.mxu0 %v920
  %1861 = vmatprep.subr.mxu0 0.0
  %1862 = vmatpush1.msra.mxu0 %v921
  %1863 = vmatprep.subr.mxu0 0.0
  %1864 = vmatpush1.msra.mxu0 %v922
  %1865 = vmatprep.subr.mxu0 0.0
  %1866 = vmatpush1.msra.mxu0 %v923
  %1867 = vmatprep.subr.mxu0 0.0
  %1868 = vmatpush1.msra.mxu0 %v924
  %1869 = vmatprep.subr.mxu0 0.0
  %1870 = vmatpush1.msra.mxu0 0.0
  %1871 = vmatprep.subr.mxu0 0.0
  %1872 = vmatpush1.msra.mxu0 0.0
  %1873 = vmatprep.subr.mxu0 0.0
  %1874 = vmatpush1.msra.mxu0 0.0
  %1875 = vmatprep.subr.mxu0 0.0
  %1876 = vmatpush1.msra.mxu0 0.0
  %1877 = vmatprep.subr.mxu0 0.0
  %1878 = vmatpush1.msra.mxu0 0.0
  %1879 = vmatprep.subr.mxu0 0.0
  %1880 = vmatpush1.msra.mxu0 0.0
  %1881 = vmatprep.subr.mxu0 0.0
  %1882 = vmatpush1.msra.mxu0 0.0
  %1883 = vmatprep.subr.mxu0 0.0
  %1884 = vmatpush1.msra.mxu0 0.0
  %1885 = vmatprep.subr.mxu0 0.0
  %1886 = vmatpush1.msra.mxu0 0.0
  %1887 = vmatprep.subr.mxu0 0.0
  %1888 = vmatpush1.msra.mxu0 0.0
  %1889 = vmatprep.subr.mxu0 0.0
  %1890 = vmatpush1.msra.mxu0 0.0
  %1891 = vmatprep.subr.mxu0 0.0
  %1892 = vmatpush1.msra.mxu0 0.0
  %1893 = vmatprep.subr.mxu0 0.0
  %1894 = vmatpush1.msra.mxu0 0.0
  %1895 = vmatprep.subr.mxu0 0.0
  %1896 = vmatpush1.msra.mxu0 0.0
  %1897 = vmatprep.subr.mxu0 0.0
  %1898 = vmatpush1.msra.mxu0 0.0
  %1899 = vmatprep.subr.mxu0 0.0
  %1900 = vmatpush1.msra.mxu0 0.0
  %1901 = vmatprep.mubr.f32.mxu0 0.0
  %1902 = vmatmul.mubr.f32.gmra.mrb[0].mxu0 %v1835
  %v1903 = vpop.f32.mrb[0].mxu0
  %v1904 = vadd.f32 %v928, %v1903
  %v1905 = vpop.f32.mrb[0].mxu0
  %1906 = vmatprep.mubr.f32.mxu0 0.0
  %1907 = vmatmul.mubr.f32.gmra.mrb[0].mxu0 %v1836
  %v1908 = vpop.f32.mrb[0].mxu0
  %v1909 = vadd.f32 %v928, %v1908
  %v1910 = vpop.f32.mrb[0].mxu0
  %1911 = vdwg.mxu0
  %v1912 = vmax.f32 %v1904, 0.0
  %v1913 = vmax.f32 %v1909, 0.0
  %v1915 = vsel %vm184, %v1912, 0
  %v1918 = vsel %vm184, %v1913, 0
  %1920 = vmatprep.subr.mxu0 0.0
  %1921 = vmatpush1.msra.mxu0 %v1007
  %1922 = vmatprep.subr.mxu0 0.0
  %1923 = vmatpush1.msra.mxu0 %v1008
  %1924 = vmatprep.subr.mxu0 0.0
  %1925 = vmatpush1.msra.mxu0 %v1009
  %1926 = vmatprep.subr.mxu0 0.0
  %1927 = vmatpush1.msra.mxu0 %v1010
  %1928 = vmatprep.subr.mxu0 0.0
  %1929 = vmatpush1.msra.mxu0 0.0
  %1930 = vmatprep.subr.mxu0 0.0
  %1931 = vmatpush1.msra.mxu0 0.0
  %1932 = vmatprep.subr.mxu0 0.0
  %1933 = vmatpush1.msra.mxu0 0.0
  %1934 = vmatprep.subr.mxu0 0.0
  %1935 = vmatpush1.msra.mxu0 0.0
  %1936 = vmatprep.subr.mxu0 0.0
  %1937 = vmatpush1.msra.mxu0 0.0
  %1938 = vmatprep.subr.mxu0 0.0
  %1939 = vmatpush1.msra.mxu0 0.0
  %1940 = vmatprep.subr.mxu0 0.0
  %1941 = vmatpush1.msra.mxu0 0.0
  %1942 = vmatprep.subr.mxu0 0.0
  %1943 = vmatpush1.msra.mxu0 0.0
  %1944 = vmatprep.subr.mxu0 0.0
  %1945 = vmatpush1.msra.mxu0 0.0
  %1946 = vmatprep.subr.mxu0 0.0
  %1947 = vmatpush1.msra.mxu0 0.0
  %1948 = vmatprep.subr.mxu0 0.0
  %1949 = vmatpush1.msra.mxu0 0.0
  %1950 = vmatprep.subr.mxu0 0.0
  %1951 = vmatpush1.msra.mxu0 0.0
  %1952 = vmatprep.subr.mxu0 0.0
  %1953 = vmatpush1.msra.mxu0 0.0
  %1954 = vmatprep.subr.mxu0 0.0
  %1955 = vmatpush1.msra.mxu0 0.0
  %1956 = vmatprep.subr.mxu0 0.0
  %1957 = vmatpush1.msra.mxu0 0.0
  %1958 = vmatprep.subr.mxu0 0.0
  %1959 = vmatpush1.msra.mxu0 0.0
  %1960 = vmatprep.subr.mxu0 0.0
  %1961 = vmatpush1.msra.mxu0 0.0
  %1962 = vmatprep.subr.mxu0 0.0
  %1963 = vmatpush1.msra.mxu0 0.0
  %1964 = vmatprep.subr.mxu0 0.0
  %1965 = vmatpush1.msra.mxu0 0.0
  %1966 = vmatprep.subr.mxu0 0.0
  %1967 = vmatpush1.msra.mxu0 0.0
  %1968 = vmatprep.subr.mxu0 0.0
  %1969 = vmatpush1.msra.mxu0 0.0
  %1970 = vmatprep.subr.mxu0 0.0
  %1971 = vmatpush1.msra.mxu0 0.0
  %1972 = vmatprep.subr.mxu0 0.0
  %1973 = vmatpush1.msra.mxu0 0.0
  %1974 = vmatprep.subr.mxu0 0.0
  %1975 = vmatpush1.msra.mxu0 0.0
  %1976 = vmatprep.subr.mxu0 0.0
  %1977 = vmatpush1.msra.mxu0 0.0
  %1978 = vmatprep.subr.mxu0 0.0
  %1979 = vmatpush1.msra.mxu0 0.0
  %1980 = vmatprep.subr.mxu0 0.0
  %1981 = vmatpush1.msra.mxu0 0.0
  %1982 = vmatprep.subr.mxu0 0.0
  %1983 = vmatpush1.msra.mxu0 0.0
  %1984 = vmatprep.mubr.f32.mxu0 0.0
  %1985 = vmatmul.mubr.f32.gmra.mrb[0].mxu0 %v1915
  %v1986 = vpop.f32.mrb[0].mxu0
  %v1987 = vadd.f32 %v1014, %v1986
  %v1988 = vpop.f32.mrb[0].mxu0
  %1989 = vmatprep.mubr.f32.mxu0 0.0
  %1990 = vmatmul.mubr.f32.gmra.mrb[0].mxu0 %v1918
  %v1991 = vpop.f32.mrb[0].mxu0
  %v1992 = vadd.f32 %v1014, %v1991
  %v1993 = vpop.f32.mrb[0].mxu0
  %1994 = vdwg.mxu0
  %v1995 = vmax.f32 %v1987, 0.0
  %v1996 = vmax.f32 %v1992, 0.0
  %v1997 = vsel %vm259, %v1995, 0.0
  %1998 = vadd.xlane.f32.xlu0 %v1997
  %v1999 = vpop.xlane.xlu0 %1998
  %v2000 = vsel %vm259, %v1996, 0.0
  %2001 = vadd.xlane.f32.xlu0 %v2000
  %v2002 = vpop.xlane.xlu0 %2001
  %v2003 = vmul.f32 %v1995, %v1995
  %v2004 = vmul.f32 %v1996, %v1996
  %v2005 = vsel %vm259, %v2003, 0.0
  %2006 = vadd.xlane.f32.xlu0 %v2005
  %v2007 = vpop.xlane.xlu0 %2006
  %v2008 = vsel %vm259, %v2004, 0.0
  %2009 = vadd.xlane.f32.xlu0 %v2008
  %v2010 = vpop.xlane.xlu0 %2009
  %v2011 = vmul.f32 %v1999, 0.0625
  %v2012 = vmul.f32 %v2002, 0.0625
  %v2013 = vmul.f32 %v2007, 0.0625
  %v2014 = vmul.f32 %v2010, 0.0625
  %v2015 = vmul.f32 %v2011, %v2011
  %v2016 = vmul.f32 %v2012, %v2012
  %v2017 = vsub.f32 %v2013, %v2015
  %v2018 = vsub.f32 %v2014, %v2016
  %v2019 = vsub.f32 %v1995, %v2011
  %v2020 = vsub.f32 %v1996, %v2012
  %v2021 = vadd.f32 %v2017, 1e-05
  %v2022 = vadd.f32 %v2018, 1e-05
  %v2023 = vrsqrt.pop %v2021
  %v2024 = vrsqrt.pop %v2022
  %v2025 = vmul.f32 %v2019, %v2023
  %v2026 = vmul.f32 %v2020, %v2024
  %v2027 = vmul.f32 %v2025, %v1131
  %v2028 = vmul.f32 %v2026, %v1131
  %v2029 = vadd.f32 %v2027, %v1137
  %v2030 = vadd.f32 %v2028, %v1137
  %2031 = vmatprep.subr.mxu0 0.0
  %2032 = vmatpush1.msra.mxu0 %v2029
  %2033 = vmatprep.subr.mxu0 0.0
  %2034 = vmatpush1.msra.mxu0 %v2030
  %2035 = vmatprep.subr.mxu0 0.0
  %2036 = vmatpush1.msra.mxu0 0.0
  %2037 = vmatprep.subr.mxu0 0.0
  %2038 = vmatpush1.msra.mxu0 0.0
  %2039 = vmatprep.subr.mxu0 0.0
  %2040 = vmatpush1.msra.mxu0 0.0
  %2041 = vmatprep.subr.mxu0 0.0
  %2042 = vmatpush1.msra.mxu0 0.0
  %2043 = vmatprep.subr.mxu0 0.0
  %2044 = vmatpush1.msra.mxu0 0.0
  %2045 = vmatprep.subr.mxu0 0.0
  %2046 = vmatpush1.msra.mxu0 0.0
  %2047 = vmatprep.subr.mxu0 0.0
  %2048 = vmatpush1.msra.mxu0 0.0
  %2049 = vmatprep.subr.mxu0 0.0
  %2050 = vmatpush1.msra.mxu0 0.0
  %2051 = vmatprep.subr.mxu0 0.0
  %2052 = vmatpush1.msra.mxu0 0.0
  %2053 = vmatprep.subr.mxu0 0.0
  %2054 = vmatpush1.msra.mxu0 0.0
  %2055 = vmatprep.subr.mxu0 0.0
  %2056 = vmatpush1.msra.mxu0 0.0
  %2057 = vmatprep.subr.mxu0 0.0
  %2058 = vmatpush1.msra.mxu0 0.0
  %2059 = vmatprep.subr.mxu0 0.0
  %2060 = vmatpush1.msra.mxu0 0.0
  %2061 = vmatprep.subr.mxu0 0.0
  %2062 = vmatpush1.msra.mxu0 0.0
  %2063 = vmatprep.subr.mxu0 0.0
  %2064 = vmatpush1.msra.mxu0 0.0
  %2065 = vmatprep.subr.mxu0 0.0
  %2066 = vmatpush1.msra.mxu0 0.0
  %2067 = vmatprep.subr.mxu0 0.0
  %2068 = vmatpush1.msra.mxu0 0.0
  %2069 = vmatprep.subr.mxu0 0.0
  %2070 = vmatpush1.msra.mxu0 0.0
  %2071 = vmatprep.subr.mxu0 0.0
  %2072 = vmatpush1.msra.mxu0 0.0
  %2073 = vmatprep.subr.mxu0 0.0
  %2074 = vmatpush1.msra.mxu0 0.0
  %2075 = vmatprep.subr.mxu0 0.0
  %2076 = vmatpush1.msra.mxu0 0.0
  %2077 = vmatprep.subr.mxu0 0.0
  %2078 = vmatpush1.msra.mxu0 0.0
  %2079 = vmatprep.subr.mxu0 0.0
  %2080 = vmatpush1.msra.mxu0 0.0
  %2081 = vmatprep.subr.mxu0 0.0
  %2082 = vmatpush1.msra.mxu0 0.0
  %2083 = vmatprep.subr.mxu0 0.0
  %2084 = vmatpush1.msra.mxu0 0.0
  %2085 = vmatprep.subr.mxu0 0.0
  %2086 = vmatpush1.msra.mxu0 0.0
  %2087 = vmatprep.subr.mxu0 0.0
  %2088 = vmatpush1.msra.mxu0 0.0
  %2089 = vmatprep.subr.mxu0 0.0
  %2090 = vmatpush1.msra.mxu0 0.0
  %2091 = vmatprep.subr.mxu0 0.0
  %2092 = vmatpush1.msra.mxu0 0.0
  %2093 = vmatprep.subr.mxu0 0.0
  %2094 = vmatpush1.msra.mxu0 0.0
  %2095 = vmatprep.mubr.f32.mxu0 0.0
  %2096 = vmatmul.mubr.f32.gmra.mrb[0].mxu0 %v1141
  %v2097 = vpop.f32.mrb[0].mxu0
  %v2098 = vadd.f32 0.0, %v2097
  %v2099 = vpop.f32.mrb[0].mxu0
  %2100 = vdwg.mxu0
  %2102 = vrot.lane.b32.xlu0 %v2098, 32
  %v2103 = vpop.permute.xlu0 %2102
  %2105 = vrot.lane.b32.xlu0 %v1810, 48
  %v2106 = vpop.permute.xlu0 %2105
  %v2108 = vsel %vm184, %v1641, %v2103
  %v2109 = vsel %vm1221, %v2108, %v2106
  %v2111 = vsel %vm1238, %v2109, 0
  %2113 = vmatprep.subr.mxu0 0.0
  %2114 = vmatpush1.msra.mxu0 %v1224
  %2115 = vmatprep.subr.mxu0 0.0
  %2116 = vmatpush1.msra.mxu0 %v1225
  %2117 = vmatprep.subr.mxu0 0.0
  %2118 = vmatpush1.msra.mxu0 %v1226
  %2119 = vmatprep.subr.mxu0 0.0
  %2120 = vmatpush1.msra.mxu0 %v1227
  %2121 = vmatprep.subr.mxu0 0.0
  %2122 = vmatpush1.msra.mxu0 %v1228
  %2123 = vmatprep.subr.mxu0 0.0
  %2124 = vmatpush1.msra.mxu0 %v1229
  %2125 = vmatprep.subr.mxu0 0.0
  %2126 = vmatpush1.msra.mxu0 %v1230
  %2127 = vmatprep.subr.mxu0 0.0
  %2128 = vmatpush1.msra.mxu0 %v1231
  %2129 = vmatprep.subr.mxu0 0.0
  %2130 = vmatpush1.msra.mxu0 %v1232
  %2131 = vmatprep.subr.mxu0 0.0
  %2132 = vmatpush1.msra.mxu0 %v1233
  %2133 = vmatprep.subr.mxu0 0.0
  %2134 = vmatpush1.msra.mxu0 0.0
  %2135 = vmatprep.subr.mxu0 0.0
  %2136 = vmatpush1.msra.mxu0 0.0
  %2137 = vmatprep.subr.mxu0 0.0
  %2138 = vmatpush1.msra.mxu0 0.0
  %2139 = vmatprep.subr.mxu0 0.0
  %2140 = vmatpush1.msra.mxu0 0.0
  %2141 = vmatprep.subr.mxu0 0.0
  %2142 = vmatpush1.msra.mxu0 0.0
  %2143 = vmatprep.subr.mxu0 0.0
  %2144 = vmatpush1.msra.mxu0 0.0
  %2145 = vmatprep.subr.mxu0 0.0
  %2146 = vmatpush1.msra.mxu0 0.0
  %2147 = vmatprep.subr.mxu0 0.0
  %2148 = vmatpush1.msra.mxu0 0.0
  %2149 = vmatprep.subr.mxu0 0.0
  %2150 = vmatpush1.msra.mxu0 0.0
  %2151 = vmatprep.subr.mxu0 0.0
  %2152 = vmatpush1.msra.mxu0 0.0
  %2153 = vmatprep.subr.mxu0 0.0
  %2154 = vmatpush1.msra.mxu0 0.0
  %2155 = vmatprep.subr.mxu0 0.0
  %2156 = vmatpush1.msra.mxu0 0.0
  %2157 = vmatprep.subr.mxu0 0.0
  %2158 = vmatpush1.msra.mxu0 0.0
  %2159 = vmatprep.subr.mxu0 0.0
  %2160 = vmatpush1.msra.mxu0 0.0
  %2161 = vmatprep.subr.mxu0 0.0
  %2162 = vmatpush1.msra.mxu0 0.0
  %2163 = vmatprep.subr.mxu0 0.0
  %2164 = vmatpush1.msra.mxu0 0.0
  %2165 = vmatprep.subr.mxu0 0.0
  %2166 = vmatpush1.msra.mxu0 0.0
  %2167 = vmatprep.subr.mxu0 0.0
  %2168 = vmatpush1.msra.mxu0 0.0
  %2169 = vmatprep.subr.mxu0 0.0
  %2170 = vmatpush1.msra.mxu0 0.0
  %2171 = vmatprep.subr.mxu0 0.0
  %2172 = vmatpush1.msra.mxu0 0.0
  %2173 = vmatprep.subr.mxu0 0.0
  %2174 = vmatpush1.msra.mxu0 0.0
  %2175 = vmatprep.subr.mxu0 0.0
  %2176 = vmatpush1.msra.mxu0 0.0
  %2177 = vmatprep.mubr.f32.mxu0 0.0
  %2178 = vmatmul.mubr.f32.gmra.mrb[0].mxu0 %v2111
  %v2179 = vpop.f32.mrb[0].mxu0
  %v2180 = vadd.f32 %v1237, %v2179
  %v2181 = vpop.f32.mrb[0].mxu0
  %2182 = vdwg.mxu0
  %v2183 = vmax.f32 %v2180, 0.0
  %v2185 = vsel %vm184, %v2183, 0
  %2187 = vmatprep.subr.mxu0 0.0
  %2188 = vmatpush1.msra.mxu0 %v1314
  %2189 = vmatprep.subr.mxu0 0.0
  %2190 = vmatpush1.msra.mxu0 %v1315
  %2191 = vmatprep.subr.mxu0 0.0
  %2192 = vmatpush1.msra.mxu0 %v1316
  %2193 = vmatprep.subr.mxu0 0.0
  %2194 = vmatpush1.msra.mxu0 %v1317
  %2195 = vmatprep.subr.mxu0 0.0
  %2196 = vmatpush1.msra.mxu0 0.0
  %2197 = vmatprep.subr.mxu0 0.0
  %2198 = vmatpush1.msra.mxu0 0.0
  %2199 = vmatprep.subr.mxu0 0.0
  %2200 = vmatpush1.msra.mxu0 0.0
  %2201 = vmatprep.subr.mxu0 0.0
  %2202 = vmatpush1.msra.mxu0 0.0
  %2203 = vmatprep.subr.mxu0 0.0
  %2204 = vmatpush1.msra.mxu0 0.0
  %2205 = vmatprep.subr.mxu0 0.0
  %2206 = vmatpush1.msra.mxu0 0.0
  %2207 = vmatprep.subr.mxu0 0.0
  %2208 = vmatpush1.msra.mxu0 0.0
  %2209 = vmatprep.subr.mxu0 0.0
  %2210 = vmatpush1.msra.mxu0 0.0
  %2211 = vmatprep.subr.mxu0 0.0
  %2212 = vmatpush1.msra.mxu0 0.0
  %2213 = vmatprep.subr.mxu0 0.0
  %2214 = vmatpush1.msra.mxu0 0.0
  %2215 = vmatprep.subr.mxu0 0.0
  %2216 = vmatpush1.msra.mxu0 0.0
  %2217 = vmatprep.subr.mxu0 0.0
  %2218 = vmatpush1.msra.mxu0 0.0
  %2219 = vmatprep.subr.mxu0 0.0
  %2220 = vmatpush1.msra.mxu0 0.0
  %2221 = vmatprep.subr.mxu0 0.0
  %2222 = vmatpush1.msra.mxu0 0.0
  %2223 = vmatprep.subr.mxu0 0.0
  %2224 = vmatpush1.msra.mxu0 0.0
  %2225 = vmatprep.subr.mxu0 0.0
  %2226 = vmatpush1.msra.mxu0 0.0
  %2227 = vmatprep.subr.mxu0 0.0
  %2228 = vmatpush1.msra.mxu0 0.0
  %2229 = vmatprep.subr.mxu0 0.0
  %2230 = vmatpush1.msra.mxu0 0.0
  %2231 = vmatprep.subr.mxu0 0.0
  %2232 = vmatpush1.msra.mxu0 0.0
  %2233 = vmatprep.subr.mxu0 0.0
  %2234 = vmatpush1.msra.mxu0 0.0
  %2235 = vmatprep.subr.mxu0 0.0
  %2236 = vmatpush1.msra.mxu0 0.0
  %2237 = vmatprep.subr.mxu0 0.0
  %2238 = vmatpush1.msra.mxu0 0.0
  %2239 = vmatprep.subr.mxu0 0.0
  %2240 = vmatpush1.msra.mxu0 0.0
  %2241 = vmatprep.subr.mxu0 0.0
  %2242 = vmatpush1.msra.mxu0 0.0
  %2243 = vmatprep.subr.mxu0 0.0
  %2244 = vmatpush1.msra.mxu0 0.0
  %2245 = vmatprep.subr.mxu0 0.0
  %2246 = vmatpush1.msra.mxu0 0.0
  %2247 = vmatprep.subr.mxu0 0.0
  %2248 = vmatpush1.msra.mxu0 0.0
  %2249 = vmatprep.subr.mxu0 0.0
  %2250 = vmatpush1.msra.mxu0 0.0
  %2251 = vmatprep.mubr.f32.mxu0 0.0
  %2252 = vmatmul.mubr.f32.gmra.mrb[0].mxu0 %v2185
  %v2253 = vpop.f32.mrb[0].mxu0
  %v2254 = vadd.f32 %v1321, %v2253
  %v2255 = vpop.f32.mrb[0].mxu0
  %2256 = vdwg.mxu0
  %v2257 = vmax.f32 %v2254, 0.0
  %v2258 = vsel %vm259, %v2257, 0.0
  %2259 = vadd.xlane.f32.xlu0 %v2258
  %v2260 = vpop.xlane.xlu0 %2259
  %v2261 = vmul.f32 %v2257, %v2257
  %v2262 = vsel %vm259, %v2261, 0.0
  %2263 = vadd.xlane.f32.xlu0 %v2262
  %v2264 = vpop.xlane.xlu0 %2263
  %v2265 = vmul.f32 %v2260, 0.0625
  %v2266 = vmul.f32 %v2264, 0.0625
  %v2267 = vmul.f32 %v2265, %v2265
  %v2268 = vsub.f32 %v2266, %v2267
  %v2269 = vsub.f32 %v2257, %v2265
  %v2270 = vadd.f32 %v2268, 1e-05
  %v2271 = vrsqrt.pop %v2270
  %v2272 = vmul.f32 %v2269, %v2271
  %v2273 = vmul.f32 %v2272, %v1414
  %v2274 = vadd.f32 %v2273, %v1419
  %v2275 = vsel %vm259, %v2274, 0.0
  %v2276 = vrot.slane %v2275, 4
  %v2277 = vadd.f32 %v2275, %v2276
  %v2278 = vrot.slane %v2277, 2
  %v2279 = vadd.f32 %v2277, %v2278
  %v2280 = vrot.slane %v2279, 1
  %v2281 = vadd.f32 %v2279, %v2280
  %v2282 = vmul.f32 %v2281, %v1428
  %v2283 = vsel %vm259, %v2029, 0.0
  %v2284 = vsel %vm259, %v2030, 0.0
  %v2285 = vadd.f32 %v2283, %v2284
  %v2286 = vrot.slane %v2285, 4
  %v2287 = vadd.f32 %v2285, %v2286
  %v2288 = vrot.slane %v2287, 2
  %v2289 = vadd.f32 %v2287, %v2288
  %v2290 = vrot.slane %v2289, 1
  %v2291 = vadd.f32 %v2289, %v2290
  %v2292 = vmul.f32 %v2291, %v1439
  %2294 = vrot.lane.b32.xlu0 %v2282, 32
  %v2295 = vpop.permute.xlu0 %2294
  %2298 = vrot.lane.b32.xlu0 %v2292, 48
  %v2299 = vpop.permute.xlu0 %2298
  %v2301 = vsel %vm184, %v1656, %v2295
  %v2302 = vsel %vm1221, %v2301, %v2299
  %v2304 = vsel %vm902, %v2302, 0
  %2306 = vmatprep.subr.mxu0 0.0
  %2307 = vmatpush1.msra.mxu0 %v1452
  %2308 = vmatprep.subr.mxu0 0.0
  %2309 = vmatpush1.msra.mxu0 %v1453
  %2310 = vmatprep.subr.mxu0 0.0
  %2311 = vmatpush1.msra.mxu0 %v1454
  %2312 = vmatprep.subr.mxu0 0.0
  %2313 = vmatpush1.msra.mxu0 %v1455
  %2314 = vmatprep.subr.mxu0 0.0
  %2315 = vmatpush1.msra.mxu0 %v1456
  %2316 = vmatprep.subr.mxu0 0.0
  %2317 = vmatpush1.msra.mxu0 %v1457
  %2318 = vmatprep.subr.mxu0 0.0
  %2319 = vmatpush1.msra.mxu0 %v1458
  %2320 = vmatprep.subr.mxu0 0.0
  %2321 = vmatpush1.msra.mxu0 %v1459
  %2322 = vmatprep.subr.mxu0 0.0
  %2323 = vmatpush1.msra.mxu0 0.0
  %2324 = vmatprep.subr.mxu0 0.0
  %2325 = vmatpush1.msra.mxu0 0.0
  %2326 = vmatprep.subr.mxu0 0.0
  %2327 = vmatpush1.msra.mxu0 0.0
  %2328 = vmatprep.subr.mxu0 0.0
  %2329 = vmatpush1.msra.mxu0 0.0
  %2330 = vmatprep.subr.mxu0 0.0
  %2331 = vmatpush1.msra.mxu0 0.0
  %2332 = vmatprep.subr.mxu0 0.0
  %2333 = vmatpush1.msra.mxu0 0.0
  %2334 = vmatprep.subr.mxu0 0.0
  %2335 = vmatpush1.msra.mxu0 0.0
  %2336 = vmatprep.subr.mxu0 0.0
  %2337 = vmatpush1.msra.mxu0 0.0
  %2338 = vmatprep.subr.mxu0 0.0
  %2339 = vmatpush1.msra.mxu0 0.0
  %2340 = vmatprep.subr.mxu0 0.0
  %2341 = vmatpush1.msra.mxu0 0.0
  %2342 = vmatprep.subr.mxu0 0.0
  %2343 = vmatpush1.msra.mxu0 0.0
  %2344 = vmatprep.subr.mxu0 0.0
  %2345 = vmatpush1.msra.mxu0 0.0
  %2346 = vmatprep.subr.mxu0 0.0
  %2347 = vmatpush1.msra.mxu0 0.0
  %2348 = vmatprep.subr.mxu0 0.0
  %2349 = vmatpush1.msra.mxu0 0.0
  %2350 = vmatprep.subr.mxu0 0.0
  %2351 = vmatpush1.msra.mxu0 0.0
  %2352 = vmatprep.subr.mxu0 0.0
  %2353 = vmatpush1.msra.mxu0 0.0
  %2354 = vmatprep.subr.mxu0 0.0
  %2355 = vmatpush1.msra.mxu0 0.0
  %2356 = vmatprep.subr.mxu0 0.0
  %2357 = vmatpush1.msra.mxu0 0.0
  %2358 = vmatprep.subr.mxu0 0.0
  %2359 = vmatpush1.msra.mxu0 0.0
  %2360 = vmatprep.subr.mxu0 0.0
  %2361 = vmatpush1.msra.mxu0 0.0
  %2362 = vmatprep.subr.mxu0 0.0
  %2363 = vmatpush1.msra.mxu0 0.0
  %2364 = vmatprep.subr.mxu0 0.0
  %2365 = vmatpush1.msra.mxu0 0.0
  %2366 = vmatprep.subr.mxu0 0.0
  %2367 = vmatpush1.msra.mxu0 0.0
  %2368 = vmatprep.subr.mxu0 0.0
  %2369 = vmatpush1.msra.mxu0 0.0
  %2370 = vmatprep.mubr.f32.mxu0 0.0
  %2371 = vmatmul.mubr.f32.gmra.mrb[0].mxu0 %v2304
  %v2372 = vpop.f32.mrb[0].mxu0
  %v2373 = vadd.f32 %v36, %v2372
  %v2374 = vpop.f32.mrb[0].mxu0
  %2375 = vdwg.mxu0
  %v2376 = vmax.f32 %v2373, 0.0
  %v2378 = vsel %vm184, %v2376, 0
  %2380 = vmatprep.subr.mxu0 0.0
  %2381 = vmatpush1.msra.mxu0 %v1535
  %2382 = vmatprep.subr.mxu0 0.0
  %2383 = vmatpush1.msra.mxu0 %v1536
  %2384 = vmatprep.subr.mxu0 0.0
  %2385 = vmatpush1.msra.mxu0 %v1537
  %2386 = vmatprep.subr.mxu0 0.0
  %2387 = vmatpush1.msra.mxu0 %v1538
  %2388 = vmatprep.subr.mxu0 0.0
  %2389 = vmatpush1.msra.mxu0 0.0
  %2390 = vmatprep.subr.mxu0 0.0
  %2391 = vmatpush1.msra.mxu0 0.0
  %2392 = vmatprep.subr.mxu0 0.0
  %2393 = vmatpush1.msra.mxu0 0.0
  %2394 = vmatprep.subr.mxu0 0.0
  %2395 = vmatpush1.msra.mxu0 0.0
  %2396 = vmatprep.subr.mxu0 0.0
  %2397 = vmatpush1.msra.mxu0 0.0
  %2398 = vmatprep.subr.mxu0 0.0
  %2399 = vmatpush1.msra.mxu0 0.0
  %2400 = vmatprep.subr.mxu0 0.0
  %2401 = vmatpush1.msra.mxu0 0.0
  %2402 = vmatprep.subr.mxu0 0.0
  %2403 = vmatpush1.msra.mxu0 0.0
  %2404 = vmatprep.subr.mxu0 0.0
  %2405 = vmatpush1.msra.mxu0 0.0
  %2406 = vmatprep.subr.mxu0 0.0
  %2407 = vmatpush1.msra.mxu0 0.0
  %2408 = vmatprep.subr.mxu0 0.0
  %2409 = vmatpush1.msra.mxu0 0.0
  %2410 = vmatprep.subr.mxu0 0.0
  %2411 = vmatpush1.msra.mxu0 0.0
  %2412 = vmatprep.subr.mxu0 0.0
  %2413 = vmatpush1.msra.mxu0 0.0
  %2414 = vmatprep.subr.mxu0 0.0
  %2415 = vmatpush1.msra.mxu0 0.0
  %2416 = vmatprep.subr.mxu0 0.0
  %2417 = vmatpush1.msra.mxu0 0.0
  %2418 = vmatprep.subr.mxu0 0.0
  %2419 = vmatpush1.msra.mxu0 0.0
  %2420 = vmatprep.subr.mxu0 0.0
  %2421 = vmatpush1.msra.mxu0 0.0
  %2422 = vmatprep.subr.mxu0 0.0
  %2423 = vmatpush1.msra.mxu0 0.0
  %2424 = vmatprep.subr.mxu0 0.0
  %2425 = vmatpush1.msra.mxu0 0.0
  %2426 = vmatprep.subr.mxu0 0.0
  %2427 = vmatpush1.msra.mxu0 0.0
  %2428 = vmatprep.subr.mxu0 0.0
  %2429 = vmatpush1.msra.mxu0 0.0
  %2430 = vmatprep.subr.mxu0 0.0
  %2431 = vmatpush1.msra.mxu0 0.0
  %2432 = vmatprep.subr.mxu0 0.0
  %2433 = vmatpush1.msra.mxu0 0.0
  %2434 = vmatprep.subr.mxu0 0.0
  %2435 = vmatpush1.msra.mxu0 0.0
  %2436 = vmatprep.subr.mxu0 0.0
  %2437 = vmatpush1.msra.mxu0 0.0
  %2438 = vmatprep.subr.mxu0 0.0
  %2439 = vmatpush1.msra.mxu0 0.0
  %2440 = vmatprep.subr.mxu0 0.0
  %2441 = vmatpush1.msra.mxu0 0.0
  %2442 = vmatprep.subr.mxu0 0.0
  %2443 = vmatpush1.msra.mxu0 0.0
  %2444 = vmatprep.mubr.f32.mxu0 0.0
  %2445 = vmatmul.mubr.f32.gmra.mrb[0].mxu0 %v2378
  %v2446 = vpop.f32.mrb[0].mxu0
  %v2447 = vadd.f32 %v1540, %v2446
  %v2448 = vpop.f32.mrb[0].mxu0
  %2449 = vdwg.mxu0
  %v2450 = vmax.f32 %v2447, 0.0
  %v2451 = vsel %vm687, %v2450, 0.0
  %2452 = vadd.xlane.f32.xlu0 %v2451
  %v2453 = vpop.xlane.xlu0 %2452
  %v2454 = vmul.f32 %v2450, %v2450
  %v2455 = vsel %vm687, %v2454, 0.0
  %2456 = vadd.xlane.f32.xlu0 %v2455
  %v2457 = vpop.xlane.xlu0 %2456
  %v2458 = vmul.f32 %v2453, 0.0625
  %v2459 = vmul.f32 %v2457, 0.0625
  %v2460 = vmul.f32 %v2458, %v2458
  %v2461 = vsub.f32 %v2459, %v2460
  %v2462 = vsub.f32 %v2450, %v2458
  %v2463 = vadd.f32 %v2461, 1e-05
  %v2464 = vrsqrt.pop %v2463
  %v2465 = vmul.f32 %v2462, %v2464
  %v2466 = vmul.f32 %v2465, %v1631
  %v2467 = vadd.f32 %v2466, %v1634
  %s2468 = scalar_lea.vmem %s3, 768
  %v2469 = vld [vmem:[%s2468] sm:$0xff]
  %v2470 = vld [vmem:[%s2468 + $0x8] sm:$0xff]
  %v2471 = vlaneseq
  %v2472 = vshrl.u32 %v2471, 7
  %v2473 = vsub.s32 0, %v2472
  %v2474 = vrot.slane %v38, %v2473
  %v2476 = vsel %vm259, %v2274, 0
  %2478 = vmatprep.subr.mxu0 0.0
  %2479 = vmatpush1.msra.mxu0 %v2469
  %2480 = vmatprep.subr.mxu0 0.0
  %2481 = vmatpush1.msra.mxu0 %v2470
  %2482 = vmatprep.subr.mxu0 0.0
  %2483 = vmatpush1.msra.mxu0 0.0
  %2484 = vmatprep.subr.mxu0 0.0
  %2485 = vmatpush1.msra.mxu0 0.0
  %2486 = vmatprep.subr.mxu0 0.0
  %2487 = vmatpush1.msra.mxu0 0.0
  %2488 = vmatprep.subr.mxu0 0.0
  %2489 = vmatpush1.msra.mxu0 0.0
  %2490 = vmatprep.subr.mxu0 0.0
  %2491 = vmatpush1.msra.mxu0 0.0
  %2492 = vmatprep.subr.mxu0 0.0
  %2493 = vmatpush1.msra.mxu0 0.0
  %2494 = vmatprep.subr.mxu0 0.0
  %2495 = vmatpush1.msra.mxu0 0.0
  %2496 = vmatprep.subr.mxu0 0.0
  %2497 = vmatpush1.msra.mxu0 0.0
  %2498 = vmatprep.subr.mxu0 0.0
  %2499 = vmatpush1.msra.mxu0 0.0
  %2500 = vmatprep.subr.mxu0 0.0
  %2501 = vmatpush1.msra.mxu0 0.0
  %2502 = vmatprep.subr.mxu0 0.0
  %2503 = vmatpush1.msra.mxu0 0.0
  %2504 = vmatprep.subr.mxu0 0.0
  %2505 = vmatpush1.msra.mxu0 0.0
  %2506 = vmatprep.subr.mxu0 0.0
  %2507 = vmatpush1.msra.mxu0 0.0
  %2508 = vmatprep.subr.mxu0 0.0
  %2509 = vmatpush1.msra.mxu0 0.0
  %2510 = vmatprep.subr.mxu0 0.0
  %2511 = vmatpush1.msra.mxu0 0.0
  %2512 = vmatprep.subr.mxu0 0.0
  %2513 = vmatpush1.msra.mxu0 0.0
  %2514 = vmatprep.subr.mxu0 0.0
  %2515 = vmatpush1.msra.mxu0 0.0
  %2516 = vmatprep.subr.mxu0 0.0
  %2517 = vmatpush1.msra.mxu0 0.0
  %2518 = vmatprep.subr.mxu0 0.0
  %2519 = vmatpush1.msra.mxu0 0.0
  %2520 = vmatprep.subr.mxu0 0.0
  %2521 = vmatpush1.msra.mxu0 0.0
  %2522 = vmatprep.subr.mxu0 0.0
  %2523 = vmatpush1.msra.mxu0 0.0
  %2524 = vmatprep.subr.mxu0 0.0
  %2525 = vmatpush1.msra.mxu0 0.0
  %2526 = vmatprep.subr.mxu0 0.0
  %2527 = vmatpush1.msra.mxu0 0.0
  %2528 = vmatprep.subr.mxu0 0.0
  %2529 = vmatpush1.msra.mxu0 0.0
  %2530 = vmatprep.subr.mxu0 0.0
  %2531 = vmatpush1.msra.mxu0 0.0
  %2532 = vmatprep.subr.mxu0 0.0
  %2533 = vmatpush1.msra.mxu0 0.0
  %2534 = vmatprep.subr.mxu0 0.0
  %2535 = vmatpush1.msra.mxu0 0.0
  %2536 = vmatprep.subr.mxu0 0.0
  %2537 = vmatpush1.msra.mxu0 0.0
  %2538 = vmatprep.subr.mxu0 0.0
  %2539 = vmatpush1.msra.mxu0 0.0
  %2540 = vmatprep.subr.mxu0 0.0
  %2541 = vmatpush1.msra.mxu0 0.0
  %2542 = vmatprep.mubr.f32.mxu0 0.0
  %2543 = vmatmul.mubr.f32.gmra.mrb[0].mxu0 %v2476
  %v2544 = vpop.f32.mrb[0].mxu0
  %v2545 = vadd.f32 %v2474, %v2544
  %v2546 = vpop.f32.mrb[0].mxu0
  %2547 = vdwg.mxu0
  %v2548 = vmax.f32 %v2545, 0.0
  %s2549 = scalar_lea.vmem %s4, 192
  %v2550 = vld [vmem:[%s2549] sm:$0xff]
  %v2551 = vld [vmem:[%s2549 + $0x8] sm:$0xff]
  %v2552 = vld [vmem:[%s2549 + $0x10] sm:$0xff]
  %v2553 = vld [vmem:[%s2549 + $0x18] sm:$0xff]
  %v2554 = vlaneseq
  %v2555 = vshrl.u32 %v2554, 7
  %v2556 = vsub.s32 1, %v2555
  %v2557 = vrot.slane %v38, %v2556
  %v2559 = vsel %vm184, %v2548, 0
  %2561 = vmatprep.subr.mxu0 0.0
  %2562 = vmatpush1.msra.mxu0 %v2550
  %2563 = vmatprep.subr.mxu0 0.0
  %2564 = vmatpush1.msra.mxu0 %v2551
  %2565 = vmatprep.subr.mxu0 0.0
  %2566 = vmatpush1.msra.mxu0 %v2552
  %2567 = vmatprep.subr.mxu0 0.0
  %2568 = vmatpush1.msra.mxu0 %v2553
  %2569 = vmatprep.subr.mxu0 0.0
  %2570 = vmatpush1.msra.mxu0 0.0
  %2571 = vmatprep.subr.mxu0 0.0
  %2572 = vmatpush1.msra.mxu0 0.0
  %2573 = vmatprep.subr.mxu0 0.0
  %2574 = vmatpush1.msra.mxu0 0.0
  %2575 = vmatprep.subr.mxu0 0.0
  %2576 = vmatpush1.msra.mxu0 0.0
  %2577 = vmatprep.subr.mxu0 0.0
  %2578 = vmatpush1.msra.mxu0 0.0
  %2579 = vmatprep.subr.mxu0 0.0
  %2580 = vmatpush1.msra.mxu0 0.0
  %2581 = vmatprep.subr.mxu0 0.0
  %2582 = vmatpush1.msra.mxu0 0.0
  %2583 = vmatprep.subr.mxu0 0.0
  %2584 = vmatpush1.msra.mxu0 0.0
  %2585 = vmatprep.subr.mxu0 0.0
  %2586 = vmatpush1.msra.mxu0 0.0
  %2587 = vmatprep.subr.mxu0 0.0
  %2588 = vmatpush1.msra.mxu0 0.0
  %2589 = vmatprep.subr.mxu0 0.0
  %2590 = vmatpush1.msra.mxu0 0.0
  %2591 = vmatprep.subr.mxu0 0.0
  %2592 = vmatpush1.msra.mxu0 0.0
  %2593 = vmatprep.subr.mxu0 0.0
  %2594 = vmatpush1.msra.mxu0 0.0
  %2595 = vmatprep.subr.mxu0 0.0
  %2596 = vmatpush1.msra.mxu0 0.0
  %2597 = vmatprep.subr.mxu0 0.0
  %2598 = vmatpush1.msra.mxu0 0.0
  %2599 = vmatprep.subr.mxu0 0.0
  %2600 = vmatpush1.msra.mxu0 0.0
  %2601 = vmatprep.subr.mxu0 0.0
  %2602 = vmatpush1.msra.mxu0 0.0
  %2603 = vmatprep.subr.mxu0 0.0
  %2604 = vmatpush1.msra.mxu0 0.0
  %2605 = vmatprep.subr.mxu0 0.0
  %2606 = vmatpush1.msra.mxu0 0.0
  %2607 = vmatprep.subr.mxu0 0.0
  %2608 = vmatpush1.msra.mxu0 0.0
  %2609 = vmatprep.subr.mxu0 0.0
  %2610 = vmatpush1.msra.mxu0 0.0
  %2611 = vmatprep.subr.mxu0 0.0
  %2612 = vmatpush1.msra.mxu0 0.0
  %2613 = vmatprep.subr.mxu0 0.0
  %2614 = vmatpush1.msra.mxu0 0.0
  %2615 = vmatprep.subr.mxu0 0.0
  %2616 = vmatpush1.msra.mxu0 0.0
  %2617 = vmatprep.subr.mxu0 0.0
  %2618 = vmatpush1.msra.mxu0 0.0
  %2619 = vmatprep.subr.mxu0 0.0
  %2620 = vmatpush1.msra.mxu0 0.0
  %2621 = vmatprep.subr.mxu0 0.0
  %2622 = vmatpush1.msra.mxu0 0.0
  %2623 = vmatprep.subr.mxu0 0.0
  %2624 = vmatpush1.msra.mxu0 0.0
  %2625 = vmatprep.mubr.f32.mxu0 0.0
  %2626 = vmatmul.mubr.f32.gmra.mrb[0].mxu0 %v2559
  %v2627 = vpop.f32.mrb[0].mxu0
  %v2628 = vadd.f32 %v2557, %v2627
  %v2629 = vpop.f32.mrb[0].mxu0
  %2630 = vdwg.mxu0
  %v2631 = vmax.f32 %v2628, 0.0
  %v2632 = vsel %vm259, %v2631, 0.0
  %2633 = vadd.xlane.f32.xlu0 %v2632
  %v2634 = vpop.xlane.xlu0 %2633
  %v2635 = vmul.f32 %v2631, %v2631
  %v2636 = vsel %vm259, %v2635, 0.0
  %2637 = vadd.xlane.f32.xlu0 %v2636
  %v2638 = vpop.xlane.xlu0 %2637
  %v2639 = vmul.f32 %v2634, 0.0625
  %v2640 = vmul.f32 %v2638, 0.0625
  %v2641 = vmul.f32 %v2639, %v2639
  %v2642 = vsub.f32 %v2640, %v2641
  %v2643 = vsub.f32 %v2631, %v2639
  %v2644 = vadd.f32 %v2642, 1e-05
  %v2645 = vrsqrt.pop %v2644
  %v2646 = vmul.f32 %v2643, %v2645
  %v2647 = vlaneseq
  %v2648 = vshrl.u32 %v2647, 7
  %v2649 = vsub.s32 2, %v2648
  %v2650 = vrot.slane %v38, %v2649
  %v2651 = vmul.f32 %v2646, %v2650
  %v2652 = vlaneseq
  %v2653 = vshrl.u32 %v2652, 7
  %v2654 = vsub.s32 3, %v2653
  %v2655 = vrot.slane %v38, %v2654
  %v2656 = vadd.f32 %v2651, %v2655
  %s2657 = scalar_lea.vmem %s3, 896
  %v2658 = vld [vmem:[%s2657] sm:$0xff]
  %v2659 = vld [vmem:[%s2657 + $0x8] sm:$0xff]
  %v2660 = vlaneseq
  %v2661 = vshrl.u32 %v2660, 7
  %v2662 = vsub.s32 0, %v2661
  %v2663 = vrot.slane %v40, %v2662
  %v2665 = vsel %vm259, %v2029, 0
  %v2668 = vsel %vm259, %v2030, 0
  %2670 = vmatprep.subr.mxu0 0.0
  %2671 = vmatpush1.msra.mxu0 %v2658
  %2672 = vmatprep.subr.mxu0 0.0
  %2673 = vmatpush1.msra.mxu0 %v2659
  %2674 = vmatprep.subr.mxu0 0.0
  %2675 = vmatpush1.msra.mxu0 0.0
  %2676 = vmatprep.subr.mxu0 0.0
  %2677 = vmatpush1.msra.mxu0 0.0
  %2678 = vmatprep.subr.mxu0 0.0
  %2679 = vmatpush1.msra.mxu0 0.0
  %2680 = vmatprep.subr.mxu0 0.0
  %2681 = vmatpush1.msra.mxu0 0.0
  %2682 = vmatprep.subr.mxu0 0.0
  %2683 = vmatpush1.msra.mxu0 0.0
  %2684 = vmatprep.subr.mxu0 0.0
  %2685 = vmatpush1.msra.mxu0 0.0
  %2686 = vmatprep.subr.mxu0 0.0
  %2687 = vmatpush1.msra.mxu0 0.0
  %2688 = vmatprep.subr.mxu0 0.0
  %2689 = vmatpush1.msra.mxu0 0.0
  %2690 = vmatprep.subr.mxu0 0.0
  %2691 = vmatpush1.msra.mxu0 0.0
  %2692 = vmatprep.subr.mxu0 0.0
  %2693 = vmatpush1.msra.mxu0 0.0
  %2694 = vmatprep.subr.mxu0 0.0
  %2695 = vmatpush1.msra.mxu0 0.0
  %2696 = vmatprep.subr.mxu0 0.0
  %2697 = vmatpush1.msra.mxu0 0.0
  %2698 = vmatprep.subr.mxu0 0.0
  %2699 = vmatpush1.msra.mxu0 0.0
  %2700 = vmatprep.subr.mxu0 0.0
  %2701 = vmatpush1.msra.mxu0 0.0
  %2702 = vmatprep.subr.mxu0 0.0
  %2703 = vmatpush1.msra.mxu0 0.0
  %2704 = vmatprep.subr.mxu0 0.0
  %2705 = vmatpush1.msra.mxu0 0.0
  %2706 = vmatprep.subr.mxu0 0.0
  %2707 = vmatpush1.msra.mxu0 0.0
  %2708 = vmatprep.subr.mxu0 0.0
  %2709 = vmatpush1.msra.mxu0 0.0
  %2710 = vmatprep.subr.mxu0 0.0
  %2711 = vmatpush1.msra.mxu0 0.0
  %2712 = vmatprep.subr.mxu0 0.0
  %2713 = vmatpush1.msra.mxu0 0.0
  %2714 = vmatprep.subr.mxu0 0.0
  %2715 = vmatpush1.msra.mxu0 0.0
  %2716 = vmatprep.subr.mxu0 0.0
  %2717 = vmatpush1.msra.mxu0 0.0
  %2718 = vmatprep.subr.mxu0 0.0
  %2719 = vmatpush1.msra.mxu0 0.0
  %2720 = vmatprep.subr.mxu0 0.0
  %2721 = vmatpush1.msra.mxu0 0.0
  %2722 = vmatprep.subr.mxu0 0.0
  %2723 = vmatpush1.msra.mxu0 0.0
  %2724 = vmatprep.subr.mxu0 0.0
  %2725 = vmatpush1.msra.mxu0 0.0
  %2726 = vmatprep.subr.mxu0 0.0
  %2727 = vmatpush1.msra.mxu0 0.0
  %2728 = vmatprep.subr.mxu0 0.0
  %2729 = vmatpush1.msra.mxu0 0.0
  %2730 = vmatprep.subr.mxu0 0.0
  %2731 = vmatpush1.msra.mxu0 0.0
  %2732 = vmatprep.subr.mxu0 0.0
  %2733 = vmatpush1.msra.mxu0 0.0
  %2734 = vmatprep.mubr.f32.mxu0 0.0
  %2735 = vmatmul.mubr.f32.gmra.mrb[0].mxu0 %v2665
  %v2736 = vpop.f32.mrb[0].mxu0
  %v2737 = vadd.f32 %v2663, %v2736
  %v2738 = vpop.f32.mrb[0].mxu0
  %2739 = vmatprep.mubr.f32.mxu0 0.0
  %2740 = vmatmul.mubr.f32.gmra.mrb[0].mxu0 %v2668
  %v2741 = vpop.f32.mrb[0].mxu0
  %v2742 = vadd.f32 %v2663, %v2741
  %v2743 = vpop.f32.mrb[0].mxu0
  %2744 = vdwg.mxu0
  %v2745 = vmax.f32 %v2737, 0.0
  %v2746 = vmax.f32 %v2742, 0.0
  %s2747 = scalar_lea.vmem %s4, 224
  %v2748 = vld [vmem:[%s2747] sm:$0xff]
  %v2749 = vld [vmem:[%s2747 + $0x8] sm:$0xff]
  %v2750 = vld [vmem:[%s2747 + $0x10] sm:$0xff]
  %v2751 = vld [vmem:[%s2747 + $0x18] sm:$0xff]
  %v2752 = vlaneseq
  %v2753 = vshrl.u32 %v2752, 7
  %v2754 = vsub.s32 1, %v2753
  %v2755 = vrot.slane %v40, %v2754
  %v2757 = vsel %vm184, %v2745, 0
  %v2760 = vsel %vm184, %v2746, 0
  %2762 = vmatprep.subr.mxu0 0.0
  %2763 = vmatpush1.msra.mxu0 %v2748
  %2764 = vmatprep.subr.mxu0 0.0
  %2765 = vmatpush1.msra.mxu0 %v2749
  %2766 = vmatprep.subr.mxu0 0.0
  %2767 = vmatpush1.msra.mxu0 %v2750
  %2768 = vmatprep.subr.mxu0 0.0
  %2769 = vmatpush1.msra.mxu0 %v2751
  %2770 = vmatprep.subr.mxu0 0.0
  %2771 = vmatpush1.msra.mxu0 0.0
  %2772 = vmatprep.subr.mxu0 0.0
  %2773 = vmatpush1.msra.mxu0 0.0
  %2774 = vmatprep.subr.mxu0 0.0
  %2775 = vmatpush1.msra.mxu0 0.0
  %2776 = vmatprep.subr.mxu0 0.0
  %2777 = vmatpush1.msra.mxu0 0.0
  %2778 = vmatprep.subr.mxu0 0.0
  %2779 = vmatpush1.msra.mxu0 0.0
  %2780 = vmatprep.subr.mxu0 0.0
  %2781 = vmatpush1.msra.mxu0 0.0
  %2782 = vmatprep.subr.mxu0 0.0
  %2783 = vmatpush1.msra.mxu0 0.0
  %2784 = vmatprep.subr.mxu0 0.0
  %2785 = vmatpush1.msra.mxu0 0.0
  %2786 = vmatprep.subr.mxu0 0.0
  %2787 = vmatpush1.msra.mxu0 0.0
  %2788 = vmatprep.subr.mxu0 0.0
  %2789 = vmatpush1.msra.mxu0 0.0
  %2790 = vmatprep.subr.mxu0 0.0
  %2791 = vmatpush1.msra.mxu0 0.0
  %2792 = vmatprep.subr.mxu0 0.0
  %2793 = vmatpush1.msra.mxu0 0.0
  %2794 = vmatprep.subr.mxu0 0.0
  %2795 = vmatpush1.msra.mxu0 0.0
  %2796 = vmatprep.subr.mxu0 0.0
  %2797 = vmatpush1.msra.mxu0 0.0
  %2798 = vmatprep.subr.mxu0 0.0
  %2799 = vmatpush1.msra.mxu0 0.0
  %2800 = vmatprep.subr.mxu0 0.0
  %2801 = vmatpush1.msra.mxu0 0.0
  %2802 = vmatprep.subr.mxu0 0.0
  %2803 = vmatpush1.msra.mxu0 0.0
  %2804 = vmatprep.subr.mxu0 0.0
  %2805 = vmatpush1.msra.mxu0 0.0
  %2806 = vmatprep.subr.mxu0 0.0
  %2807 = vmatpush1.msra.mxu0 0.0
  %2808 = vmatprep.subr.mxu0 0.0
  %2809 = vmatpush1.msra.mxu0 0.0
  %2810 = vmatprep.subr.mxu0 0.0
  %2811 = vmatpush1.msra.mxu0 0.0
  %2812 = vmatprep.subr.mxu0 0.0
  %2813 = vmatpush1.msra.mxu0 0.0
  %2814 = vmatprep.subr.mxu0 0.0
  %2815 = vmatpush1.msra.mxu0 0.0
  %2816 = vmatprep.subr.mxu0 0.0
  %2817 = vmatpush1.msra.mxu0 0.0
  %2818 = vmatprep.subr.mxu0 0.0
  %2819 = vmatpush1.msra.mxu0 0.0
  %2820 = vmatprep.subr.mxu0 0.0
  %2821 = vmatpush1.msra.mxu0 0.0
  %2822 = vmatprep.subr.mxu0 0.0
  %2823 = vmatpush1.msra.mxu0 0.0
  %2824 = vmatprep.subr.mxu0 0.0
  %2825 = vmatpush1.msra.mxu0 0.0
  %2826 = vmatprep.mubr.f32.mxu0 0.0
  %2827 = vmatmul.mubr.f32.gmra.mrb[0].mxu0 %v2757
  %v2828 = vpop.f32.mrb[0].mxu0
  %v2829 = vadd.f32 %v2755, %v2828
  %v2830 = vpop.f32.mrb[0].mxu0
  %2831 = vmatprep.mubr.f32.mxu0 0.0
  %2832 = vmatmul.mubr.f32.gmra.mrb[0].mxu0 %v2760
  %v2833 = vpop.f32.mrb[0].mxu0
  %v2834 = vadd.f32 %v2755, %v2833
  %v2835 = vpop.f32.mrb[0].mxu0
  %2836 = vdwg.mxu0
  %v2837 = vmax.f32 %v2829, 0.0
  %v2838 = vmax.f32 %v2834, 0.0
  %v2839 = vsel %vm259, %v2837, 0.0
  %2840 = vadd.xlane.f32.xlu0 %v2839
  %v2841 = vpop.xlane.xlu0 %2840
  %v2842 = vsel %vm259, %v2838, 0.0
  %2843 = vadd.xlane.f32.xlu0 %v2842
  %v2844 = vpop.xlane.xlu0 %2843
  %v2845 = vmul.f32 %v2837, %v2837
  %v2846 = vmul.f32 %v2838, %v2838
  %v2847 = vsel %vm259, %v2845, 0.0
  %2848 = vadd.xlane.f32.xlu0 %v2847
  %v2849 = vpop.xlane.xlu0 %2848
  %v2850 = vsel %vm259, %v2846, 0.0
  %2851 = vadd.xlane.f32.xlu0 %v2850
  %v2852 = vpop.xlane.xlu0 %2851
  %v2853 = vmul.f32 %v2841, 0.0625
  %v2854 = vmul.f32 %v2844, 0.0625
  %v2855 = vmul.f32 %v2849, 0.0625
  %v2856 = vmul.f32 %v2852, 0.0625
  %v2857 = vmul.f32 %v2853, %v2853
  %v2858 = vmul.f32 %v2854, %v2854
  %v2859 = vsub.f32 %v2855, %v2857
  %v2860 = vsub.f32 %v2856, %v2858
  %v2861 = vsub.f32 %v2837, %v2853
  %v2862 = vsub.f32 %v2838, %v2854
  %v2863 = vadd.f32 %v2859, 1e-05
  %v2864 = vadd.f32 %v2860, 1e-05
  %v2865 = vrsqrt.pop %v2863
  %v2866 = vrsqrt.pop %v2864
  %v2867 = vmul.f32 %v2861, %v2865
  %v2868 = vmul.f32 %v2862, %v2866
  %v2869 = vlaneseq
  %v2870 = vshrl.u32 %v2869, 7
  %v2871 = vsub.s32 2, %v2870
  %v2872 = vrot.slane %v40, %v2871
  %v2873 = vmul.f32 %v2867, %v2872
  %v2874 = vmul.f32 %v2868, %v2872
  %v2875 = vlaneseq
  %v2876 = vshrl.u32 %v2875, 7
  %v2877 = vsub.s32 3, %v2876
  %v2878 = vrot.slane %v40, %v2877
  %v2879 = vadd.f32 %v2873, %v2878
  %v2880 = vadd.f32 %v2874, %v2878
  %s2881 = scalar_lea.vmem %s3, 1024
  %v2882 = vld [vmem:[%s2881] sm:$0xff]
  %v2883 = vld [vmem:[%s2881 + $0x8] sm:$0xff]
  %v2885 = vsel %vm259, %v2467, 0
  %2887 = vmatprep.subr.mxu0 0.0
  %2888 = vmatpush1.msra.mxu0 %v2882
  %2889 = vmatprep.subr.mxu0 0.0
  %2890 = vmatpush1.msra.mxu0 %v2883
  %2891 = vmatprep.subr.mxu0 0.0
  %2892 = vmatpush1.msra.mxu0 0.0
  %2893 = vmatprep.subr.mxu0 0.0
  %2894 = vmatpush1.msra.mxu0 0.0
  %2895 = vmatprep.subr.mxu0 0.0
  %2896 = vmatpush1.msra.mxu0 0.0
  %2897 = vmatprep.subr.mxu0 0.0
  %2898 = vmatpush1.msra.mxu0 0.0
  %2899 = vmatprep.subr.mxu0 0.0
  %2900 = vmatpush1.msra.mxu0 0.0
  %2901 = vmatprep.subr.mxu0 0.0
  %2902 = vmatpush1.msra.mxu0 0.0
  %2903 = vmatprep.subr.mxu0 0.0
  %2904 = vmatpush1.msra.mxu0 0.0
  %2905 = vmatprep.subr.mxu0 0.0
  %2906 = vmatpush1.msra.mxu0 0.0
  %2907 = vmatprep.subr.mxu0 0.0
  %2908 = vmatpush1.msra.mxu0 0.0
  %2909 = vmatprep.subr.mxu0 0.0
  %2910 = vmatpush1.msra.mxu0 0.0
  %2911 = vmatprep.subr.mxu0 0.0
  %2912 = vmatpush1.msra.mxu0 0.0
  %2913 = vmatprep.subr.mxu0 0.0
  %2914 = vmatpush1.msra.mxu0 0.0
  %2915 = vmatprep.subr.mxu0 0.0
  %2916 = vmatpush1.msra.mxu0 0.0
  %2917 = vmatprep.subr.mxu0 0.0
  %2918 = vmatpush1.msra.mxu0 0.0
  %2919 = vmatprep.subr.mxu0 0.0
  %2920 = vmatpush1.msra.mxu0 0.0
  %2921 = vmatprep.subr.mxu0 0.0
  %2922 = vmatpush1.msra.mxu0 0.0
  %2923 = vmatprep.subr.mxu0 0.0
  %2924 = vmatpush1.msra.mxu0 0.0
  %2925 = vmatprep.subr.mxu0 0.0
  %2926 = vmatpush1.msra.mxu0 0.0
  %2927 = vmatprep.subr.mxu0 0.0
  %2928 = vmatpush1.msra.mxu0 0.0
  %2929 = vmatprep.subr.mxu0 0.0
  %2930 = vmatpush1.msra.mxu0 0.0
  %2931 = vmatprep.subr.mxu0 0.0
  %2932 = vmatpush1.msra.mxu0 0.0
  %2933 = vmatprep.subr.mxu0 0.0
  %2934 = vmatpush1.msra.mxu0 0.0
  %2935 = vmatprep.subr.mxu0 0.0
  %2936 = vmatpush1.msra.mxu0 0.0
  %2937 = vmatprep.subr.mxu0 0.0
  %2938 = vmatpush1.msra.mxu0 0.0
  %2939 = vmatprep.subr.mxu0 0.0
  %2940 = vmatpush1.msra.mxu0 0.0
  %2941 = vmatprep.subr.mxu0 0.0
  %2942 = vmatpush1.msra.mxu0 0.0
  %2943 = vmatprep.subr.mxu0 0.0
  %2944 = vmatpush1.msra.mxu0 0.0
  %2945 = vmatprep.subr.mxu0 0.0
  %2946 = vmatpush1.msra.mxu0 0.0
  %2947 = vmatprep.subr.mxu0 0.0
  %2948 = vmatpush1.msra.mxu0 0.0
  %2949 = vmatprep.subr.mxu0 0.0
  %2950 = vmatpush1.msra.mxu0 0.0
  %2951 = vmatprep.mubr.f32.mxu0 0.0
  %2952 = vmatmul.mubr.f32.gmra.mrb[0].mxu0 %v2885
  %v2953 = vpop.f32.mrb[0].mxu0
  %v2954 = vadd.f32 %v42, %v2953
  %v2955 = vpop.f32.mrb[0].mxu0
  %2956 = vdwg.mxu0
  %v2957 = vmax.f32 %v2954, 0.0
  %s2958 = scalar_lea.vmem %s4, 256
  %v2959 = vld [vmem:[%s2958] sm:$0xff]
  %v2960 = vld [vmem:[%s2958 + $0x8] sm:$0xff]
  %v2961 = vld [vmem:[%s2958 + $0x10] sm:$0xff]
  %v2962 = vld [vmem:[%s2958 + $0x18] sm:$0xff]
  %v2964 = vrot.slane %v42, 1
  %v2967 = vsel %vm184, %v2957, 0
  %2969 = vmatprep.subr.mxu0 0.0
  %2970 = vmatpush1.msra.mxu0 %v2959
  %2971 = vmatprep.subr.mxu0 0.0
  %2972 = vmatpush1.msra.mxu0 %v2960
  %2973 = vmatprep.subr.mxu0 0.0
  %2974 = vmatpush1.msra.mxu0 %v2961
  %2975 = vmatprep.subr.mxu0 0.0
  %2976 = vmatpush1.msra.mxu0 %v2962
  %2977 = vmatprep.subr.mxu0 0.0
  %2978 = vmatpush1.msra.mxu0 0.0
  %2979 = vmatprep.subr.mxu0 0.0
  %2980 = vmatpush1.msra.mxu0 0.0
  %2981 = vmatprep.subr.mxu0 0.0
  %2982 = vmatpush1.msra.mxu0 0.0
  %2983 = vmatprep.subr.mxu0 0.0
  %2984 = vmatpush1.msra.mxu0 0.0
  %2985 = vmatprep.subr.mxu0 0.0
  %2986 = vmatpush1.msra.mxu0 0.0
  %2987 = vmatprep.subr.mxu0 0.0
  %2988 = vmatpush1.msra.mxu0 0.0
  %2989 = vmatprep.subr.mxu0 0.0
  %2990 = vmatpush1.msra.mxu0 0.0
  %2991 = vmatprep.subr.mxu0 0.0
  %2992 = vmatpush1.msra.mxu0 0.0
  %2993 = vmatprep.subr.mxu0 0.0
  %2994 = vmatpush1.msra.mxu0 0.0
  %2995 = vmatprep.subr.mxu0 0.0
  %2996 = vmatpush1.msra.mxu0 0.0
  %2997 = vmatprep.subr.mxu0 0.0
  %2998 = vmatpush1.msra.mxu0 0.0
  %2999 = vmatprep.subr.mxu0 0.0
  %3000 = vmatpush1.msra.mxu0 0.0
  %3001 = vmatprep.subr.mxu0 0.0
  %3002 = vmatpush1.msra.mxu0 0.0
  %3003 = vmatprep.subr.mxu0 0.0
  %3004 = vmatpush1.msra.mxu0 0.0
  %3005 = vmatprep.subr.mxu0 0.0
  %3006 = vmatpush1.msra.mxu0 0.0
  %3007 = vmatprep.subr.mxu0 0.0
  %3008 = vmatpush1.msra.mxu0 0.0
  %3009 = vmatprep.subr.mxu0 0.0
  %3010 = vmatpush1.msra.mxu0 0.0
  %3011 = vmatprep.subr.mxu0 0.0
  %3012 = vmatpush1.msra.mxu0 0.0
  %3013 = vmatprep.subr.mxu0 0.0
  %3014 = vmatpush1.msra.mxu0 0.0
  %3015 = vmatprep.subr.mxu0 0.0
  %3016 = vmatpush1.msra.mxu0 0.0
  %3017 = vmatprep.subr.mxu0 0.0
  %3018 = vmatpush1.msra.mxu0 0.0
  %3019 = vmatprep.subr.mxu0 0.0
  %3020 = vmatpush1.msra.mxu0 0.0
  %3021 = vmatprep.subr.mxu0 0.0
  %3022 = vmatpush1.msra.mxu0 0.0
  %3023 = vmatprep.subr.mxu0 0.0
  %3024 = vmatpush1.msra.mxu0 0.0
  %3025 = vmatprep.subr.mxu0 0.0
  %3026 = vmatpush1.msra.mxu0 0.0
  %3027 = vmatprep.subr.mxu0 0.0
  %3028 = vmatpush1.msra.mxu0 0.0
  %3029 = vmatprep.subr.mxu0 0.0
  %3030 = vmatpush1.msra.mxu0 0.0
  %3031 = vmatprep.subr.mxu0 0.0
  %3032 = vmatpush1.msra.mxu0 0.0
  %3033 = vmatprep.mubr.f32.mxu0 0.0
  %3034 = vmatmul.mubr.f32.gmra.mrb[0].mxu0 %v2967
  %v3035 = vpop.f32.mrb[0].mxu0
  %v3036 = vadd.f32 %v2964, %v3035
  %v3037 = vpop.f32.mrb[0].mxu0
  %3038 = vdwg.mxu0
  %v3039 = vmax.f32 %v3036, 0.0
  %v3040 = vsel %vm687, %v3039, 0.0
  %3041 = vadd.xlane.f32.xlu0 %v3040
  %v3042 = vpop.xlane.xlu0 %3041
  %v3043 = vmul.f32 %v3039, %v3039
  %v3044 = vsel %vm687, %v3043, 0.0
  %3045 = vadd.xlane.f32.xlu0 %v3044
  %v3046 = vpop.xlane.xlu0 %3045
  %v3047 = vmul.f32 %v3042, 0.0625
  %v3048 = vmul.f32 %v3046, 0.0625
  %v3049 = vmul.f32 %v3047, %v3047
  %v3050 = vsub.f32 %v3048, %v3049
  %v3051 = vsub.f32 %v3039, %v3047
  %v3052 = vadd.f32 %v3050, 1e-05
  %v3053 = vrsqrt.pop %v3052
  %v3054 = vmul.f32 %v3051, %v3053
  %v3055 = vrot.slane %v42, 2
  %v3057 = vmul.f32 %v3054, %v3055
  %v3058 = vrot.slane %v42, 3
  %v3060 = vadd.f32 %v3057, %v3058
  %3061 = vst [vmem:[%s7] sm:$0xff] 0.0
  %3062 = vst [vmem:[%s7 + $0x8] sm:$0xff] 0.0
  %3063 = vst [vmem:[%s7 + $0x10] sm:$0xff] 0.0
  %3064 = vst [vmem:[%s7 + $0x18] sm:$0xff] 0.0
  %v3065 = vld [vmem:[%s6] sm:$0xff]
  %v3066 = vld [vmem:[%s6 + $0x8] sm:$0xff]
  %v3067 = vld [vmem:[%s6 + $0x10] sm:$0x1]
  %v3068 = vlaneseq
  %v3069 = vshrl.u32 %v3068, 7
  %v3070 = vsub.s32 0, %v3069
  %v3071 = vrot.slane %v3067, %v3070
  %v3073 = vsel %vm259, %v2656, 0
  %3075 = vmatprep.subr.mxu0 0.0
  %3076 = vmatpush1.msra.mxu0 %v3065
  %3077 = vmatprep.subr.mxu0 0.0
  %3078 = vmatpush1.msra.mxu0 %v3066
  %3079 = vmatprep.subr.mxu0 0.0
  %3080 = vmatpush1.msra.mxu0 0.0
  %3081 = vmatprep.subr.mxu0 0.0
  %3082 = vmatpush1.msra.mxu0 0.0
  %3083 = vmatprep.subr.mxu0 0.0
  %3084 = vmatpush1.msra.mxu0 0.0
  %3085 = vmatprep.subr.mxu0 0.0
  %3086 = vmatpush1.msra.mxu0 0.0
  %3087 = vmatprep.subr.mxu0 0.0
  %3088 = vmatpush1.msra.mxu0 0.0
  %3089 = vmatprep.subr.mxu0 0.0
  %3090 = vmatpush1.msra.mxu0 0.0
  %3091 = vmatprep.subr.mxu0 0.0
  %3092 = vmatpush1.msra.mxu0 0.0
  %3093 = vmatprep.subr.mxu0 0.0
  %3094 = vmatpush1.msra.mxu0 0.0
  %3095 = vmatprep.subr.mxu0 0.0
  %3096 = vmatpush1.msra.mxu0 0.0
  %3097 = vmatprep.subr.mxu0 0.0
  %3098 = vmatpush1.msra.mxu0 0.0
  %3099 = vmatprep.subr.mxu0 0.0
  %3100 = vmatpush1.msra.mxu0 0.0
  %3101 = vmatprep.subr.mxu0 0.0
  %3102 = vmatpush1.msra.mxu0 0.0
  %3103 = vmatprep.subr.mxu0 0.0
  %3104 = vmatpush1.msra.mxu0 0.0
  %3105 = vmatprep.subr.mxu0 0.0
  %3106 = vmatpush1.msra.mxu0 0.0
  %3107 = vmatprep.subr.mxu0 0.0
  %3108 = vmatpush1.msra.mxu0 0.0
  %3109 = vmatprep.subr.mxu0 0.0
  %3110 = vmatpush1.msra.mxu0 0.0
  %3111 = vmatprep.subr.mxu0 0.0
  %3112 = vmatpush1.msra.mxu0 0.0
  %3113 = vmatprep.subr.mxu0 0.0
  %3114 = vmatpush1.msra.mxu0 0.0
  %3115 = vmatprep.subr.mxu0 0.0
  %3116 = vmatpush1.msra.mxu0 0.0
  %3117 = vmatprep.subr.mxu0 0.0
  %3118 = vmatpush1.msra.mxu0 0.0
  %3119 = vmatprep.subr.mxu0 0.0
  %3120 = vmatpush1.msra.mxu0 0.0
  %3121 = vmatprep.subr.mxu0 0.0
  %3122 = vmatpush1.msra.mxu0 0.0
  %3123 = vmatprep.subr.mxu0 0.0
  %3124 = vmatpush1.msra.mxu0 0.0
  %3125 = vmatprep.subr.mxu0 0.0
  %3126 = vmatpush1.msra.mxu0 0.0
  %3127 = vmatprep.subr.mxu0 0.0
  %3128 = vmatpush1.msra.mxu0 0.0
  %3129 = vmatprep.subr.mxu0 0.0
  %3130 = vmatpush1.msra.mxu0 0.0
  %3131 = vmatprep.subr.mxu0 0.0
  %3132 = vmatpush1.msra.mxu0 0.0
  %3133 = vmatprep.subr.mxu0 0.0
  %3134 = vmatpush1.msra.mxu0 0.0
  %3135 = vmatprep.subr.mxu0 0.0
  %3136 = vmatpush1.msra.mxu0 0.0
  %3137 = vmatprep.subr.mxu0 0.0
  %3138 = vmatpush1.msra.mxu0 0.0
  %3139 = vmatprep.mubr.f32.mxu0 0.0
  %3140 = vmatmul.mubr.f32.gmra.mrb[0].mxu0 %v3073
  %v3141 = vpop.f32.mrb[0].mxu0
  %v3142 = vadd.f32 %v3071, %v3141
  %v3143 = vpop.f32.mrb[0].mxu0
  %3144 = vdwg.mxu0
  %3145 = vst [vmem:[%s7] sm:$0xff] %v3142
  %s3146 = scalar_lea.vmem %s6, 24
  %v3147 = vld [vmem:[%s3146] sm:$0xff]
  %v3148 = vld [vmem:[%s3146 + $0x8] sm:$0xff]
  %v3149 = vld [vmem:[%s3146 + $0x10] sm:$0x1]
  %v3150 = vlaneseq
  %v3151 = vshrl.u32 %v3150, 7
  %v3152 = vsub.s32 0, %v3151
  %v3153 = vrot.slane %v3149, %v3152
  %v3155 = vsel %vm259, %v2879, 0
  %v3158 = vsel %vm259, %v2880, 0
  %3160 = vmatprep.subr.mxu0 0.0
  %3161 = vmatpush1.msra.mxu0 %v3147
  %3162 = vmatprep.subr.mxu0 0.0
  %3163 = vmatpush1.msra.mxu0 %v3148
  %3164 = vmatprep.subr.mxu0 0.0
  %3165 = vmatpush1.msra.mxu0 0.0
  %3166 = vmatprep.subr.mxu0 0.0
  %3167 = vmatpush1.msra.mxu0 0.0
  %3168 = vmatprep.subr.mxu0 0.0
  %3169 = vmatpush1.msra.mxu0 0.0
  %3170 = vmatprep.subr.mxu0 0.0
  %3171 = vmatpush1.msra.mxu0 0.0
  %3172 = vmatprep.subr.mxu0 0.0
  %3173 = vmatpush1.msra.mxu0 0.0
  %3174 = vmatprep.subr.mxu0 0.0
  %3175 = vmatpush1.msra.mxu0 0.0
  %3176 = vmatprep.subr.mxu0 0.0
  %3177 = vmatpush1.msra.mxu0 0.0
  %3178 = vmatprep.subr.mxu0 0.0
  %3179 = vmatpush1.msra.mxu0 0.0
  %3180 = vmatprep.subr.mxu0 0.0
  %3181 = vmatpush1.msra.mxu0 0.0
  %3182 = vmatprep.subr.mxu0 0.0
  %3183 = vmatpush1.msra.mxu0 0.0
  %3184 = vmatprep.subr.mxu0 0.0
  %3185 = vmatpush1.msra.mxu0 0.0
  %3186 = vmatprep.subr.mxu0 0.0
  %3187 = vmatpush1.msra.mxu0 0.0
  %3188 = vmatprep.subr.mxu0 0.0
  %3189 = vmatpush1.msra.mxu0 0.0
  %3190 = vmatprep.subr.mxu0 0.0
  %3191 = vmatpush1.msra.mxu0 0.0
  %3192 = vmatprep.subr.mxu0 0.0
  %3193 = vmatpush1.msra.mxu0 0.0
  %3194 = vmatprep.subr.mxu0 0.0
  %3195 = vmatpush1.msra.mxu0 0.0
  %3196 = vmatprep.subr.mxu0 0.0
  %3197 = vmatpush1.msra.mxu0 0.0
  %3198 = vmatprep.subr.mxu0 0.0
  %3199 = vmatpush1.msra.mxu0 0.0
  %3200 = vmatprep.subr.mxu0 0.0
  %3201 = vmatpush1.msra.mxu0 0.0
  %3202 = vmatprep.subr.mxu0 0.0
  %3203 = vmatpush1.msra.mxu0 0.0
  %3204 = vmatprep.subr.mxu0 0.0
  %3205 = vmatpush1.msra.mxu0 0.0
  %3206 = vmatprep.subr.mxu0 0.0
  %3207 = vmatpush1.msra.mxu0 0.0
  %3208 = vmatprep.subr.mxu0 0.0
  %3209 = vmatpush1.msra.mxu0 0.0
  %3210 = vmatprep.subr.mxu0 0.0
  %3211 = vmatpush1.msra.mxu0 0.0
  %3212 = vmatprep.subr.mxu0 0.0
  %3213 = vmatpush1.msra.mxu0 0.0
  %3214 = vmatprep.subr.mxu0 0.0
  %3215 = vmatpush1.msra.mxu0 0.0
  %3216 = vmatprep.subr.mxu0 0.0
  %3217 = vmatpush1.msra.mxu0 0.0
  %3218 = vmatprep.subr.mxu0 0.0
  %3219 = vmatpush1.msra.mxu0 0.0
  %3220 = vmatprep.subr.mxu0 0.0
  %3221 = vmatpush1.msra.mxu0 0.0
  %3222 = vmatprep.subr.mxu0 0.0
  %3223 = vmatpush1.msra.mxu0 0.0
  %3224 = vmatprep.mubr.f32.mxu0 0.0
  %3225 = vmatmul.mubr.f32.gmra.mrb[0].mxu0 %v3155
  %v3226 = vpop.f32.mrb[0].mxu0
  %v3227 = vadd.f32 %v3153, %v3226
  %v3228 = vpop.f32.mrb[0].mxu0
  %3229 = vmatprep.mubr.f32.mxu0 0.0
  %3230 = vmatmul.mubr.f32.gmra.mrb[0].mxu0 %v3158
  %v3231 = vpop.f32.mrb[0].mxu0
  %v3232 = vadd.f32 %v3153, %v3231
  %v3233 = vpop.f32.mrb[0].mxu0
  %3234 = vdwg.mxu0
  %3235 = vst [vmem:[%s7 + $0x8] sm:$0xff] %v3227
  %3236 = vst [vmem:[%s7 + $0x10] sm:$0xff] %v3232
  %s3237 = scalar_lea.vmem %s6, 48
  %v3238 = vld [vmem:[%s3237] sm:$0xff]
  %v3239 = vld [vmem:[%s3237 + $0x8] sm:$0xff]
  %v3240 = vld [vmem:[%s3237 + $0x10] sm:$0x1]
  %v3242 = vsel %vm259, %v3060, 0
  %3244 = vmatprep.subr.mxu0 0.0
  %3245 = vmatpush1.msra.mxu0 %v3238
  %3246 = vmatprep.subr.mxu0 0.0
  %3247 = vmatpush1.msra.mxu0 %v3239
  %3248 = vmatprep.subr.mxu0 0.0
  %3249 = vmatpush1.msra.mxu0 0.0
  %3250 = vmatprep.subr.mxu0 0.0
  %3251 = vmatpush1.msra.mxu0 0.0
  %3252 = vmatprep.subr.mxu0 0.0
  %3253 = vmatpush1.msra.mxu0 0.0
  %3254 = vmatprep.subr.mxu0 0.0
  %3255 = vmatpush1.msra.mxu0 0.0
  %3256 = vmatprep.subr.mxu0 0.0
  %3257 = vmatpush1.msra.mxu0 0.0
  %3258 = vmatprep.subr.mxu0 0.0
  %3259 = vmatpush1.msra.mxu0 0.0
  %3260 = vmatprep.subr.mxu0 0.0
  %3261 = vmatpush1.msra.mxu0 0.0
  %3262 = vmatprep.subr.mxu0 0.0
  %3263 = vmatpush1.msra.mxu0 0.0
  %3264 = vmatprep.subr.mxu0 0.0
  %3265 = vmatpush1.msra.mxu0 0.0
  %3266 = vmatprep.subr.mxu0 0.0
  %3267 = vmatpush1.msra.mxu0 0.0
  %3268 = vmatprep.subr.mxu0 0.0
  %3269 = vmatpush1.msra.mxu0 0.0
  %3270 = vmatprep.subr.mxu0 0.0
  %3271 = vmatpush1.msra.mxu0 0.0
  %3272 = vmatprep.subr.mxu0 0.0
  %3273 = vmatpush1.msra.mxu0 0.0
  %3274 = vmatprep.subr.mxu0 0.0
  %3275 = vmatpush1.msra.mxu0 0.0
  %3276 = vmatprep.subr.mxu0 0.0
  %3277 = vmatpush1.msra.mxu0 0.0
  %3278 = vmatprep.subr.mxu0 0.0
  %3279 = vmatpush1.msra.mxu0 0.0
  %3280 = vmatprep.subr.mxu0 0.0
  %3281 = vmatpush1.msra.mxu0 0.0
  %3282 = vmatprep.subr.mxu0 0.0
  %3283 = vmatpush1.msra.mxu0 0.0
  %3284 = vmatprep.subr.mxu0 0.0
  %3285 = vmatpush1.msra.mxu0 0.0
  %3286 = vmatprep.subr.mxu0 0.0
  %3287 = vmatpush1.msra.mxu0 0.0
  %3288 = vmatprep.subr.mxu0 0.0
  %3289 = vmatpush1.msra.mxu0 0.0
  %3290 = vmatprep.subr.mxu0 0.0
  %3291 = vmatpush1.msra.mxu0 0.0
  %3292 = vmatprep.subr.mxu0 0.0
  %3293 = vmatpush1.msra.mxu0 0.0
  %3294 = vmatprep.subr.mxu0 0.0
  %3295 = vmatpush1.msra.mxu0 0.0
  %3296 = vmatprep.subr.mxu0 0.0
  %3297 = vmatpush1.msra.mxu0 0.0
  %3298 = vmatprep.subr.mxu0 0.0
  %3299 = vmatpush1.msra.mxu0 0.0
  %3300 = vmatprep.subr.mxu0 0.0
  %3301 = vmatpush1.msra.mxu0 0.0
  %3302 = vmatprep.subr.mxu0 0.0
  %3303 = vmatpush1.msra.mxu0 0.0
  %3304 = vmatprep.subr.mxu0 0.0
  %3305 = vmatpush1.msra.mxu0 0.0
  %3306 = vmatprep.subr.mxu0 0.0
  %3307 = vmatpush1.msra.mxu0 0.0
  %3308 = vmatprep.mubr.f32.mxu0 0.0
  %3309 = vmatmul.mubr.f32.gmra.mrb[0].mxu0 %v3242
  %v3310 = vpop.f32.mrb[0].mxu0
  %v3311 = vadd.f32 %v3240, %v3310
  %v3312 = vpop.f32.mrb[0].mxu0
  %3313 = vdwg.mxu0
  %3314 = vst [vmem:[%s7 + $0x18] sm:$0x1] %v3311
  // Predicated region
  $region30: #{encoder_core_decoder_forward.1} parent=0 // pred_check
    _
  $region31: #{encoder_core_decoder_forward.1} parent=0 // pred_check_branch
    %3316 = sbr.rel (0) target = $region33
  $region32: #{encoder_core_decoder_forward.1} parent=0 // pred_region
    _
  $region33: #{encoder_core_decoder_forward.1} parent=0 // pred_fallthru
    _
  // Predicated region
  $region34: #{encoder_core_decoder_forward.1} parent=0 // pred_check
    _
  $region35: #{encoder_core_decoder_forward.1} parent=0 // pred_check_branch
    %3318 = sbr.rel (0) target = $region37
  $region36: #{encoder_core_decoder_forward.1} parent=0 // pred_region
    _
  $region37: #{encoder_core_decoder_forward.1} parent=0 // pred_fallthru
    _

</llo_original>
